<compile_context>
chip_gen: v5e
topology: v5e:2x2
jax: 0.10.0
libtpu: 0.0.40
codegen_flags: <defaults>
</compile_context>

<pallas_src>
import jax
import jax.numpy as jnp
from jax.experimental import pallas as pl
from jax.experimental.pallas import tpu as pltpu


def _gelu_exact(x):
    # PyTorch nn.GELU() default = exact (erf) GELU.
    return 0.5 * x * (1.0 + jax.lax.erf(x * jnp.float32(0.7071067811865476)))


def dino_head_kernel(x_ref, w1_ref, b1_ref, w2_ref, b2_ref, w3_ref, b3_ref,
                     wl_ref, o_ref, z_ref):
    # j (out_dim tile index) is the innermost grid axis; compute the MLP and
    # the L2-normalize once per row tile, cache z in VMEM scratch.
    @pl.when(pl.program_id(1) == 0)
    def _compute_mlp():
        x = x_ref[...]
        h = jnp.dot(x.astype(w1_ref.dtype), w1_ref[...],
                    preferred_element_type=jnp.float32)
        h = _gelu_exact(h + b1_ref[...].astype(jnp.float32))
        h = jnp.dot(h.astype(w2_ref.dtype), w2_ref[...],
                    preferred_element_type=jnp.float32)
        h = _gelu_exact(h + b2_ref[...].astype(jnp.float32))
        z = jnp.dot(h.astype(w3_ref.dtype), w3_ref[...],
                    preferred_element_type=jnp.float32)
        z = z + b3_ref[...].astype(jnp.float32)
        # F.normalize(z, p=2, dim=-1): z / max(||z||, 1e-12)
        #   == z * rsqrt(max(||z||^2, 1e-24))   (rsqrt -> EUP slot, ~free)
        norm_sq = jnp.sum(z * z, axis=-1, keepdims=True)
        z_ref[...] = z * jax.lax.rsqrt(jnp.maximum(norm_sq, 1e-24))

    # Last (weight-normalized, g==1, bias-free) layer: one out_dim column tile
    # per grid step; w_last streams via the BlockSpec pipeline.
    o_ref[...] = jnp.dot(z_ref[...].astype(wl_ref.dtype), wl_ref[...],
                         preferred_element_type=jnp.float32).astype(o_ref.dtype)


def dino_head_forward(x, params, *, block_m=256, block_n=8192,
                      vmem_limit_bytes=64 * 1024 * 1024):
    """x: (N, in_dim).  params: dict of pre-transposed weights (see make_params).

    block_m : row tile (multiple of 8; use 128+ for real workloads).
    block_n : out_dim column tile for the last matmul (multiple of 128).
    """
    n, in_dim = x.shape
    w1, b1 = params["w1"], params["b1"]
    w2, b2 = params["w2"], params["b2"]
    w3, b3 = params["w3"], params["b3"]
    wl = params["w_last"]
    hidden = w1.shape[1]
    bottleneck = w3.shape[1]
    out_dim = wl.shape[1]

    block_m = min(block_m, n)
    block_n = min(block_n, out_dim)
    assert n % block_m == 0, "batch must be divisible by block_m"
    assert out_dim % block_n == 0, "out_dim must be divisible by block_n"
    assert block_n % 128 == 0 or block_n == out_dim, "lane-dense output tiles"

    grid = (n // block_m, out_dim // block_n)

    # Grid-invariant operands: constant index_map + single buffer (no point
    # double-buffering something that is never re-fetched).
    def const_spec(shape):
        return pl.BlockSpec(shape, lambda i, j: (0, 0),
                            pipeline_mode=pl.Buffered(1))

    in_specs = [
        pl.BlockSpec((block_m, in_dim), lambda i, j: (i, 0)),   # x row tile
        const_spec((in_dim, hidden)),                           # w1
        const_spec((1, hidden)),                                # b1
        const_spec((hidden, hidden)),                           # w2
        const_spec((1, hidden)),                                # b2
        const_spec((hidden, bottleneck)),                       # w3
        const_spec((1, bottleneck)),                            # b3
        # w_last column tile: streamed (default double-buffered) along j.
        pl.BlockSpec((bottleneck, block_n), lambda i, j: (0, j)),
    ]
    out_specs = pl.BlockSpec((block_m, block_n), lambda i, j: (i, j))

    return pl.pallas_call(
        dino_head_kernel,
        out_shape=jax.ShapeDtypeStruct((n, out_dim), jnp.float32),
        grid=grid,
        in_specs=in_specs,
        out_specs=out_specs,
        scratch_shapes=[pltpu.VMEM((block_m, bottleneck), jnp.float32)],
        compiler_params=pltpu.CompilerParams(
            dimension_semantics=("parallel", "arbitrary"),
            vmem_limit_bytes=vmem_limit_bytes),
    )(x, w1, b1, w2, b2, w3, b3, wl)


def make_params(key, in_dim, hidden_dim, bottleneck_dim, out_dim,
                weight_dtype=jnp.float32):
    """Synthetic init mirroring DINOHead.__init__ shapes.

    Linear weights: trunc_normal(std=0.02), biases zero.
    Last layer: weight_norm(Linear(bottleneck, out_dim, bias=False)),
    weight_g filled with 1 -> effective weight = v / ||v|| per output row,
    folded on the host.  Weights stored pre-transposed as (in, out).
    Set weight_dtype=jnp.bfloat16 for real workloads (halves weight VMEM/HBM
    traffic; f32 accumulation preserved in-kernel).
    """
    ks = jax.random.split(key, 4)

    def trunc(k, shape):
        return 0.02 * jax.random.truncated_normal(k, -2.0, 2.0, shape, jnp.float32)

    w1 = trunc(ks[0], (in_dim, hidden_dim)).astype(weight_dtype)
    w2 = trunc(ks[1], (hidden_dim, hidden_dim)).astype(weight_dtype)
    w3 = trunc(ks[2], (hidden_dim, bottleneck_dim)).astype(weight_dtype)
    b1 = jnp.zeros((1, hidden_dim), jnp.float32)
    b2 = jnp.zeros((1, hidden_dim), jnp.float32)
    b3 = jnp.zeros((1, bottleneck_dim), jnp.float32)

    # weight_norm direction tensor v: shape (out_dim, bottleneck) like torch.
    v = jax.random.normal(ks[3], (out_dim, bottleneck_dim), jnp.float32)
    v_norm = jnp.sqrt(jnp.sum(v * v, axis=1, keepdims=True))
    w_last = (v / v_norm).T.astype(weight_dtype)   # g == 1 -> (bottleneck, out)

    return dict(w1=w1, b1=b1, w2=w2, b2=b2, w3=w3, b3=b3, w_last=w_last)


def reference_forward(x, params):
    f32 = lambda a: a.astype(jnp.float32)
    h = _gelu_exact(x @ f32(params["w1"]) + params["b1"])
    h = _gelu_exact(h @ f32(params["w2"]) + params["b2"])
    z = h @ f32(params["w3"]) + params["b3"]
    z = z / jnp.maximum(jnp.sqrt(jnp.sum(z * z, -1, keepdims=True)), 1e-12)
    return z @ f32(params["w_last"])


if __name__ == "__main__":
    key = jax.random.PRNGKey(0)
    k_x, k_p = jax.random.split(key)

    # Small but MXU/lane-aligned shapes (scaled-down DINO head:
    # real dims would be in=1024, hidden=2048, bottleneck=256, out=65536).
    N, IN_DIM, HIDDEN, BOTTLENECK, OUT_DIM = 256, 128, 256, 128, 512

    x = jax.random.normal(k_x, (N, IN_DIM), jnp.float32)
    params = make_params(k_p, IN_DIM, HIDDEN, BOTTLENECK, OUT_DIM,
                         weight_dtype=jnp.float32)

    # block_m=128 / block_n=256 -> 2x2 grid, exercising both the row-parallel
    # axis and the out_dim streaming axis (and the j==0 z-scratch path).
    out = dino_head_forward(x, params, block_m=128, block_n=256)
    out = jax.block_until_ready(out)

    ref = reference_forward(x, params)
    assert out.shape == (N, OUT_DIM)
    assert jnp.allclose(out, ref, atol=2e-4, rtol=2e-4), "mismatch vs reference"

    print("KERNEL_OK")
</pallas_src>

<mosaic_0001>
module attributes {stable_mosaic.version = 11 : i64} {
  func.func @dino_head_kernel(%arg0: i32, %arg1: i32, %arg2: memref<128x128xf32, #tpu.memory_space<vmem>>, %arg3: memref<128x256xf32, #tpu.memory_space<vmem>>, %arg4: memref<1x256xf32, #tpu.memory_space<vmem>>, %arg5: memref<256x256xf32, #tpu.memory_space<vmem>>, %arg6: memref<1x256xf32, #tpu.memory_space<vmem>>, %arg7: memref<256x128xf32, #tpu.memory_space<vmem>>, %arg8: memref<1x128xf32, #tpu.memory_space<vmem>>, %arg9: memref<128x256xf32, #tpu.memory_space<vmem>>, %arg10: memref<128x256xf32, #tpu.memory_space<vmem>>, %arg11: memref<128x128xf32, #tpu.memory_space<vmem>>) attributes {dimension_semantics = [#tpu.dimension_semantics<parallel>, #tpu.dimension_semantics<arbitrary>], iteration_bounds = array<i64: 2, 2>, scalar_prefetch = 0 : i64, scratch_operands = 1 : i64, tpu.core_type = #tpu.core_type<tc>, window_params = [{transform_indices = @transform_0, window_bounds = array<i64: 128, 128>}, {pipeline_mode = #tpu.pipeline_mode<synchronous>, transform_indices = @transform_1, window_bounds = array<i64: 128, 256>}, {pipeline_mode = #tpu.pipeline_mode<synchronous>, transform_indices = @transform_2, window_bounds = array<i64: 1, 256>}, {pipeline_mode = #tpu.pipeline_mode<synchronous>, transform_indices = @transform_3, window_bounds = array<i64: 256, 256>}, {pipeline_mode = #tpu.pipeline_mode<synchronous>, transform_indices = @transform_4, window_bounds = array<i64: 1, 256>}, {pipeline_mode = #tpu.pipeline_mode<synchronous>, transform_indices = @transform_5, window_bounds = array<i64: 256, 128>}, {pipeline_mode = #tpu.pipeline_mode<synchronous>, transform_indices = @transform_6, window_bounds = array<i64: 1, 128>}, {transform_indices = @transform_7, window_bounds = array<i64: 128, 256>}, {transform_indices = @transform_8, window_bounds = array<i64: 128, 256>}]} {
    %c0_i32 = arith.constant 0 : i32
    %0 = arith.cmpi eq, %arg1, %c0_i32 : i32
    %1 = arith.extui %0 : i1 to i32
    %c0_i32_0 = arith.constant 0 : i32
    %2 = arith.cmpi ne, %1, %c0_i32_0 : i32
    scf.if %2 {
      %c0_6 = arith.constant 0 : index
      %c0_7 = arith.constant 0 : index
      %7 = vector.load %arg2[%c0_6, %c0_7] : memref<128x128xf32, #tpu.memory_space<vmem>>, vector<128x128xf32>
      %c0_8 = arith.constant 0 : index
      %c0_9 = arith.constant 0 : index
      %8 = vector.load %arg3[%c0_8, %c0_9] : memref<128x256xf32, #tpu.memory_space<vmem>>, vector<128x256xf32>
      %cst_10 = arith.constant dense<0.000000e+00> : vector<128x256xf32>
      %9 = tpu.matmul %7, %8, %cst_10 {dimension_numbers = #tpu.dot_dimension_numbers<[1], [0], [0], [1], [0, 0, 1, 1], [], []>} : vector<128x128xf32>, vector<128x256xf32>, vector<128x256xf32> -> vector<128x256xf32>
      %c0_11 = arith.constant 0 : index
      %c0_12 = arith.constant 0 : index
      %10 = vector.load %arg4[%c0_11, %c0_12] : memref<1x256xf32, #tpu.memory_space<vmem>>, vector<1x256xf32>
      %11 = vector.broadcast %10 : vector<1x256xf32> to vector<128x256xf32>
      %12 = arith.addf %9, %11 : vector<128x256xf32>
      %cst_13 = arith.constant 5.000000e-01 : f32
      %13 = vector.broadcast %cst_13 : f32 to vector<128x256xf32>
      %14 = arith.mulf %13, %12 : vector<128x256xf32>
      %cst_14 = arith.constant 0.707106769 : f32
      %15 = vector.broadcast %cst_14 : f32 to vector<128x256xf32>
      %16 = arith.mulf %12, %15 : vector<128x256xf32>
      %17 = math.erf %16 : vector<128x256xf32>
      %cst_15 = arith.constant 1.000000e+00 : f32
      %18 = vector.broadcast %cst_15 : f32 to vector<128x256xf32>
      %19 = arith.addf %18, %17 : vector<128x256xf32>
      %20 = arith.mulf %14, %19 : vector<128x256xf32>
      %c0_16 = arith.constant 0 : index
      %c0_17 = arith.constant 0 : index
      %21 = vector.load %arg5[%c0_16, %c0_17] : memref<256x256xf32, #tpu.memory_space<vmem>>, vector<256x256xf32>
      %cst_18 = arith.constant dense<0.000000e+00> : vector<128x256xf32>
      %22 = tpu.matmul %20, %21, %cst_18 {dimension_numbers = #tpu.dot_dimension_numbers<[1], [0], [0], [1], [0, 0, 1, 1], [], []>} : vector<128x256xf32>, vector<256x256xf32>, vector<128x256xf32> -> vector<128x256xf32>
      %c0_19 = arith.constant 0 : index
      %c0_20 = arith.constant 0 : index
      %23 = vector.load %arg6[%c0_19, %c0_20] : memref<1x256xf32, #tpu.memory_space<vmem>>, vector<1x256xf32>
      %24 = vector.broadcast %23 : vector<1x256xf32> to vector<128x256xf32>
      %25 = arith.addf %22, %24 : vector<128x256xf32>
      %cst_21 = arith.constant 5.000000e-01 : f32
      %26 = vector.broadcast %cst_21 : f32 to vector<128x256xf32>
      %27 = arith.mulf %26, %25 : vector<128x256xf32>
      %cst_22 = arith.constant 0.707106769 : f32
      %28 = vector.broadcast %cst_22 : f32 to vector<128x256xf32>
      %29 = arith.mulf %25, %28 : vector<128x256xf32>
      %30 = math.erf %29 : vector<128x256xf32>
      %cst_23 = arith.constant 1.000000e+00 : f32
      %31 = vector.broadcast %cst_23 : f32 to vector<128x256xf32>
      %32 = arith.addf %31, %30 : vector<128x256xf32>
      %33 = arith.mulf %27, %32 : vector<128x256xf32>
      %c0_24 = arith.constant 0 : index
      %c0_25 = arith.constant 0 : index
      %34 = vector.load %arg7[%c0_24, %c0_25] : memref<256x128xf32, #tpu.memory_space<vmem>>, vector<256x128xf32>
      %cst_26 = arith.constant dense<0.000000e+00> : vector<128x128xf32>
      %35 = tpu.matmul %33, %34, %cst_26 {dimension_numbers = #tpu.dot_dimension_numbers<[1], [0], [0], [1], [0, 0, 1, 1], [], []>} : vector<128x256xf32>, vector<256x128xf32>, vector<128x128xf32> -> vector<128x128xf32>
      %c0_27 = arith.constant 0 : index
      %c0_28 = arith.constant 0 : index
      %36 = vector.load %arg8[%c0_27, %c0_28] : memref<1x128xf32, #tpu.memory_space<vmem>>, vector<1x128xf32>
      %37 = vector.broadcast %36 : vector<1x128xf32> to vector<128x128xf32>
      %38 = arith.addf %35, %37 : vector<128x128xf32>
      %39 = arith.mulf %38, %38 : vector<128x128xf32>
      %cst_29 = arith.constant dense<0.000000e+00> : vector<128xf32>
      %40 = vector.multi_reduction <add>, %39, %cst_29 [1] : vector<128x128xf32> to vector<128xf32>
      %41 = vector.shape_cast %40 : vector<128xf32> to vector<128x1xf32>
      %cst_30 = arith.constant 1.000000e-24 : f32
      %42 = vector.broadcast %cst_30 : f32 to vector<128x1xf32>
      %43 = arith.maximumf %41, %42 : vector<128x1xf32>
      %44 = math.rsqrt %43 : vector<128x1xf32>
      %45 = vector.broadcast %44 : vector<128x1xf32> to vector<128x128xf32>
      %46 = arith.mulf %38, %45 : vector<128x128xf32>
      %c0_31 = arith.constant 0 : index
      %c0_32 = arith.constant 0 : index
      %47 = vector.load %arg11[%c0_31, %c0_32] : memref<128x128xf32, #tpu.memory_space<vmem>>, vector<128x128xf32>
      tpu.vector_store %arg11[%c0_31, %c0_32], %46 {strides = array<i32>} : memref<128x128xf32, #tpu.memory_space<vmem>>, vector<128x128xf32>,
    } else {
    }
    %c0 = arith.constant 0 : index
    %c0_1 = arith.constant 0 : index
    %3 = vector.load %arg11[%c0, %c0_1] : memref<128x128xf32, #tpu.memory_space<vmem>>, vector<128x128xf32>
    %c0_2 = arith.constant 0 : index
    %c0_3 = arith.constant 0 : index
    %4 = vector.load %arg9[%c0_2, %c0_3] : memref<128x256xf32, #tpu.memory_space<vmem>>, vector<128x256xf32>
    %cst = arith.constant dense<0.000000e+00> : vector<128x256xf32>
    %5 = tpu.matmul %3, %4, %cst {dimension_numbers = #tpu.dot_dimension_numbers<[1], [0], [0], [1], [0, 0, 1, 1], [], []>} : vector<128x128xf32>, vector<128x256xf32>, vector<128x256xf32> -> vector<128x256xf32>
    %c0_4 = arith.constant 0 : index
    %c0_5 = arith.constant 0 : index
    %6 = vector.load %arg10[%c0_4, %c0_5] : memref<128x256xf32, #tpu.memory_space<vmem>>, vector<128x256xf32>
    tpu.vector_store %arg10[%c0_4, %c0_5], %5 {strides = array<i32>} : memref<128x256xf32, #tpu.memory_space<vmem>>, vector<128x256xf32>,
    return
  }
  func.func @transform_0(%arg0: i32, %arg1: i32) -> (i32, i32) {
    %c0_i32 = arith.constant 0 : i32
    %c0_i32_0 = arith.constant 0 : i32
    return %arg0, %c0_i32 : i32, i32
  }
  func.func @transform_1(%arg0: i32, %arg1: i32) -> (i32, i32) {
    %c0_i32 = arith.constant 0 : i32
    %c0_i32_0 = arith.constant 0 : i32
    %c0_i32_1 = arith.constant 0 : i32
    return %c0_i32, %c0_i32_0 : i32, i32
  }
  func.func @transform_2(%arg0: i32, %arg1: i32) -> (i32, i32) {
    %c0_i32 = arith.constant 0 : i32
    %c0_i32_0 = arith.constant 0 : i32
    %c0_i32_1 = arith.constant 0 : i32
    return %c0_i32, %c0_i32_0 : i32, i32
  }
  func.func @transform_3(%arg0: i32, %arg1: i32) -> (i32, i32) {
    %c0_i32 = arith.constant 0 : i32
    %c0_i32_0 = arith.constant 0 : i32
    %c0_i32_1 = arith.constant 0 : i32
    return %c0_i32, %c0_i32_0 : i32, i32
  }
  func.func @transform_4(%arg0: i32, %arg1: i32) -> (i32, i32) {
    %c0_i32 = arith.constant 0 : i32
    %c0_i32_0 = arith.constant 0 : i32
    %c0_i32_1 = arith.constant 0 : i32
    return %c0_i32, %c0_i32_0 : i32, i32
  }
  func.func @transform_5(%arg0: i32, %arg1: i32) -> (i32, i32) {
    %c0_i32 = arith.constant 0 : i32
    %c0_i32_0 = arith.constant 0 : i32
    %c0_i32_1 = arith.constant 0 : i32
    return %c0_i32, %c0_i32_0 : i32, i32
  }
  func.func @transform_6(%arg0: i32, %arg1: i32) -> (i32, i32) {
    %c0_i32 = arith.constant 0 : i32
    %c0_i32_0 = arith.constant 0 : i32
    %c0_i32_1 = arith.constant 0 : i32
    return %c0_i32, %c0_i32_0 : i32, i32
  }
  func.func @transform_7(%arg0: i32, %arg1: i32) -> (i32, i32) {
    %c0_i32 = arith.constant 0 : i32
    %c0_i32_0 = arith.constant 0 : i32
    return %c0_i32, %arg1 : i32, i32
  }
  func.func @transform_8(%arg0: i32, %arg1: i32) -> (i32, i32) {
    %c0_i32 = arith.constant 0 : i32
    return %arg0, %arg1 : i32, i32
  }
}

</mosaic_0001>

<llo_original>
// kernel: tpu_custom_call.1
$region0: #{tpu_custom_call.1}
  #allocation0 [shape = 'u32[]', space=smem, size = 0x4, offset = 0x4, fixed_abs, tag = 'smem constant byte address 0x4 - core index']
  #allocation1 [shape = 'u32[72,128]{1,0:T(1,128)}', space=vmem, size = 0x9000, scoped, tag = 'internal scratch']
  #allocation2 [shape = 'f32[128,128]{1,0:T(8,128)}', space=vmem, size = 0x10000, scoped, tag = 'scratch operand']
  %s0 = inlined_call_operand.hbm [shape: f32[256,128], index: 0, kind: input, shape index: {}]
  %s1 = inlined_call_operand.hbm [shape: f32[128,256], index: 1, kind: input, shape index: {}]
  %s2 = inlined_call_operand.hbm [shape: f32[1,256], index: 2, kind: input, shape index: {}]
  %s3 = inlined_call_operand.hbm [shape: f32[256,256], index: 3, kind: input, shape index: {}]
  %s4 = inlined_call_operand.vmem [shape: f32[1,256], index: 4, kind: input, shape index: {}]
  %s5 = inlined_call_operand.hbm [shape: f32[256,128], index: 5, kind: input, shape index: {}]
  %s6 = inlined_call_operand.vmem [shape: f32[1,128], index: 6, kind: input, shape index: {}]
  %s7 = inlined_call_operand.hbm [shape: f32[128,512], index: 7, kind: input, shape index: {}]
  %s8 = inlined_call_operand.hbm [shape: f32[256,512], index: 8, kind: output, shape index: {}]
  %s9 = sld [smem:[#allocation0]]
  $region93: #{tpu_custom_call.1} parent=0
    _
  %s11 = ssub.s32 1, %s9
  %s12 = scalar_select 0, %s11, %s9
  $region1: #{tpu_custom_call.1} parent=0
    #allocation3 [shape = 'u8[131072]{0}', space=vmem, size = 0x20000, scoped, tag = 'input window, operand 0']
    #allocation4 [shape = 's32[2]{0}', space=sflag, size = 0x8, scoped, tag = 'scoped memory for tpu_custom_call.1']
    #allocation5 [shape = 's32[2]{0}', space=sflag, size = 0x8, scoped, tag = 'scoped memory for tpu_custom_call.1']
    #allocation6 [shape = 'u8[131072]{0}', space=vmem, size = 0x20000, scoped, tag = 'input window, operand 1, single buffered']
    #allocation7 [shape = 's32[1]{0}', space=sflag, size = 0x4, scoped, tag = 'scoped memory for tpu_custom_call.1']
    #allocation8 [shape = 'u8[1024]{0}', space=vmem, size = 0x400, scoped, tag = 'input window, operand 2, single buffered']
    #allocation9 [shape = 'u8[262144]{0}', space=vmem, size = 0x40000, scoped, tag = 'input window, operand 3, single buffered']
    #allocation10 [shape = 's32[1]{0}', space=sflag, size = 0x4, scoped, tag = 'scoped memory for tpu_custom_call.1']
    #allocation11 [shape = 'u8[131072]{0}', space=vmem, size = 0x20000, scoped, tag = 'input window, operand 5, single buffered']
    #allocation12 [shape = 'u8[262144]{0}', space=vmem, size = 0x40000, scoped, tag = 'input window, operand 7']
    #allocation13 [shape = 's32[2]{0}', space=sflag, size = 0x8, scoped, tag = 'scoped memory for tpu_custom_call.1']
    #allocation14 [shape = 'u8[262144]{0}', space=vmem, size = 0x40000, scoped, tag = 'output window, operand 0']
    %13 = vsyncpa [#allocation4], 0
    %s14 = scalar_lea.sflag [#allocation4], 1
    %15 = vsyncpa %s14, 0
    %16 = vsyncpa [#allocation7], 0
    %17 = vsyncpa [#allocation10], 0
    %18 = vsyncpa [#allocation13], 0
    %s19 = scalar_lea.sflag [#allocation13], 1
    %20 = vsyncpa %s19, 0
    %21 = vsyncpa [#allocation5], 0
    %s22 = scalar_lea.sflag [#allocation5], 1
    %23 = vsyncpa %s22, 0
    loop: start=0, step=1, limit=6
    $region2: #{tpu_custom_call.1} parent=1 // loop_pre_header
      _
    $region3: #{tpu_custom_call.1} parent=1 // loop_header
      %s25 = sphi 0, %s29
      %p26 = scmp.ge.s32.totalorder %s25, 6
      %s32 = sphi 0, %s44
      %s33 = sphi 0, %s40
      %s34 = sphi 0, %s32
      %s35 = sphi 0, %s33
      %s36 = sphi 0, %s34
      %s37 = sphi 0, %s35
      %s47 = sphi 0, %s49
      %s50 = sphi 0, %s47
      %s51 = sphi 0, %s50
      %s67 = sphi 0, %s51
      %s71 = sphi 0, %s71
      %s73 = sphi 0, %s71
      %s74 = sphi 0, %s73
      %s88 = sphi 0, %s74
      %s92 = sphi 0, %s92
      %s94 = sphi 0, %s92
      %s95 = sphi 0, %s94
      %s109 = sphi 0, %s95
      %s113 = sphi 0, %s113
      %s115 = sphi 0, %s113
      %s116 = sphi 0, %s115
      %s130 = sphi 0, %s116
      %s134 = sphi 0, %s134
      %s136 = sphi 0, %s134
      %s137 = sphi 0, %s136
      %s151 = sphi 0, %s137
      %s155 = sphi 0, %s155
      %s157 = sphi 0, %s155
      %s158 = sphi 0, %s157
      %s172 = sphi 0, %s158
      %s176 = sphi 0, %s176
      %s178 = sphi 0, %s176
      %s179 = sphi 0, %s178
      %s193 = sphi 0, %s179
      %s199 = sphi 0, %s201
      %s202 = sphi 0, %s199
      %s203 = sphi 0, %s202
      %s219 = sphi 0, %s203
      %s227 = sphi 0, %s229
      %s230 = sphi 0, %s227
      %s231 = sphi 0, %s230
      %s247 = sphi 0, %s231
    $region4: #{tpu_custom_call.1} parent=1 // loop_header_branch
      %28 = sbr.rel (%p26) target = $region8
    $region5: #{tpu_custom_call.1} parent=1 // loop_body
      %s30 = ssub.s32 %s25, 1
      %s31 = ssub.s32 %s25, 2
      %s38 = sadd.s32 1, %s33
      %p39 = scmp.ge.s32.totalorder %s38, 2
      %s40 = scalar_select %p39, 0, %s38
      %s41 = sadd.s32 1, %s32
      %s42 = scalar_select %p39, %s41, %s32
      %p43 = scmp.ge.s32.totalorder %s42, 2
      %s44 = scalar_select %p43, 0, %s42
      %s45 = ssub.s32 %s32, %s44
      %p46 = scmp.eq.s32.totalorder %s45, 0
      %s48 = sadd.s32 %s47, 1
      %s49 = scalar_select %p46, %s47, %s48
      %p52 = pneg %p46
      %p53 = scmp.eq.s32.totalorder %s25, 3
      %p54 = por %p52, %p53
      %p55 = scmp.ne.s32.totalorder %s47, %s50
      %p56 = scmp.eq.s32.totalorder %s25, 0
      %p57 = por %p55, %p56
      %p58 = scmp.ne.s32.totalorder %s47, %s50
      %p59 = scmp.eq.s32.totalorder %s30, 3
      %p60 = por %p58, %p59
      %p61 = scmp.ne.s32.totalorder %s50, %s51
      %p62 = scmp.eq.s32.totalorder %s30, 0
      %p63 = por %p61, %p62
      %p64 = scmp.ne.s32.totalorder %s50, %s51
      %p65 = scmp.eq.s32.totalorder %s31, 3
      %p66 = por %p64, %p65
      %p68 = scmp.ne.s32.totalorder %s51, %s67
      %p69 = scmp.eq.s32.totalorder %s31, 0
      %p70 = por %p68, %p69
      %s72 = sadd.s32 %s71, 1
      %p75 = scmp.eq.s32.totalorder %s25, 3
      %p76 = scmp.ne.s32.totalorder %s71, %s73
      %p77 = scmp.eq.s32.totalorder %s25, 0
      %p78 = por %p76, %p77
      %p79 = scmp.ne.s32.totalorder %s71, %s73
      %p80 = scmp.eq.s32.totalorder %s30, 3
      %p81 = por %p79, %p80
      %p82 = scmp.ne.s32.totalorder %s73, %s74
      %p83 = scmp.eq.s32.totalorder %s30, 0
      %p84 = por %p82, %p83
      %p85 = scmp.ne.s32.totalorder %s73, %s74
      %p86 = scmp.eq.s32.totalorder %s31, 3
      %p87 = por %p85, %p86
      %p89 = scmp.ne.s32.totalorder %s74, %s88
      %p90 = scmp.eq.s32.totalorder %s31, 0
      %p91 = por %p89, %p90
      %s93 = sadd.s32 %s92, 1
      %p96 = scmp.eq.s32.totalorder %s25, 3
      %p97 = scmp.ne.s32.totalorder %s92, %s94
      %p98 = scmp.eq.s32.totalorder %s25, 0
      %p99 = por %p97, %p98
      %p100 = scmp.ne.s32.totalorder %s92, %s94
      %p101 = scmp.eq.s32.totalorder %s30, 3
      %p102 = por %p100, %p101
      %p103 = scmp.ne.s32.totalorder %s94, %s95
      %p104 = scmp.eq.s32.totalorder %s30, 0
      %p105 = por %p103, %p104
      %p106 = scmp.ne.s32.totalorder %s94, %s95
      %p107 = scmp.eq.s32.totalorder %s31, 3
      %p108 = por %p106, %p107
      %p110 = scmp.ne.s32.totalorder %s95, %s109
      %p111 = scmp.eq.s32.totalorder %s31, 0
      %p112 = por %p110, %p111
      %s114 = sadd.s32 %s113, 1
      %p117 = scmp.eq.s32.totalorder %s25, 3
      %p118 = scmp.ne.s32.totalorder %s113, %s115
      %p119 = scmp.eq.s32.totalorder %s25, 0
      %p120 = por %p118, %p119
      %p121 = scmp.ne.s32.totalorder %s113, %s115
      %p122 = scmp.eq.s32.totalorder %s30, 3
      %p123 = por %p121, %p122
      %p124 = scmp.ne.s32.totalorder %s115, %s116
      %p125 = scmp.eq.s32.totalorder %s30, 0
      %p126 = por %p124, %p125
      %p127 = scmp.ne.s32.totalorder %s115, %s116
      %p128 = scmp.eq.s32.totalorder %s31, 3
      %p129 = por %p127, %p128
      %p131 = scmp.ne.s32.totalorder %s116, %s130
      %p132 = scmp.eq.s32.totalorder %s31, 0
      %p133 = por %p131, %p132
      %s135 = sadd.s32 %s134, 1
      %p138 = scmp.eq.s32.totalorder %s25, 3
      %p139 = scmp.ne.s32.totalorder %s134, %s136
      %p140 = scmp.eq.s32.totalorder %s25, 0
      %p141 = por %p139, %p140
      %p142 = scmp.ne.s32.totalorder %s134, %s136
      %p143 = scmp.eq.s32.totalorder %s30, 3
      %p144 = por %p142, %p143
      %p145 = scmp.ne.s32.totalorder %s136, %s137
      %p146 = scmp.eq.s32.totalorder %s30, 0
      %p147 = por %p145, %p146
      %p148 = scmp.ne.s32.totalorder %s136, %s137
      %p149 = scmp.eq.s32.totalorder %s31, 3
      %p150 = por %p148, %p149
      %p152 = scmp.ne.s32.totalorder %s137, %s151
      %p153 = scmp.eq.s32.totalorder %s31, 0
      %p154 = por %p152, %p153
      %s156 = sadd.s32 %s155, 1
      %p159 = scmp.eq.s32.totalorder %s25, 3
      %p160 = scmp.ne.s32.totalorder %s155, %s157
      %p161 = scmp.eq.s32.totalorder %s25, 0
      %p162 = por %p160, %p161
      %p163 = scmp.ne.s32.totalorder %s155, %s157
      %p164 = scmp.eq.s32.totalorder %s30, 3
      %p165 = por %p163, %p164
      %p166 = scmp.ne.s32.totalorder %s157, %s158
      %p167 = scmp.eq.s32.totalorder %s30, 0
      %p168 = por %p166, %p167
      %p169 = scmp.ne.s32.totalorder %s157, %s158
      %p170 = scmp.eq.s32.totalorder %s31, 3
      %p171 = por %p169, %p170
      %p173 = scmp.ne.s32.totalorder %s158, %s172
      %p174 = scmp.eq.s32.totalorder %s31, 0
      %p175 = por %p173, %p174
      %s177 = sadd.s32 %s176, 1
      %p180 = scmp.eq.s32.totalorder %s25, 3
      %p181 = scmp.ne.s32.totalorder %s176, %s178
      %p182 = scmp.eq.s32.totalorder %s25, 0
      %p183 = por %p181, %p182
      %p184 = scmp.ne.s32.totalorder %s176, %s178
      %p185 = scmp.eq.s32.totalorder %s30, 3
      %p186 = por %p184, %p185
      %p187 = scmp.ne.s32.totalorder %s178, %s179
      %p188 = scmp.eq.s32.totalorder %s30, 0
      %p189 = por %p187, %p188
      %p190 = scmp.ne.s32.totalorder %s178, %s179
      %p191 = scmp.eq.s32.totalorder %s31, 3
      %p192 = por %p190, %p191
      %p194 = scmp.ne.s32.totalorder %s179, %s193
      %p195 = scmp.eq.s32.totalorder %s31, 0
      %p196 = por %p194, %p195
      %s197 = ssub.s32 %s33, %s40
      %p198 = scmp.eq.s32.totalorder %s197, 0
      %s200 = sadd.s32 %s199, 1
      %s201 = scalar_select %p198, %s199, %s200
      %p204 = pneg %p198
      %p205 = scmp.eq.s32.totalorder %s25, 3
      %p206 = por %p204, %p205
      %p207 = scmp.ne.s32.totalorder %s199, %s202
      %p208 = scmp.eq.s32.totalorder %s25, 0
      %p209 = por %p207, %p208
      %p210 = scmp.ne.s32.totalorder %s199, %s202
      %p211 = scmp.eq.s32.totalorder %s30, 3
      %p212 = por %p210, %p211
      %p213 = scmp.ne.s32.totalorder %s202, %s203
      %p214 = scmp.eq.s32.totalorder %s30, 0
      %p215 = por %p213, %p214
      %p216 = scmp.ne.s32.totalorder %s202, %s203
      %p217 = scmp.eq.s32.totalorder %s31, 3
      %p218 = por %p216, %p217
      %p220 = scmp.ne.s32.totalorder %s203, %s219
      %p221 = scmp.eq.s32.totalorder %s31, 0
      %p222 = por %p220, %p221
      %s223 = ssub.s32 %s32, %s44
      %s224 = ssub.s32 %s33, %s40
      %s225 = sor.u32 %s223, %s224
      %p226 = scmp.eq.s32.totalorder %s225, 0
      %s228 = sadd.s32 %s227, 1
      %s229 = scalar_select %p226, %s227, %s228
      %p232 = pneg %p226
      %p233 = scmp.eq.s32.totalorder %s25, 3
      %p234 = por %p232, %p233
      %p235 = scmp.ne.s32.totalorder %s227, %s230
      %p236 = scmp.eq.s32.totalorder %s25, 0
      %p237 = por %p235, %p236
      %p238 = scmp.ne.s32.totalorder %s227, %s230
      %p239 = scmp.eq.s32.totalorder %s30, 3
      %p240 = por %p238, %p239
      %p241 = scmp.ne.s32.totalorder %s230, %s231
      %p242 = scmp.eq.s32.totalorder %s30, 0
      %p243 = por %p241, %p242
      %p244 = scmp.ne.s32.totalorder %s230, %s231
      %p245 = scmp.eq.s32.totalorder %s31, 3
      %p246 = por %p244, %p245
      %p248 = scmp.ne.s32.totalorder %s231, %s247
      %p249 = scmp.eq.s32.totalorder %s31, 0
      %p250 = por %p248, %p249
      %p251 = scmp.le.s32.totalorder 1, %s25
      %p252 = scmp.lt.s32.totalorder %s25, 5
      %p253 = pnand %p251, %p252
      %p254 = pneg %p253
      // Predicated region
      $region9: #{tpu_custom_call.1} parent=5 // pred_check
        _
      $region10: #{tpu_custom_call.1} parent=5 // pred_check_branch
        %256 = sbr.rel (%p253) target = $region12
      $region11: #{tpu_custom_call.1} parent=5 // pred_region
        %s257 = ssub.s32 %s25, 1
        // Predicated region
        $region13: #{tpu_custom_call.1} parent=11 // pred_check
          %p258 = pneg %p84
        $region14: #{tpu_custom_call.1} parent=11 // pred_check_branch
          %260 = sbr.rel (%p258) target = $region16
        $region15: #{tpu_custom_call.1} parent=11 // pred_region
          %262 = vsyncadd [#allocation7], 0
          %s263 = sshll.u32 %s1, 4
          %s264 = int_to_ptr.hbm [resolvable:$true] %s263
          %s265 = sshll.u32 [#allocation6], 4
          %s266 = int_to_ptr.vmem [resolvable:$true] %s265
          %271 = dma.hbm_to_vmem [thread:$0]  %s264, 4096, %s266, [#allocation7], 256, 256, 16
        $region16: #{tpu_custom_call.1} parent=11 // pred_fallthru
          _
        // Predicated region
        $region17: #{tpu_custom_call.1} parent=11 // pred_check
          %p272 = pneg %p105
        $region18: #{tpu_custom_call.1} parent=11 // pred_check_branch
          %274 = sbr.rel (%p272) target = $region20
        $region19: #{tpu_custom_call.1} parent=11 // pred_region
          %276 = vsyncadd [#allocation7], 0
          %s278 = sshll.u32 %s2, 4
          %s279 = int_to_ptr.hbm [resolvable:$true] %s278
          %s280 = sshll.u32 [#allocation8], 4
          %s281 = int_to_ptr.vmem [resolvable:$true] %s280
          %283 = dma.hbm_to_vmem [thread:$0]  %s279, 32, %s281, [#allocation7]
        $region20: #{tpu_custom_call.1} parent=11 // pred_fallthru
          _
        // Predicated region
        $region21: #{tpu_custom_call.1} parent=11 // pred_check
          %p284 = pneg %p126
        $region22: #{tpu_custom_call.1} parent=11 // pred_check_branch
          %286 = sbr.rel (%p284) target = $region24
        $region23: #{tpu_custom_call.1} parent=11 // pred_region
          %288 = vsyncadd [#allocation10], 0
          %s289 = sshll.u32 %s3, 4
          %s290 = int_to_ptr.hbm [resolvable:$true] %s289
          %s291 = sshll.u32 [#allocation9], 4
          %s292 = int_to_ptr.vmem [resolvable:$true] %s291
          %297 = dma.hbm_to_vmem [thread:$0]  %s290, 8192, %s292, [#allocation10], 256, 256, 16
        $region24: #{tpu_custom_call.1} parent=11 // pred_fallthru
          _
        // Predicated region
        $region25: #{tpu_custom_call.1} parent=11 // pred_check
          %p298 = pneg %p147
        $region26: #{tpu_custom_call.1} parent=11 // pred_check_branch
          %300 = sbr.rel (%p298) target = $region28
        $region27: #{tpu_custom_call.1} parent=11 // pred_region
          _
        $region28: #{tpu_custom_call.1} parent=11 // pred_fallthru
          _
        // Predicated region
        $region29: #{tpu_custom_call.1} parent=11 // pred_check
          %p301 = pneg %p168
        $region30: #{tpu_custom_call.1} parent=11 // pred_check_branch
          %303 = sbr.rel (%p301) target = $region32
        $region31: #{tpu_custom_call.1} parent=11 // pred_region
          %305 = vsyncadd [#allocation10], 0
          %s306 = sshll.u32 %s5, 4
          %s307 = int_to_ptr.hbm [resolvable:$true] %s306
          %s308 = sshll.u32 [#allocation11], 4
          %s309 = int_to_ptr.vmem [resolvable:$true] %s308
          %314 = dma.hbm_to_vmem [thread:$0]  %s307, 4096, %s309, [#allocation10], 128, 128, 8
        $region32: #{tpu_custom_call.1} parent=11 // pred_fallthru
          _
        // Predicated region
        $region33: #{tpu_custom_call.1} parent=11 // pred_check
          %p315 = pneg %p189
        $region34: #{tpu_custom_call.1} parent=11 // pred_check_branch
          %317 = sbr.rel (%p315) target = $region36
        $region35: #{tpu_custom_call.1} parent=11 // pred_region
          _
        $region36: #{tpu_custom_call.1} parent=11 // pred_fallthru
          _
      $region12: #{tpu_custom_call.1} parent=5 // pred_fallthru
        _
      %p318 = scmp.lt.s32.totalorder %s25, 4
      // Predicated region
      $region37: #{tpu_custom_call.1} parent=5 // pred_check
        %p319 = pneg %p318
      $region38: #{tpu_custom_call.1} parent=5 // pred_check_branch
        %321 = sbr.rel (%p319) target = $region40
      $region39: #{tpu_custom_call.1} parent=5 // pred_region
        // Predicated region
        $region41: #{tpu_custom_call.1} parent=39 // pred_check
          %p322 = pneg %p57
        $region42: #{tpu_custom_call.1} parent=39 // pred_check_branch
          %324 = sbr.rel (%p322) target = $region44
        $region43: #{tpu_custom_call.1} parent=39 // pred_region
          %s325 = sand.u32 %s47, 1
          %s326 = scalar_lea.sflag [#allocation4], %s325
          %s327 = sand.u32 %s47, 1
          %s328 = smul.addr %s327, 128
          %s329 = scalar_lea.vmem [#allocation3], %s328
          %s330 = smul.u32 16, %s32
          %332 = vsyncadd %s326, 0
          %s333 = smul.addr %s330, 8
          %s334 = scalar_lea.hbm %s0, %s333
          %s335 = sshll.u32 %s334, 4
          %s336 = int_to_ptr.hbm [resolvable:$true] %s335
          %s337 = sshll.u32 %s329, 4
          %s338 = int_to_ptr.vmem [resolvable:$true] %s337
          %343 = dma.hbm_to_vmem [thread:$0]  %s336, 2048, %s338, %s326, 128, 128, 8
        $region44: #{tpu_custom_call.1} parent=39 // pred_fallthru
          _
        // Predicated region
        $region45: #{tpu_custom_call.1} parent=39 // pred_check
          %p344 = pneg %p209
        $region46: #{tpu_custom_call.1} parent=39 // pred_check_branch
          %346 = sbr.rel (%p344) target = $region48
        $region47: #{tpu_custom_call.1} parent=39 // pred_region
          %s347 = sand.u32 %s199, 1
          %s348 = scalar_lea.sflag [#allocation13], %s347
          %s349 = sand.u32 %s199, 1
          %s350 = smul.addr %s349, 256
          %s351 = scalar_lea.vmem [#allocation12], %s350
          %s352 = smul.u32 2, %s33
          %354 = vsyncadd %s348, 0
          %s355 = smul.addr %s352, 8
          %s356 = scalar_lea.hbm %s7, %s355
          %s357 = sshll.u32 %s356, 4
          %s358 = int_to_ptr.hbm [resolvable:$true] %s357
          %s359 = sshll.u32 %s351, 4
          %s360 = int_to_ptr.vmem [resolvable:$true] %s359
          %365 = dma.hbm_to_vmem [thread:$0]  %s358, 4096, %s360, %s348, 512, 256, 16
        $region48: #{tpu_custom_call.1} parent=39 // pred_fallthru
          _
      $region40: #{tpu_custom_call.1} parent=5 // pred_fallthru
        _
      %p366 = scmp.le.s32.totalorder 1, %s25
      %p367 = scmp.lt.s32.totalorder %s25, 5
      %p368 = pnand %p366, %p367
      %p369 = pneg %p368
      // Predicated region
      $region49: #{tpu_custom_call.1} parent=5 // pred_check
        _
      $region50: #{tpu_custom_call.1} parent=5 // pred_check_branch
        %371 = sbr.rel (%p368) target = $region52
      $region51: #{tpu_custom_call.1} parent=5 // pred_region
        %s372 = ssub.s32 %s25, 1
        %s373 = sand.u32 %s50, 1
        %s374 = scalar_lea.sflag [#allocation4], %s373
        %s375 = sand.u32 %s50, 1
        %s376 = smul.addr %s375, 128
        %s377 = scalar_lea.vmem [#allocation3], %s376
        // Predicated region
        $region53: #{tpu_custom_call.1} parent=51 // pred_check
          %p378 = pneg %p63
        $region54: #{tpu_custom_call.1} parent=51 // pred_check_branch
          %380 = sbr.rel (%p378) target = $region56
        $region55: #{tpu_custom_call.1} parent=51 // pred_region
          %382 = dma.done %s374, 2048
        $region56: #{tpu_custom_call.1} parent=51 // pred_fallthru
          _
        // Predicated region
        $region57: #{tpu_custom_call.1} parent=51 // pred_check
          %p383 = pneg %p84
        $region58: #{tpu_custom_call.1} parent=51 // pred_check_branch
          %385 = sbr.rel (%p383) target = $region60
        $region59: #{tpu_custom_call.1} parent=51 // pred_region
          %387 = dma.done [#allocation7], 4096
        $region60: #{tpu_custom_call.1} parent=51 // pred_fallthru
          _
        // Predicated region
        $region61: #{tpu_custom_call.1} parent=51 // pred_check
          %p388 = pneg %p105
        $region62: #{tpu_custom_call.1} parent=51 // pred_check_branch
          %390 = sbr.rel (%p388) target = $region64
        $region63: #{tpu_custom_call.1} parent=51 // pred_region
          %392 = dma.done [#allocation7], 32
        $region64: #{tpu_custom_call.1} parent=51 // pred_fallthru
          _
        // Predicated region
        $region65: #{tpu_custom_call.1} parent=51 // pred_check
          %p393 = pneg %p126
        $region66: #{tpu_custom_call.1} parent=51 // pred_check_branch
          %395 = sbr.rel (%p393) target = $region68
        $region67: #{tpu_custom_call.1} parent=51 // pred_region
          %397 = dma.done [#allocation10], 8192
        $region68: #{tpu_custom_call.1} parent=51 // pred_fallthru
          _
        // Predicated region
        $region69: #{tpu_custom_call.1} parent=51 // pred_check
          %p398 = pneg %p168
        $region70: #{tpu_custom_call.1} parent=51 // pred_check_branch
          %400 = sbr.rel (%p398) target = $region72
        $region71: #{tpu_custom_call.1} parent=51 // pred_region
          %402 = dma.done [#allocation10], 4096
        $region72: #{tpu_custom_call.1} parent=51 // pred_fallthru
          _
        %s403 = sand.u32 %s202, 1
        %s404 = scalar_lea.sflag [#allocation13], %s403
        %s405 = sand.u32 %s202, 1
        %s406 = smul.addr %s405, 256
        %s407 = scalar_lea.vmem [#allocation12], %s406
        // Predicated region
        $region73: #{tpu_custom_call.1} parent=51 // pred_check
          %p408 = pneg %p215
        $region74: #{tpu_custom_call.1} parent=51 // pred_check_branch
          %410 = sbr.rel (%p408) target = $region76
        $region75: #{tpu_custom_call.1} parent=51 // pred_region
          %412 = dma.done %s404, 4096
        $region76: #{tpu_custom_call.1} parent=51 // pred_fallthru
          _
        %s413 = sand.u32 %s50, 1
        %s414 = scalar_lea.sflag [#allocation4], %s413
        %s415 = sand.u32 %s50, 1
        %s416 = smul.addr %s415, 128
        %s417 = scalar_lea.vmem [#allocation3], %s416
        %p418 = pneg %p63
        %p419 = pneg %p60
        %p420 = pneg %p84
        %p421 = pneg %p81
        %p422 = pneg %p105
        %p423 = pneg %p102
        %p424 = pneg %p126
        %p425 = pneg %p123
        %p426 = pneg %p147
        %p427 = pneg %p144
        %p428 = pneg %p168
        %p429 = pneg %p165
        %p430 = pneg %p189
        %p431 = pneg %p186
        %s432 = sand.u32 %s202, 1
        %s433 = scalar_lea.sflag [#allocation13], %s432
        %s434 = sand.u32 %s202, 1
        %s435 = smul.addr %s434, 256
        %s436 = scalar_lea.vmem [#allocation12], %s435
        %p437 = pneg %p215
        %p438 = pneg %p212
        %p439 = pneg %p243
        %p440 = pneg %p240
        %s441 = sand.u32 %s230, 1
        %s442 = scalar_lea.sflag [#allocation5], %s441
        %s443 = sand.u32 %s230, 1
        %s444 = smul.addr %s443, 256
        %s445 = scalar_lea.vmem [#allocation14], %s444
        %s446 = smul.u32 16, %s34
        %s447 = smul.u32 2, %s35
        %s448 = smul.u32 16, %s34
        %s449 = smul.u32 2, %s35
        %p450 = scmp.eq.s32.totalorder %s35, 0
        // Predicated region
        $region77: #{tpu_custom_call.1} parent=51 // pred_check
          %p451 = pneg %p450
        $region78: #{tpu_custom_call.1} parent=51 // pred_check_branch
          %453 = sbr.rel (%p451) target = $region80
        $region79: #{tpu_custom_call.1} parent=51 // pred_region
          %v454 = vld [vmem:[%s377] sm:$0xff]
          %v455 = vld [vmem:[%s377 + $0x8] sm:$0xff]
          %v456 = vld [vmem:[%s377 + $0x10] sm:$0xff]
          %v457 = vld [vmem:[%s377 + $0x18] sm:$0xff]
          %v458 = vld [vmem:[%s377 + $0x20] sm:$0xff]
          %v459 = vld [vmem:[%s377 + $0x28] sm:$0xff]
          %v460 = vld [vmem:[%s377 + $0x30] sm:$0xff]
          %v461 = vld [vmem:[%s377 + $0x38] sm:$0xff]
          %v462 = vld [vmem:[%s377 + $0x40] sm:$0xff]
          %v463 = vld [vmem:[%s377 + $0x48] sm:$0xff]
          %v464 = vld [vmem:[%s377 + $0x50] sm:$0xff]
          %v465 = vld [vmem:[%s377 + $0x58] sm:$0xff]
          %v466 = vld [vmem:[%s377 + $0x60] sm:$0xff]
          %v467 = vld [vmem:[%s377 + $0x68] sm:$0xff]
          %v468 = vld [vmem:[%s377 + $0x70] sm:$0xff]
          %v469 = vld [vmem:[%s377 + $0x78] sm:$0xff]
          %v470 = vld [vmem:[#allocation6] sm:$0xff]
          %v471 = vld [vmem:[#allocation6 + $0x8] sm:$0xff]
          %v472 = vld [vmem:[#allocation6 + $0x10] sm:$0xff]
          %v473 = vld [vmem:[#allocation6 + $0x18] sm:$0xff]
          %v474 = vld [vmem:[#allocation6 + $0x20] sm:$0xff]
          %v475 = vld [vmem:[#allocation6 + $0x28] sm:$0xff]
          %v476 = vld [vmem:[#allocation6 + $0x30] sm:$0xff]
          %v477 = vld [vmem:[#allocation6 + $0x38] sm:$0xff]
          %v478 = vld [vmem:[#allocation6 + $0x40] sm:$0xff]
          %v479 = vld [vmem:[#allocation6 + $0x48] sm:$0xff]
          %v480 = vld [vmem:[#allocation6 + $0x50] sm:$0xff]
          %v481 = vld [vmem:[#allocation6 + $0x58] sm:$0xff]
          %v482 = vld [vmem:[#allocation6 + $0x60] sm:$0xff]
          %v483 = vld [vmem:[#allocation6 + $0x68] sm:$0xff]
          %v484 = vld [vmem:[#allocation6 + $0x70] sm:$0xff]
          %v485 = vld [vmem:[#allocation6 + $0x78] sm:$0xff]
          %v486 = vld [vmem:[#allocation6 + $0x80] sm:$0xff]
          %v487 = vld [vmem:[#allocation6 + $0x88] sm:$0xff]
          %v488 = vld [vmem:[#allocation6 + $0x90] sm:$0xff]
          %v489 = vld [vmem:[#allocation6 + $0x98] sm:$0xff]
          %v490 = vld [vmem:[#allocation6 + $0xa0] sm:$0xff]
          %v491 = vld [vmem:[#allocation6 + $0xa8] sm:$0xff]
          %v492 = vld [vmem:[#allocation6 + $0xb0] sm:$0xff]
          %v493 = vld [vmem:[#allocation6 + $0xb8] sm:$0xff]
          %v494 = vld [vmem:[#allocation6 + $0xc0] sm:$0xff]
          %v495 = vld [vmem:[#allocation6 + $0xc8] sm:$0xff]
          %v496 = vld [vmem:[#allocation6 + $0xd0] sm:$0xff]
          %v497 = vld [vmem:[#allocation6 + $0xd8] sm:$0xff]
          %v498 = vld [vmem:[#allocation6 + $0xe0] sm:$0xff]
          %v499 = vld [vmem:[#allocation6 + $0xe8] sm:$0xff]
          %v500 = vld [vmem:[#allocation6 + $0xf0] sm:$0xff]
          %v501 = vld [vmem:[#allocation6 + $0xf8] sm:$0xff]
          %v502 = vld [vmem:[#allocation8] sm:$0x3]
          %v504 = vperm.slane %v502, 0
          %v505 = vperm.slane %v502, 1
          %508 = vmatpush.msra.mxu0 %v500
          %509 = vmatpush.msra.mxu0 %v498
          %510 = vmatpush.msra.mxu0 %v496
          %511 = vmatpush.msra.mxu0 %v494
          %512 = vmatpush.msra.mxu0 %v492
          %513 = vmatpush.msra.mxu0 %v490
          %514 = vmatpush.msra.mxu0 %v488
          %515 = vmatpush.msra.mxu0 %v486
          %516 = vmatpush.msra.mxu0 %v484
          %517 = vmatpush.msra.mxu0 %v482
          %518 = vmatpush.msra.mxu0 %v480
          %519 = vmatpush.msra.mxu0 %v478
          %520 = vmatpush.msra.mxu0 %v476
          %521 = vmatpush.msra.mxu0 %v474
          %522 = vmatpush.msra.mxu0 %v472
          %523 = vmatpush.msra.mxu0 %v470
          %524 = vmatmul.f32.gmra.mxu0 %v454
          %v525 = vpop.f32.mrf.mxu0
          %v526 = vadd.f32 %v504, %v525
          %527 = vmatmul.f32.gmra.mxu0 %v455
          %v528 = vpop.f32.mrf.mxu0
          %v529 = vadd.f32 %v504, %v528
          %530 = vmatmul.f32.gmra.mxu0 %v456
          %v531 = vpop.f32.mrf.mxu0
          %v532 = vadd.f32 %v504, %v531
          %533 = vmatmul.f32.gmra.mxu0 %v457
          %v534 = vpop.f32.mrf.mxu0
          %v535 = vadd.f32 %v504, %v534
          %536 = vmatmul.f32.gmra.mxu0 %v458
          %v537 = vpop.f32.mrf.mxu0
          %v538 = vadd.f32 %v504, %v537
          %539 = vmatmul.f32.gmra.mxu0 %v459
          %v540 = vpop.f32.mrf.mxu0
          %v541 = vadd.f32 %v504, %v540
          %542 = vmatmul.f32.gmra.mxu0 %v460
          %v543 = vpop.f32.mrf.mxu0
          %v544 = vadd.f32 %v504, %v543
          %545 = vmatmul.f32.gmra.mxu0 %v461
          %v546 = vpop.f32.mrf.mxu0
          %v547 = vadd.f32 %v504, %v546
          %548 = vmatmul.f32.gmra.mxu0 %v462
          %v549 = vpop.f32.mrf.mxu0
          %v550 = vadd.f32 %v504, %v549
          %551 = vmatmul.f32.gmra.mxu0 %v463
          %v552 = vpop.f32.mrf.mxu0
          %v553 = vadd.f32 %v504, %v552
          %554 = vmatmul.f32.gmra.mxu0 %v464
          %v555 = vpop.f32.mrf.mxu0
          %v556 = vadd.f32 %v504, %v555
          %557 = vmatmul.f32.gmra.mxu0 %v465
          %v558 = vpop.f32.mrf.mxu0
          %v559 = vadd.f32 %v504, %v558
          %560 = vmatmul.f32.gmra.mxu0 %v466
          %v561 = vpop.f32.mrf.mxu0
          %v562 = vadd.f32 %v504, %v561
          %563 = vmatmul.f32.gmra.mxu0 %v467
          %v564 = vpop.f32.mrf.mxu0
          %v565 = vadd.f32 %v504, %v564
          %566 = vmatmul.f32.gmra.mxu0 %v468
          %v567 = vpop.f32.mrf.mxu0
          %v568 = vadd.f32 %v504, %v567
          %569 = vmatmul.f32.gmra.mxu0 %v469
          %v570 = vpop.f32.mrf.mxu0
          %v571 = vadd.f32 %v504, %v570
          %572 = vdwg.mxu0
          %573 = vmatpush.msra.mxu0 %v501
          %574 = vmatpush.msra.mxu0 %v499
          %575 = vmatpush.msra.mxu0 %v497
          %576 = vmatpush.msra.mxu0 %v495
          %577 = vmatpush.msra.mxu0 %v493
          %578 = vmatpush.msra.mxu0 %v491
          %579 = vmatpush.msra.mxu0 %v489
          %580 = vmatpush.msra.mxu0 %v487
          %581 = vmatpush.msra.mxu0 %v485
          %582 = vmatpush.msra.mxu0 %v483
          %583 = vmatpush.msra.mxu0 %v481
          %584 = vmatpush.msra.mxu0 %v479
          %585 = vmatpush.msra.mxu0 %v477
          %586 = vmatpush.msra.mxu0 %v475
          %587 = vmatpush.msra.mxu0 %v473
          %588 = vmatpush.msra.mxu0 %v471
          %589 = vmatmul.f32.gmra.mxu0 %v454
          %v590 = vpop.f32.mrf.mxu0
          %v591 = vadd.f32 %v505, %v590
          %592 = vmatmul.f32.gmra.mxu0 %v455
          %v593 = vpop.f32.mrf.mxu0
          %v594 = vadd.f32 %v505, %v593
          %595 = vmatmul.f32.gmra.mxu0 %v456
          %v596 = vpop.f32.mrf.mxu0
          %v597 = vadd.f32 %v505, %v596
          %598 = vmatmul.f32.gmra.mxu0 %v457
          %v599 = vpop.f32.mrf.mxu0
          %v600 = vadd.f32 %v505, %v599
          %601 = vmatmul.f32.gmra.mxu0 %v458
          %v602 = vpop.f32.mrf.mxu0
          %v603 = vadd.f32 %v505, %v602
          %604 = vmatmul.f32.gmra.mxu0 %v459
          %v605 = vpop.f32.mrf.mxu0
          %v606 = vadd.f32 %v505, %v605
          %607 = vmatmul.f32.gmra.mxu0 %v460
          %v608 = vpop.f32.mrf.mxu0
          %v609 = vadd.f32 %v505, %v608
          %610 = vmatmul.f32.gmra.mxu0 %v461
          %v611 = vpop.f32.mrf.mxu0
          %v612 = vadd.f32 %v505, %v611
          %613 = vmatmul.f32.gmra.mxu0 %v462
          %v614 = vpop.f32.mrf.mxu0
          %v615 = vadd.f32 %v505, %v614
          %616 = vmatmul.f32.gmra.mxu0 %v463
          %v617 = vpop.f32.mrf.mxu0
          %v618 = vadd.f32 %v505, %v617
          %619 = vmatmul.f32.gmra.mxu0 %v464
          %v620 = vpop.f32.mrf.mxu0
          %v621 = vadd.f32 %v505, %v620
          %622 = vmatmul.f32.gmra.mxu0 %v465
          %v623 = vpop.f32.mrf.mxu0
          %v624 = vadd.f32 %v505, %v623
          %625 = vmatmul.f32.gmra.mxu0 %v466
          %v626 = vpop.f32.mrf.mxu0
          %v627 = vadd.f32 %v505, %v626
          %628 = vmatmul.f32.gmra.mxu0 %v467
          %v629 = vpop.f32.mrf.mxu0
          %v630 = vadd.f32 %v505, %v629
          %631 = vmatmul.f32.gmra.mxu0 %v468
          %v632 = vpop.f32.mrf.mxu0
          %v633 = vadd.f32 %v505, %v632
          %634 = vmatmul.f32.gmra.mxu0 %v469
          %v635 = vpop.f32.mrf.mxu0
          %v636 = vadd.f32 %v505, %v635
          %637 = vdwg.mxu0
          %v638 = vmul.f32 %v526, 0.5
          %v639 = vmul.f32 %v591, 0.5
          %v640 = vmul.f32 %v529, 0.5
          %v641 = vmul.f32 %v594, 0.5
          %v642 = vmul.f32 %v532, 0.5
          %v643 = vmul.f32 %v597, 0.5
          %v644 = vmul.f32 %v535, 0.5
          %v645 = vmul.f32 %v600, 0.5
          %v646 = vmul.f32 %v538, 0.5
          %v647 = vmul.f32 %v603, 0.5
          %v648 = vmul.f32 %v541, 0.5
          %v649 = vmul.f32 %v606, 0.5
          %v650 = vmul.f32 %v544, 0.5
          %v651 = vmul.f32 %v609, 0.5
          %v652 = vmul.f32 %v547, 0.5
          %v653 = vmul.f32 %v612, 0.5
          %v654 = vmul.f32 %v550, 0.5
          %v655 = vmul.f32 %v615, 0.5
          %v656 = vmul.f32 %v553, 0.5
          %v657 = vmul.f32 %v618, 0.5
          %v658 = vmul.f32 %v556, 0.5
          %v659 = vmul.f32 %v621, 0.5
          %v660 = vmul.f32 %v559, 0.5
          %v661 = vmul.f32 %v624, 0.5
          %v662 = vmul.f32 %v562, 0.5
          %v663 = vmul.f32 %v627, 0.5
          %v664 = vmul.f32 %v565, 0.5
          %v665 = vmul.f32 %v630, 0.5
          %v666 = vmul.f32 %v568, 0.5
          %v667 = vmul.f32 %v633, 0.5
          %v668 = vmul.f32 %v571, 0.5
          %v669 = vmul.f32 %v636, 0.5
          %v670 = vmul.f32 %v526, 0.70710677
          %v671 = vmul.f32 %v591, 0.70710677
          %v672 = vmul.f32 %v529, 0.70710677
          %v673 = vmul.f32 %v594, 0.70710677
          %v674 = vmul.f32 %v532, 0.70710677
          %v675 = vmul.f32 %v597, 0.70710677
          %v676 = vmul.f32 %v535, 0.70710677
          %v677 = vmul.f32 %v600, 0.70710677
          %v678 = vmul.f32 %v538, 0.70710677
          %v679 = vmul.f32 %v603, 0.70710677
          %v680 = vmul.f32 %v541, 0.70710677
          %v681 = vmul.f32 %v606, 0.70710677
          %v682 = vmul.f32 %v544, 0.70710677
          %v683 = vmul.f32 %v609, 0.70710677
          %v684 = vmul.f32 %v547, 0.70710677
          %v685 = vmul.f32 %v612, 0.70710677
          %v686 = vmul.f32 %v550, 0.70710677
          %v687 = vmul.f32 %v615, 0.70710677
          %v688 = vmul.f32 %v553, 0.70710677
          %v689 = vmul.f32 %v618, 0.70710677
          %v690 = vmul.f32 %v556, 0.70710677
          %v691 = vmul.f32 %v621, 0.70710677
          %v692 = vmul.f32 %v559, 0.70710677
          %v693 = vmul.f32 %v624, 0.70710677
          %v694 = vmul.f32 %v562, 0.70710677
          %v695 = vmul.f32 %v627, 0.70710677
          %v696 = vmul.f32 %v565, 0.70710677
          %v697 = vmul.f32 %v630, 0.70710677
          %v698 = vmul.f32 %v568, 0.70710677
          %v699 = vmul.f32 %v633, 0.70710677
          %v700 = vmul.f32 %v571, 0.70710677
          %v701 = vmul.f32 %v636, 0.70710677
          %v702 = vmul.f32 %v670, %v670
          %v703 = vmin.f32 16.0, %v702
          %v704 = vmul.f32 %v703, 2.1237322e-06
          %v705 = vadd.f32 %v704, 0.00028619796
          %v706 = vmul.f32 %v703, %v705
          %v707 = vadd.f32 %v706, 0.0036580483
          %v708 = vmul.f32 %v703, %v707
          %v709 = vadd.f32 %v708, 0.05243302
          %v710 = vmul.f32 %v703, %v709
          %v711 = vadd.f32 %v710, 0.18741608
          %v712 = vmul.f32 %v703, %v711
          %v713 = vadd.f32 %v712, 1.1283791
          %v714 = vmul.f32 %v670, %v713
          %v715 = vmul.f32 %v703, 3.8918573e-05
          %v716 = vadd.f32 %v715, 0.001143296
          %v717 = vmul.f32 %v703, %v716
          %v718 = vadd.f32 %v717, 0.014752088
          %v719 = vmul.f32 %v703, %v718
          %v720 = vadd.f32 %v719, 0.112945676
          %v721 = vmul.f32 %v703, %v720
          %v722 = vadd.f32 %v721, 0.4994258
          %v723 = vmul.f32 %v703, %v722
          %v724 = vadd.f32 %v723, 1.0
          %v725 = vrcp.pop %v724
          %v726 = vmul.f32 %v724, %v725
          %v727 = vsub.f32 1.0, %v726
          %v728 = vmul.f32 %v725, %v727
          %v729 = vadd.f32 %v725, %v728
          %vm730 = vweird.f32 %v724
          %vm731 = vweird.f32 %v725
          %vm732 = vmor %vm730, %vm731
          %v733 = vsel %vm732, %v725, %v729
          %v734 = vand.u32 2147483647, %v724
          %vm735 = vcmp.eq.f32.partialorder %v734, 8.507059e+37
          %v736 = vand.u32 %v724, 2147483648
          %v737 = vor.u32 1.1754944e-38, %v736
          %v738 = vsel %vm735, %v737, %v733
          %v739 = vmul.f32 %v714, %v738
          %v740 = vmin.f32 %v739, 1.0
          %v741 = vmax.f32 %v740, -1.0
          %v742 = vmul.f32 %v671, %v671
          %v743 = vmin.f32 16.0, %v742
          %v744 = vmul.f32 %v743, 2.1237322e-06
          %v745 = vadd.f32 %v744, 0.00028619796
          %v746 = vmul.f32 %v743, %v745
          %v747 = vadd.f32 %v746, 0.0036580483
          %v748 = vmul.f32 %v743, %v747
          %v749 = vadd.f32 %v748, 0.05243302
          %v750 = vmul.f32 %v743, %v749
          %v751 = vadd.f32 %v750, 0.18741608
          %v752 = vmul.f32 %v743, %v751
          %v753 = vadd.f32 %v752, 1.1283791
          %v754 = vmul.f32 %v671, %v753
          %v755 = vmul.f32 %v743, 3.8918573e-05
          %v756 = vadd.f32 %v755, 0.001143296
          %v757 = vmul.f32 %v743, %v756
          %v758 = vadd.f32 %v757, 0.014752088
          %v759 = vmul.f32 %v743, %v758
          %v760 = vadd.f32 %v759, 0.112945676
          %v761 = vmul.f32 %v743, %v760
          %v762 = vadd.f32 %v761, 0.4994258
          %v763 = vmul.f32 %v743, %v762
          %v764 = vadd.f32 %v763, 1.0
          %v765 = vrcp.pop %v764
          %v766 = vmul.f32 %v764, %v765
          %v767 = vsub.f32 1.0, %v766
          %v768 = vmul.f32 %v765, %v767
          %v769 = vadd.f32 %v765, %v768
          %vm770 = vweird.f32 %v764
          %vm771 = vweird.f32 %v765
          %vm772 = vmor %vm770, %vm771
          %v773 = vsel %vm772, %v765, %v769
          %v774 = vand.u32 2147483647, %v764
          %vm775 = vcmp.eq.f32.partialorder %v774, 8.507059e+37
          %v776 = vand.u32 %v764, 2147483648
          %v777 = vor.u32 1.1754944e-38, %v776
          %v778 = vsel %vm775, %v777, %v773
          %v779 = vmul.f32 %v754, %v778
          %v780 = vmin.f32 %v779, 1.0
          %v781 = vmax.f32 %v780, -1.0
          %v782 = vmul.f32 %v672, %v672
          %v783 = vmin.f32 16.0, %v782
          %v784 = vmul.f32 %v783, 2.1237322e-06
          %v785 = vadd.f32 %v784, 0.00028619796
          %v786 = vmul.f32 %v783, %v785
          %v787 = vadd.f32 %v786, 0.0036580483
          %v788 = vmul.f32 %v783, %v787
          %v789 = vadd.f32 %v788, 0.05243302
          %v790 = vmul.f32 %v783, %v789
          %v791 = vadd.f32 %v790, 0.18741608
          %v792 = vmul.f32 %v783, %v791
          %v793 = vadd.f32 %v792, 1.1283791
          %v794 = vmul.f32 %v672, %v793
          %v795 = vmul.f32 %v783, 3.8918573e-05
          %v796 = vadd.f32 %v795, 0.001143296
          %v797 = vmul.f32 %v783, %v796
          %v798 = vadd.f32 %v797, 0.014752088
          %v799 = vmul.f32 %v783, %v798
          %v800 = vadd.f32 %v799, 0.112945676
          %v801 = vmul.f32 %v783, %v800
          %v802 = vadd.f32 %v801, 0.4994258
          %v803 = vmul.f32 %v783, %v802
          %v804 = vadd.f32 %v803, 1.0
          %v805 = vrcp.pop %v804
          %v806 = vmul.f32 %v804, %v805
          %v807 = vsub.f32 1.0, %v806
          %v808 = vmul.f32 %v805, %v807
          %v809 = vadd.f32 %v805, %v808
          %vm810 = vweird.f32 %v804
          %vm811 = vweird.f32 %v805
          %vm812 = vmor %vm810, %vm811
          %v813 = vsel %vm812, %v805, %v809
          %v814 = vand.u32 2147483647, %v804
          %vm815 = vcmp.eq.f32.partialorder %v814, 8.507059e+37
          %v816 = vand.u32 %v804, 2147483648
          %v817 = vor.u32 1.1754944e-38, %v816
          %v818 = vsel %vm815, %v817, %v813
          %v819 = vmul.f32 %v794, %v818
          %v820 = vmin.f32 %v819, 1.0
          %v821 = vmax.f32 %v820, -1.0
          %v822 = vmul.f32 %v673, %v673
          %v823 = vmin.f32 16.0, %v822
          %v824 = vmul.f32 %v823, 2.1237322e-06
          %v825 = vadd.f32 %v824, 0.00028619796
          %v826 = vmul.f32 %v823, %v825
          %v827 = vadd.f32 %v826, 0.0036580483
          %v828 = vmul.f32 %v823, %v827
          %v829 = vadd.f32 %v828, 0.05243302
          %v830 = vmul.f32 %v823, %v829
          %v831 = vadd.f32 %v830, 0.18741608
          %v832 = vmul.f32 %v823, %v831
          %v833 = vadd.f32 %v832, 1.1283791
          %v834 = vmul.f32 %v673, %v833
          %v835 = vmul.f32 %v823, 3.8918573e-05
          %v836 = vadd.f32 %v835, 0.001143296
          %v837 = vmul.f32 %v823, %v836
          %v838 = vadd.f32 %v837, 0.014752088
          %v839 = vmul.f32 %v823, %v838
          %v840 = vadd.f32 %v839, 0.112945676
          %v841 = vmul.f32 %v823, %v840
          %v842 = vadd.f32 %v841, 0.4994258
          %v843 = vmul.f32 %v823, %v842
          %v844 = vadd.f32 %v843, 1.0
          %v845 = vrcp.pop %v844
          %v846 = vmul.f32 %v844, %v845
          %v847 = vsub.f32 1.0, %v846
          %v848 = vmul.f32 %v845, %v847
          %v849 = vadd.f32 %v845, %v848
          %vm850 = vweird.f32 %v844
          %vm851 = vweird.f32 %v845
          %vm852 = vmor %vm850, %vm851
          %v853 = vsel %vm852, %v845, %v849
          %v854 = vand.u32 2147483647, %v844
          %vm855 = vcmp.eq.f32.partialorder %v854, 8.507059e+37
          %v856 = vand.u32 %v844, 2147483648
          %v857 = vor.u32 1.1754944e-38, %v856
          %v858 = vsel %vm855, %v857, %v853
          %v859 = vmul.f32 %v834, %v858
          %v860 = vmin.f32 %v859, 1.0
          %v861 = vmax.f32 %v860, -1.0
          %v862 = vmul.f32 %v674, %v674
          %v863 = vmin.f32 16.0, %v862
          %v864 = vmul.f32 %v863, 2.1237322e-06
          %v865 = vadd.f32 %v864, 0.00028619796
          %v866 = vmul.f32 %v863, %v865
          %v867 = vadd.f32 %v866, 0.0036580483
          %v868 = vmul.f32 %v863, %v867
          %v869 = vadd.f32 %v868, 0.05243302
          %v870 = vmul.f32 %v863, %v869
          %v871 = vadd.f32 %v870, 0.18741608
          %v872 = vmul.f32 %v863, %v871
          %v873 = vadd.f32 %v872, 1.1283791
          %v874 = vmul.f32 %v674, %v873
          %v875 = vmul.f32 %v863, 3.8918573e-05
          %v876 = vadd.f32 %v875, 0.001143296
          %v877 = vmul.f32 %v863, %v876
          %v878 = vadd.f32 %v877, 0.014752088
          %v879 = vmul.f32 %v863, %v878
          %v880 = vadd.f32 %v879, 0.112945676
          %v881 = vmul.f32 %v863, %v880
          %v882 = vadd.f32 %v881, 0.4994258
          %v883 = vmul.f32 %v863, %v882
          %v884 = vadd.f32 %v883, 1.0
          %v885 = vrcp.pop %v884
          %v886 = vmul.f32 %v884, %v885
          %v887 = vsub.f32 1.0, %v886
          %v888 = vmul.f32 %v885, %v887
          %v889 = vadd.f32 %v885, %v888
          %vm890 = vweird.f32 %v884
          %vm891 = vweird.f32 %v885
          %vm892 = vmor %vm890, %vm891
          %v893 = vsel %vm892, %v885, %v889
          %v894 = vand.u32 2147483647, %v884
          %vm895 = vcmp.eq.f32.partialorder %v894, 8.507059e+37
          %v896 = vand.u32 %v884, 2147483648
          %v897 = vor.u32 1.1754944e-38, %v896
          %v898 = vsel %vm895, %v897, %v893
          %v899 = vmul.f32 %v874, %v898
          %v900 = vmin.f32 %v899, 1.0
          %v901 = vmax.f32 %v900, -1.0
          %v902 = vmul.f32 %v675, %v675
          %v903 = vmin.f32 16.0, %v902
          %v904 = vmul.f32 %v903, 2.1237322e-06
          %v905 = vadd.f32 %v904, 0.00028619796
          %v906 = vmul.f32 %v903, %v905
          %v907 = vadd.f32 %v906, 0.0036580483
          %v908 = vmul.f32 %v903, %v907
          %v909 = vadd.f32 %v908, 0.05243302
          %v910 = vmul.f32 %v903, %v909
          %v911 = vadd.f32 %v910, 0.18741608
          %v912 = vmul.f32 %v903, %v911
          %v913 = vadd.f32 %v912, 1.1283791
          %v914 = vmul.f32 %v675, %v913
          %v915 = vmul.f32 %v903, 3.8918573e-05
          %v916 = vadd.f32 %v915, 0.001143296
          %v917 = vmul.f32 %v903, %v916
          %v918 = vadd.f32 %v917, 0.014752088
          %v919 = vmul.f32 %v903, %v918
          %v920 = vadd.f32 %v919, 0.112945676
          %v921 = vmul.f32 %v903, %v920
          %v922 = vadd.f32 %v921, 0.4994258
          %v923 = vmul.f32 %v903, %v922
          %v924 = vadd.f32 %v923, 1.0
          %v925 = vrcp.pop %v924
          %v926 = vmul.f32 %v924, %v925
          %v927 = vsub.f32 1.0, %v926
          %v928 = vmul.f32 %v925, %v927
          %v929 = vadd.f32 %v925, %v928
          %vm930 = vweird.f32 %v924
          %vm931 = vweird.f32 %v925
          %vm932 = vmor %vm930, %vm931
          %v933 = vsel %vm932, %v925, %v929
          %v934 = vand.u32 2147483647, %v924
          %vm935 = vcmp.eq.f32.partialorder %v934, 8.507059e+37
          %v936 = vand.u32 %v924, 2147483648
          %v937 = vor.u32 1.1754944e-38, %v936
          %v938 = vsel %vm935, %v937, %v933
          %v939 = vmul.f32 %v914, %v938
          %v940 = vmin.f32 %v939, 1.0
          %v941 = vmax.f32 %v940, -1.0
          %v942 = vmul.f32 %v676, %v676
          %v943 = vmin.f32 16.0, %v942
          %v944 = vmul.f32 %v943, 2.1237322e-06
          %v945 = vadd.f32 %v944, 0.00028619796
          %v946 = vmul.f32 %v943, %v945
          %v947 = vadd.f32 %v946, 0.0036580483
          %v948 = vmul.f32 %v943, %v947
          %v949 = vadd.f32 %v948, 0.05243302
          %v950 = vmul.f32 %v943, %v949
          %v951 = vadd.f32 %v950, 0.18741608
          %v952 = vmul.f32 %v943, %v951
          %v953 = vadd.f32 %v952, 1.1283791
          %v954 = vmul.f32 %v676, %v953
          %v955 = vmul.f32 %v943, 3.8918573e-05
          %v956 = vadd.f32 %v955, 0.001143296
          %v957 = vmul.f32 %v943, %v956
          %v958 = vadd.f32 %v957, 0.014752088
          %v959 = vmul.f32 %v943, %v958
          %v960 = vadd.f32 %v959, 0.112945676
          %v961 = vmul.f32 %v943, %v960
          %v962 = vadd.f32 %v961, 0.4994258
          %v963 = vmul.f32 %v943, %v962
          %v964 = vadd.f32 %v963, 1.0
          %v965 = vrcp.pop %v964
          %v966 = vmul.f32 %v964, %v965
          %v967 = vsub.f32 1.0, %v966
          %v968 = vmul.f32 %v965, %v967
          %v969 = vadd.f32 %v965, %v968
          %vm970 = vweird.f32 %v964
          %vm971 = vweird.f32 %v965
          %vm972 = vmor %vm970, %vm971
          %v973 = vsel %vm972, %v965, %v969
          %v974 = vand.u32 2147483647, %v964
          %vm975 = vcmp.eq.f32.partialorder %v974, 8.507059e+37
          %v976 = vand.u32 %v964, 2147483648
          %v977 = vor.u32 1.1754944e-38, %v976
          %v978 = vsel %vm975, %v977, %v973
          %v979 = vmul.f32 %v954, %v978
          %v980 = vmin.f32 %v979, 1.0
          %v981 = vmax.f32 %v980, -1.0
          %v982 = vmul.f32 %v677, %v677
          %v983 = vmin.f32 16.0, %v982
          %v984 = vmul.f32 %v983, 2.1237322e-06
          %v985 = vadd.f32 %v984, 0.00028619796
          %v986 = vmul.f32 %v983, %v985
          %v987 = vadd.f32 %v986, 0.0036580483
          %v988 = vmul.f32 %v983, %v987
          %v989 = vadd.f32 %v988, 0.05243302
          %v990 = vmul.f32 %v983, %v989
          %v991 = vadd.f32 %v990, 0.18741608
          %v992 = vmul.f32 %v983, %v991
          %v993 = vadd.f32 %v992, 1.1283791
          %v994 = vmul.f32 %v677, %v993
          %v995 = vmul.f32 %v983, 3.8918573e-05
          %v996 = vadd.f32 %v995, 0.001143296
          %v997 = vmul.f32 %v983, %v996
          %v998 = vadd.f32 %v997, 0.014752088
          %v999 = vmul.f32 %v983, %v998
          %v1000 = vadd.f32 %v999, 0.112945676
          %v1001 = vmul.f32 %v983, %v1000
          %v1002 = vadd.f32 %v1001, 0.4994258
          %v1003 = vmul.f32 %v983, %v1002
          %v1004 = vadd.f32 %v1003, 1.0
          %v1005 = vrcp.pop %v1004
          %v1006 = vmul.f32 %v1004, %v1005
          %v1007 = vsub.f32 1.0, %v1006
          %v1008 = vmul.f32 %v1005, %v1007
          %v1009 = vadd.f32 %v1005, %v1008
          %vm1010 = vweird.f32 %v1004
          %vm1011 = vweird.f32 %v1005
          %vm1012 = vmor %vm1010, %vm1011
          %v1013 = vsel %vm1012, %v1005, %v1009
          %v1014 = vand.u32 2147483647, %v1004
          %vm1015 = vcmp.eq.f32.partialorder %v1014, 8.507059e+37
          %v1016 = vand.u32 %v1004, 2147483648
          %v1017 = vor.u32 1.1754944e-38, %v1016
          %v1018 = vsel %vm1015, %v1017, %v1013
          %v1019 = vmul.f32 %v994, %v1018
          %v1020 = vmin.f32 %v1019, 1.0
          %v1021 = vmax.f32 %v1020, -1.0
          %v1022 = vmul.f32 %v678, %v678
          %v1023 = vmin.f32 16.0, %v1022
          %v1024 = vmul.f32 %v1023, 2.1237322e-06
          %v1025 = vadd.f32 %v1024, 0.00028619796
          %v1026 = vmul.f32 %v1023, %v1025
          %v1027 = vadd.f32 %v1026, 0.0036580483
          %v1028 = vmul.f32 %v1023, %v1027
          %v1029 = vadd.f32 %v1028, 0.05243302
          %v1030 = vmul.f32 %v1023, %v1029
          %v1031 = vadd.f32 %v1030, 0.18741608
          %v1032 = vmul.f32 %v1023, %v1031
          %v1033 = vadd.f32 %v1032, 1.1283791
          %v1034 = vmul.f32 %v678, %v1033
          %v1035 = vmul.f32 %v1023, 3.8918573e-05
          %v1036 = vadd.f32 %v1035, 0.001143296
          %v1037 = vmul.f32 %v1023, %v1036
          %v1038 = vadd.f32 %v1037, 0.014752088
          %v1039 = vmul.f32 %v1023, %v1038
          %v1040 = vadd.f32 %v1039, 0.112945676
          %v1041 = vmul.f32 %v1023, %v1040
          %v1042 = vadd.f32 %v1041, 0.4994258
          %v1043 = vmul.f32 %v1023, %v1042
          %v1044 = vadd.f32 %v1043, 1.0
          %v1045 = vrcp.pop %v1044
          %v1046 = vmul.f32 %v1044, %v1045
          %v1047 = vsub.f32 1.0, %v1046
          %v1048 = vmul.f32 %v1045, %v1047
          %v1049 = vadd.f32 %v1045, %v1048
          %vm1050 = vweird.f32 %v1044
          %vm1051 = vweird.f32 %v1045
          %vm1052 = vmor %vm1050, %vm1051
          %v1053 = vsel %vm1052, %v1045, %v1049
          %v1054 = vand.u32 2147483647, %v1044
          %vm1055 = vcmp.eq.f32.partialorder %v1054, 8.507059e+37
          %v1056 = vand.u32 %v1044, 2147483648
          %v1057 = vor.u32 1.1754944e-38, %v1056
          %v1058 = vsel %vm1055, %v1057, %v1053
          %v1059 = vmul.f32 %v1034, %v1058
          %v1060 = vmin.f32 %v1059, 1.0
          %v1061 = vmax.f32 %v1060, -1.0
          %v1062 = vmul.f32 %v679, %v679
          %v1063 = vmin.f32 16.0, %v1062
          %v1064 = vmul.f32 %v1063, 2.1237322e-06
          %v1065 = vadd.f32 %v1064, 0.00028619796
          %v1066 = vmul.f32 %v1063, %v1065
          %v1067 = vadd.f32 %v1066, 0.0036580483
          %v1068 = vmul.f32 %v1063, %v1067
          %v1069 = vadd.f32 %v1068, 0.05243302
          %v1070 = vmul.f32 %v1063, %v1069
          %v1071 = vadd.f32 %v1070, 0.18741608
          %v1072 = vmul.f32 %v1063, %v1071
          %v1073 = vadd.f32 %v1072, 1.1283791
          %v1074 = vmul.f32 %v679, %v1073
          %v1075 = vmul.f32 %v1063, 3.8918573e-05
          %v1076 = vadd.f32 %v1075, 0.001143296
          %v1077 = vmul.f32 %v1063, %v1076
          %v1078 = vadd.f32 %v1077, 0.014752088
          %v1079 = vmul.f32 %v1063, %v1078
          %v1080 = vadd.f32 %v1079, 0.112945676
          %v1081 = vmul.f32 %v1063, %v1080
          %v1082 = vadd.f32 %v1081, 0.4994258
          %v1083 = vmul.f32 %v1063, %v1082
          %v1084 = vadd.f32 %v1083, 1.0
          %v1085 = vrcp.pop %v1084
          %v1086 = vmul.f32 %v1084, %v1085
          %v1087 = vsub.f32 1.0, %v1086
          %v1088 = vmul.f32 %v1085, %v1087
          %v1089 = vadd.f32 %v1085, %v1088
          %vm1090 = vweird.f32 %v1084
          %vm1091 = vweird.f32 %v1085
          %vm1092 = vmor %vm1090, %vm1091
          %v1093 = vsel %vm1092, %v1085, %v1089
          %v1094 = vand.u32 2147483647, %v1084
          %vm1095 = vcmp.eq.f32.partialorder %v1094, 8.507059e+37
          %v1096 = vand.u32 %v1084, 2147483648
          %v1097 = vor.u32 1.1754944e-38, %v1096
          %v1098 = vsel %vm1095, %v1097, %v1093
          %v1099 = vmul.f32 %v1074, %v1098
          %v1100 = vmin.f32 %v1099, 1.0
          %v1101 = vmax.f32 %v1100, -1.0
          %v1102 = vmul.f32 %v680, %v680
          %v1103 = vmin.f32 16.0, %v1102
          %v1104 = vmul.f32 %v1103, 2.1237322e-06
          %v1105 = vadd.f32 %v1104, 0.00028619796
          %v1106 = vmul.f32 %v1103, %v1105
          %v1107 = vadd.f32 %v1106, 0.0036580483
          %v1108 = vmul.f32 %v1103, %v1107
          %v1109 = vadd.f32 %v1108, 0.05243302
          %v1110 = vmul.f32 %v1103, %v1109
          %v1111 = vadd.f32 %v1110, 0.18741608
          %v1112 = vmul.f32 %v1103, %v1111
          %v1113 = vadd.f32 %v1112, 1.1283791
          %v1114 = vmul.f32 %v680, %v1113
          %v1115 = vmul.f32 %v1103, 3.8918573e-05
          %v1116 = vadd.f32 %v1115, 0.001143296
          %v1117 = vmul.f32 %v1103, %v1116
          %v1118 = vadd.f32 %v1117, 0.014752088
          %v1119 = vmul.f32 %v1103, %v1118
          %v1120 = vadd.f32 %v1119, 0.112945676
          %v1121 = vmul.f32 %v1103, %v1120
          %v1122 = vadd.f32 %v1121, 0.4994258
          %v1123 = vmul.f32 %v1103, %v1122
          %v1124 = vadd.f32 %v1123, 1.0
          %v1125 = vrcp.pop %v1124
          %v1126 = vmul.f32 %v1124, %v1125
          %v1127 = vsub.f32 1.0, %v1126
          %v1128 = vmul.f32 %v1125, %v1127
          %v1129 = vadd.f32 %v1125, %v1128
          %vm1130 = vweird.f32 %v1124
          %vm1131 = vweird.f32 %v1125
          %vm1132 = vmor %vm1130, %vm1131
          %v1133 = vsel %vm1132, %v1125, %v1129
          %v1134 = vand.u32 2147483647, %v1124
          %vm1135 = vcmp.eq.f32.partialorder %v1134, 8.507059e+37
          %v1136 = vand.u32 %v1124, 2147483648
          %v1137 = vor.u32 1.1754944e-38, %v1136
          %v1138 = vsel %vm1135, %v1137, %v1133
          %v1139 = vmul.f32 %v1114, %v1138
          %v1140 = vmin.f32 %v1139, 1.0
          %v1141 = vmax.f32 %v1140, -1.0
          %v1142 = vmul.f32 %v681, %v681
          %v1143 = vmin.f32 16.0, %v1142
          %v1144 = vmul.f32 %v1143, 2.1237322e-06
          %v1145 = vadd.f32 %v1144, 0.00028619796
          %v1146 = vmul.f32 %v1143, %v1145
          %v1147 = vadd.f32 %v1146, 0.0036580483
          %v1148 = vmul.f32 %v1143, %v1147
          %v1149 = vadd.f32 %v1148, 0.05243302
          %v1150 = vmul.f32 %v1143, %v1149
          %v1151 = vadd.f32 %v1150, 0.18741608
          %v1152 = vmul.f32 %v1143, %v1151
          %v1153 = vadd.f32 %v1152, 1.1283791
          %v1154 = vmul.f32 %v681, %v1153
          %v1155 = vmul.f32 %v1143, 3.8918573e-05
          %v1156 = vadd.f32 %v1155, 0.001143296
          %v1157 = vmul.f32 %v1143, %v1156
          %v1158 = vadd.f32 %v1157, 0.014752088
          %v1159 = vmul.f32 %v1143, %v1158
          %v1160 = vadd.f32 %v1159, 0.112945676
          %v1161 = vmul.f32 %v1143, %v1160
          %v1162 = vadd.f32 %v1161, 0.4994258
          %v1163 = vmul.f32 %v1143, %v1162
          %v1164 = vadd.f32 %v1163, 1.0
          %v1165 = vrcp.pop %v1164
          %v1166 = vmul.f32 %v1164, %v1165
          %v1167 = vsub.f32 1.0, %v1166
          %v1168 = vmul.f32 %v1165, %v1167
          %v1169 = vadd.f32 %v1165, %v1168
          %vm1170 = vweird.f32 %v1164
          %vm1171 = vweird.f32 %v1165
          %vm1172 = vmor %vm1170, %vm1171
          %v1173 = vsel %vm1172, %v1165, %v1169
          %v1174 = vand.u32 2147483647, %v1164
          %vm1175 = vcmp.eq.f32.partialorder %v1174, 8.507059e+37
          %v1176 = vand.u32 %v1164, 2147483648
          %v1177 = vor.u32 1.1754944e-38, %v1176
          %v1178 = vsel %vm1175, %v1177, %v1173
          %v1179 = vmul.f32 %v1154, %v1178
          %v1180 = vmin.f32 %v1179, 1.0
          %v1181 = vmax.f32 %v1180, -1.0
          %v1182 = vmul.f32 %v682, %v682
          %v1183 = vmin.f32 16.0, %v1182
          %v1184 = vmul.f32 %v1183, 2.1237322e-06
          %v1185 = vadd.f32 %v1184, 0.00028619796
          %v1186 = vmul.f32 %v1183, %v1185
          %v1187 = vadd.f32 %v1186, 0.0036580483
          %v1188 = vmul.f32 %v1183, %v1187
          %v1189 = vadd.f32 %v1188, 0.05243302
          %v1190 = vmul.f32 %v1183, %v1189
          %v1191 = vadd.f32 %v1190, 0.18741608
          %v1192 = vmul.f32 %v1183, %v1191
          %v1193 = vadd.f32 %v1192, 1.1283791
          %v1194 = vmul.f32 %v682, %v1193
          %v1195 = vmul.f32 %v1183, 3.8918573e-05
          %v1196 = vadd.f32 %v1195, 0.001143296
          %v1197 = vmul.f32 %v1183, %v1196
          %v1198 = vadd.f32 %v1197, 0.014752088
          %v1199 = vmul.f32 %v1183, %v1198
          %v1200 = vadd.f32 %v1199, 0.112945676
          %v1201 = vmul.f32 %v1183, %v1200
          %v1202 = vadd.f32 %v1201, 0.4994258
          %v1203 = vmul.f32 %v1183, %v1202
          %v1204 = vadd.f32 %v1203, 1.0
          %v1205 = vrcp.pop %v1204
          %v1206 = vmul.f32 %v1204, %v1205
          %v1207 = vsub.f32 1.0, %v1206
          %v1208 = vmul.f32 %v1205, %v1207
          %v1209 = vadd.f32 %v1205, %v1208
          %vm1210 = vweird.f32 %v1204
          %vm1211 = vweird.f32 %v1205
          %vm1212 = vmor %vm1210, %vm1211
          %v1213 = vsel %vm1212, %v1205, %v1209
          %v1214 = vand.u32 2147483647, %v1204
          %vm1215 = vcmp.eq.f32.partialorder %v1214, 8.507059e+37
          %v1216 = vand.u32 %v1204, 2147483648
          %v1217 = vor.u32 1.1754944e-38, %v1216
          %v1218 = vsel %vm1215, %v1217, %v1213
          %v1219 = vmul.f32 %v1194, %v1218
          %v1220 = vmin.f32 %v1219, 1.0
          %v1221 = vmax.f32 %v1220, -1.0
          %v1222 = vmul.f32 %v683, %v683
          %v1223 = vmin.f32 16.0, %v1222
          %v1224 = vmul.f32 %v1223, 2.1237322e-06
          %v1225 = vadd.f32 %v1224, 0.00028619796
          %v1226 = vmul.f32 %v1223, %v1225
          %v1227 = vadd.f32 %v1226, 0.0036580483
          %v1228 = vmul.f32 %v1223, %v1227
          %v1229 = vadd.f32 %v1228, 0.05243302
          %v1230 = vmul.f32 %v1223, %v1229
          %v1231 = vadd.f32 %v1230, 0.18741608
          %v1232 = vmul.f32 %v1223, %v1231
          %v1233 = vadd.f32 %v1232, 1.1283791
          %v1234 = vmul.f32 %v683, %v1233
          %v1235 = vmul.f32 %v1223, 3.8918573e-05
          %v1236 = vadd.f32 %v1235, 0.001143296
          %v1237 = vmul.f32 %v1223, %v1236
          %v1238 = vadd.f32 %v1237, 0.014752088
          %v1239 = vmul.f32 %v1223, %v1238
          %v1240 = vadd.f32 %v1239, 0.112945676
          %v1241 = vmul.f32 %v1223, %v1240
          %v1242 = vadd.f32 %v1241, 0.4994258
          %v1243 = vmul.f32 %v1223, %v1242
          %v1244 = vadd.f32 %v1243, 1.0
          %v1245 = vrcp.pop %v1244
          %v1246 = vmul.f32 %v1244, %v1245
          %v1247 = vsub.f32 1.0, %v1246
          %v1248 = vmul.f32 %v1245, %v1247
          %v1249 = vadd.f32 %v1245, %v1248
          %vm1250 = vweird.f32 %v1244
          %vm1251 = vweird.f32 %v1245
          %vm1252 = vmor %vm1250, %vm1251
          %v1253 = vsel %vm1252, %v1245, %v1249
          %v1254 = vand.u32 2147483647, %v1244
          %vm1255 = vcmp.eq.f32.partialorder %v1254, 8.507059e+37
          %v1256 = vand.u32 %v1244, 2147483648
          %v1257 = vor.u32 1.1754944e-38, %v1256
          %v1258 = vsel %vm1255, %v1257, %v1253
          %v1259 = vmul.f32 %v1234, %v1258
          %v1260 = vmin.f32 %v1259, 1.0
          %v1261 = vmax.f32 %v1260, -1.0
          %v1262 = vmul.f32 %v684, %v684
          %v1263 = vmin.f32 16.0, %v1262
          %v1264 = vmul.f32 %v1263, 2.1237322e-06
          %v1265 = vadd.f32 %v1264, 0.00028619796
          %v1266 = vmul.f32 %v1263, %v1265
          %v1267 = vadd.f32 %v1266, 0.0036580483
          %v1268 = vmul.f32 %v1263, %v1267
          %v1269 = vadd.f32 %v1268, 0.05243302
          %v1270 = vmul.f32 %v1263, %v1269
          %v1271 = vadd.f32 %v1270, 0.18741608
          %v1272 = vmul.f32 %v1263, %v1271
          %v1273 = vadd.f32 %v1272, 1.1283791
          %v1274 = vmul.f32 %v684, %v1273
          %v1275 = vmul.f32 %v1263, 3.8918573e-05
          %v1276 = vadd.f32 %v1275, 0.001143296
          %v1277 = vmul.f32 %v1263, %v1276
          %v1278 = vadd.f32 %v1277, 0.014752088
          %v1279 = vmul.f32 %v1263, %v1278
          %v1280 = vadd.f32 %v1279, 0.112945676
          %v1281 = vmul.f32 %v1263, %v1280
          %v1282 = vadd.f32 %v1281, 0.4994258
          %v1283 = vmul.f32 %v1263, %v1282
          %v1284 = vadd.f32 %v1283, 1.0
          %v1285 = vrcp.pop %v1284
          %v1286 = vmul.f32 %v1284, %v1285
          %v1287 = vsub.f32 1.0, %v1286
          %v1288 = vmul.f32 %v1285, %v1287
          %v1289 = vadd.f32 %v1285, %v1288
          %vm1290 = vweird.f32 %v1284
          %vm1291 = vweird.f32 %v1285
          %vm1292 = vmor %vm1290, %vm1291
          %v1293 = vsel %vm1292, %v1285, %v1289
          %v1294 = vand.u32 2147483647, %v1284
          %vm1295 = vcmp.eq.f32.partialorder %v1294, 8.507059e+37
          %v1296 = vand.u32 %v1284, 2147483648
          %v1297 = vor.u32 1.1754944e-38, %v1296
          %v1298 = vsel %vm1295, %v1297, %v1293
          %v1299 = vmul.f32 %v1274, %v1298
          %v1300 = vmin.f32 %v1299, 1.0
          %v1301 = vmax.f32 %v1300, -1.0
          %v1302 = vmul.f32 %v685, %v685
          %v1303 = vmin.f32 16.0, %v1302
          %v1304 = vmul.f32 %v1303, 2.1237322e-06
          %v1305 = vadd.f32 %v1304, 0.00028619796
          %v1306 = vmul.f32 %v1303, %v1305
          %v1307 = vadd.f32 %v1306, 0.0036580483
          %v1308 = vmul.f32 %v1303, %v1307
          %v1309 = vadd.f32 %v1308, 0.05243302
          %v1310 = vmul.f32 %v1303, %v1309
          %v1311 = vadd.f32 %v1310, 0.18741608
          %v1312 = vmul.f32 %v1303, %v1311
          %v1313 = vadd.f32 %v1312, 1.1283791
          %v1314 = vmul.f32 %v685, %v1313
          %v1315 = vmul.f32 %v1303, 3.8918573e-05
          %v1316 = vadd.f32 %v1315, 0.001143296
          %v1317 = vmul.f32 %v1303, %v1316
          %v1318 = vadd.f32 %v1317, 0.014752088
          %v1319 = vmul.f32 %v1303, %v1318
          %v1320 = vadd.f32 %v1319, 0.112945676
          %v1321 = vmul.f32 %v1303, %v1320
          %v1322 = vadd.f32 %v1321, 0.4994258
          %v1323 = vmul.f32 %v1303, %v1322
          %v1324 = vadd.f32 %v1323, 1.0
          %v1325 = vrcp.pop %v1324
          %v1326 = vmul.f32 %v1324, %v1325
          %v1327 = vsub.f32 1.0, %v1326
          %v1328 = vmul.f32 %v1325, %v1327
          %v1329 = vadd.f32 %v1325, %v1328
          %vm1330 = vweird.f32 %v1324
          %vm1331 = vweird.f32 %v1325
          %vm1332 = vmor %vm1330, %vm1331
          %v1333 = vsel %vm1332, %v1325, %v1329
          %v1334 = vand.u32 2147483647, %v1324
          %vm1335 = vcmp.eq.f32.partialorder %v1334, 8.507059e+37
          %v1336 = vand.u32 %v1324, 2147483648
          %v1337 = vor.u32 1.1754944e-38, %v1336
          %v1338 = vsel %vm1335, %v1337, %v1333
          %v1339 = vmul.f32 %v1314, %v1338
          %v1340 = vmin.f32 %v1339, 1.0
          %v1341 = vmax.f32 %v1340, -1.0
          %v1342 = vmul.f32 %v686, %v686
          %v1343 = vmin.f32 16.0, %v1342
          %v1344 = vmul.f32 %v1343, 2.1237322e-06
          %v1345 = vadd.f32 %v1344, 0.00028619796
          %v1346 = vmul.f32 %v1343, %v1345
          %v1347 = vadd.f32 %v1346, 0.0036580483
          %v1348 = vmul.f32 %v1343, %v1347
          %v1349 = vadd.f32 %v1348, 0.05243302
          %v1350 = vmul.f32 %v1343, %v1349
          %v1351 = vadd.f32 %v1350, 0.18741608
          %v1352 = vmul.f32 %v1343, %v1351
          %v1353 = vadd.f32 %v1352, 1.1283791
          %v1354 = vmul.f32 %v686, %v1353
          %v1355 = vmul.f32 %v1343, 3.8918573e-05
          %v1356 = vadd.f32 %v1355, 0.001143296
          %v1357 = vmul.f32 %v1343, %v1356
          %v1358 = vadd.f32 %v1357, 0.014752088
          %v1359 = vmul.f32 %v1343, %v1358
          %v1360 = vadd.f32 %v1359, 0.112945676
          %v1361 = vmul.f32 %v1343, %v1360
          %v1362 = vadd.f32 %v1361, 0.4994258
          %v1363 = vmul.f32 %v1343, %v1362
          %v1364 = vadd.f32 %v1363, 1.0
          %v1365 = vrcp.pop %v1364
          %v1366 = vmul.f32 %v1364, %v1365
          %v1367 = vsub.f32 1.0, %v1366
          %v1368 = vmul.f32 %v1365, %v1367
          %v1369 = vadd.f32 %v1365, %v1368
          %vm1370 = vweird.f32 %v1364
          %vm1371 = vweird.f32 %v1365
          %vm1372 = vmor %vm1370, %vm1371
          %v1373 = vsel %vm1372, %v1365, %v1369
          %v1374 = vand.u32 2147483647, %v1364
          %vm1375 = vcmp.eq.f32.partialorder %v1374, 8.507059e+37
          %v1376 = vand.u32 %v1364, 2147483648
          %v1377 = vor.u32 1.1754944e-38, %v1376
          %v1378 = vsel %vm1375, %v1377, %v1373
          %v1379 = vmul.f32 %v1354, %v1378
          %v1380 = vmin.f32 %v1379, 1.0
          %v1381 = vmax.f32 %v1380, -1.0
          %v1382 = vmul.f32 %v687, %v687
          %v1383 = vmin.f32 16.0, %v1382
          %v1384 = vmul.f32 %v1383, 2.1237322e-06
          %v1385 = vadd.f32 %v1384, 0.00028619796
          %v1386 = vmul.f32 %v1383, %v1385
          %v1387 = vadd.f32 %v1386, 0.0036580483
          %v1388 = vmul.f32 %v1383, %v1387
          %v1389 = vadd.f32 %v1388, 0.05243302
          %v1390 = vmul.f32 %v1383, %v1389
          %v1391 = vadd.f32 %v1390, 0.18741608
          %v1392 = vmul.f32 %v1383, %v1391
          %v1393 = vadd.f32 %v1392, 1.1283791
          %v1394 = vmul.f32 %v687, %v1393
          %v1395 = vmul.f32 %v1383, 3.8918573e-05
          %v1396 = vadd.f32 %v1395, 0.001143296
          %v1397 = vmul.f32 %v1383, %v1396
          %v1398 = vadd.f32 %v1397, 0.014752088
          %v1399 = vmul.f32 %v1383, %v1398
          %v1400 = vadd.f32 %v1399, 0.112945676
          %v1401 = vmul.f32 %v1383, %v1400
          %v1402 = vadd.f32 %v1401, 0.4994258
          %v1403 = vmul.f32 %v1383, %v1402
          %v1404 = vadd.f32 %v1403, 1.0
          %v1405 = vrcp.pop %v1404
          %v1406 = vmul.f32 %v1404, %v1405
          %v1407 = vsub.f32 1.0, %v1406
          %v1408 = vmul.f32 %v1405, %v1407
          %v1409 = vadd.f32 %v1405, %v1408
          %vm1410 = vweird.f32 %v1404
          %vm1411 = vweird.f32 %v1405
          %vm1412 = vmor %vm1410, %vm1411
          %v1413 = vsel %vm1412, %v1405, %v1409
          %v1414 = vand.u32 2147483647, %v1404
          %vm1415 = vcmp.eq.f32.partialorder %v1414, 8.507059e+37
          %v1416 = vand.u32 %v1404, 2147483648
          %v1417 = vor.u32 1.1754944e-38, %v1416
          %v1418 = vsel %vm1415, %v1417, %v1413
          %v1419 = vmul.f32 %v1394, %v1418
          %v1420 = vmin.f32 %v1419, 1.0
          %v1421 = vmax.f32 %v1420, -1.0
          %v1422 = vmul.f32 %v688, %v688
          %v1423 = vmin.f32 16.0, %v1422
          %v1424 = vmul.f32 %v1423, 2.1237322e-06
          %v1425 = vadd.f32 %v1424, 0.00028619796
          %v1426 = vmul.f32 %v1423, %v1425
          %v1427 = vadd.f32 %v1426, 0.0036580483
          %v1428 = vmul.f32 %v1423, %v1427
          %v1429 = vadd.f32 %v1428, 0.05243302
          %v1430 = vmul.f32 %v1423, %v1429
          %v1431 = vadd.f32 %v1430, 0.18741608
          %v1432 = vmul.f32 %v1423, %v1431
          %v1433 = vadd.f32 %v1432, 1.1283791
          %v1434 = vmul.f32 %v688, %v1433
          %v1435 = vmul.f32 %v1423, 3.8918573e-05
          %v1436 = vadd.f32 %v1435, 0.001143296
          %v1437 = vmul.f32 %v1423, %v1436
          %v1438 = vadd.f32 %v1437, 0.014752088
          %v1439 = vmul.f32 %v1423, %v1438
          %v1440 = vadd.f32 %v1439, 0.112945676
          %v1441 = vmul.f32 %v1423, %v1440
          %v1442 = vadd.f32 %v1441, 0.4994258
          %v1443 = vmul.f32 %v1423, %v1442
          %v1444 = vadd.f32 %v1443, 1.0
          %v1445 = vrcp.pop %v1444
          %v1446 = vmul.f32 %v1444, %v1445
          %v1447 = vsub.f32 1.0, %v1446
          %v1448 = vmul.f32 %v1445, %v1447
          %v1449 = vadd.f32 %v1445, %v1448
          %vm1450 = vweird.f32 %v1444
          %vm1451 = vweird.f32 %v1445
          %vm1452 = vmor %vm1450, %vm1451
          %v1453 = vsel %vm1452, %v1445, %v1449
          %v1454 = vand.u32 2147483647, %v1444
          %vm1455 = vcmp.eq.f32.partialorder %v1454, 8.507059e+37
          %v1456 = vand.u32 %v1444, 2147483648
          %v1457 = vor.u32 1.1754944e-38, %v1456
          %v1458 = vsel %vm1455, %v1457, %v1453
          %v1459 = vmul.f32 %v1434, %v1458
          %v1460 = vmin.f32 %v1459, 1.0
          %v1461 = vmax.f32 %v1460, -1.0
          %v1462 = vmul.f32 %v689, %v689
          %v1463 = vmin.f32 16.0, %v1462
          %v1464 = vmul.f32 %v1463, 2.1237322e-06
          %v1465 = vadd.f32 %v1464, 0.00028619796
          %v1466 = vmul.f32 %v1463, %v1465
          %v1467 = vadd.f32 %v1466, 0.0036580483
          %v1468 = vmul.f32 %v1463, %v1467
          %v1469 = vadd.f32 %v1468, 0.05243302
          %v1470 = vmul.f32 %v1463, %v1469
          %v1471 = vadd.f32 %v1470, 0.18741608
          %v1472 = vmul.f32 %v1463, %v1471
          %v1473 = vadd.f32 %v1472, 1.1283791
          %v1474 = vmul.f32 %v689, %v1473
          %v1475 = vmul.f32 %v1463, 3.8918573e-05
          %v1476 = vadd.f32 %v1475, 0.001143296
          %v1477 = vmul.f32 %v1463, %v1476
          %v1478 = vadd.f32 %v1477, 0.014752088
          %v1479 = vmul.f32 %v1463, %v1478
          %v1480 = vadd.f32 %v1479, 0.112945676
          %v1481 = vmul.f32 %v1463, %v1480
          %v1482 = vadd.f32 %v1481, 0.4994258
          %v1483 = vmul.f32 %v1463, %v1482
          %v1484 = vadd.f32 %v1483, 1.0
          %v1485 = vrcp.pop %v1484
          %v1486 = vmul.f32 %v1484, %v1485
          %v1487 = vsub.f32 1.0, %v1486
          %v1488 = vmul.f32 %v1485, %v1487
          %v1489 = vadd.f32 %v1485, %v1488
          %vm1490 = vweird.f32 %v1484
          %vm1491 = vweird.f32 %v1485
          %vm1492 = vmor %vm1490, %vm1491
          %v1493 = vsel %vm1492, %v1485, %v1489
          %v1494 = vand.u32 2147483647, %v1484
          %vm1495 = vcmp.eq.f32.partialorder %v1494, 8.507059e+37
          %v1496 = vand.u32 %v1484, 2147483648
          %v1497 = vor.u32 1.1754944e-38, %v1496
          %v1498 = vsel %vm1495, %v1497, %v1493
          %v1499 = vmul.f32 %v1474, %v1498
          %v1500 = vmin.f32 %v1499, 1.0
          %v1501 = vmax.f32 %v1500, -1.0
          %v1502 = vmul.f32 %v690, %v690
          %v1503 = vmin.f32 16.0, %v1502
          %v1504 = vmul.f32 %v1503, 2.1237322e-06
          %v1505 = vadd.f32 %v1504, 0.00028619796
          %v1506 = vmul.f32 %v1503, %v1505
          %v1507 = vadd.f32 %v1506, 0.0036580483
          %v1508 = vmul.f32 %v1503, %v1507
          %v1509 = vadd.f32 %v1508, 0.05243302
          %v1510 = vmul.f32 %v1503, %v1509
          %v1511 = vadd.f32 %v1510, 0.18741608
          %v1512 = vmul.f32 %v1503, %v1511
          %v1513 = vadd.f32 %v1512, 1.1283791
          %v1514 = vmul.f32 %v690, %v1513
          %v1515 = vmul.f32 %v1503, 3.8918573e-05
          %v1516 = vadd.f32 %v1515, 0.001143296
          %v1517 = vmul.f32 %v1503, %v1516
          %v1518 = vadd.f32 %v1517, 0.014752088
          %v1519 = vmul.f32 %v1503, %v1518
          %v1520 = vadd.f32 %v1519, 0.112945676
          %v1521 = vmul.f32 %v1503, %v1520
          %v1522 = vadd.f32 %v1521, 0.4994258
          %v1523 = vmul.f32 %v1503, %v1522
          %v1524 = vadd.f32 %v1523, 1.0
          %v1525 = vrcp.pop %v1524
          %v1526 = vmul.f32 %v1524, %v1525
          %v1527 = vsub.f32 1.0, %v1526
          %v1528 = vmul.f32 %v1525, %v1527
          %v1529 = vadd.f32 %v1525, %v1528
          %vm1530 = vweird.f32 %v1524
          %vm1531 = vweird.f32 %v1525
          %vm1532 = vmor %vm1530, %vm1531
          %v1533 = vsel %vm1532, %v1525, %v1529
          %v1534 = vand.u32 2147483647, %v1524
          %vm1535 = vcmp.eq.f32.partialorder %v1534, 8.507059e+37
          %v1536 = vand.u32 %v1524, 2147483648
          %v1537 = vor.u32 1.1754944e-38, %v1536
          %v1538 = vsel %vm1535, %v1537, %v1533
          %v1539 = vmul.f32 %v1514, %v1538
          %v1540 = vmin.f32 %v1539, 1.0
          %v1541 = vmax.f32 %v1540, -1.0
          %v1542 = vmul.f32 %v691, %v691
          %v1543 = vmin.f32 16.0, %v1542
          %v1544 = vmul.f32 %v1543, 2.1237322e-06
          %v1545 = vadd.f32 %v1544, 0.00028619796
          %v1546 = vmul.f32 %v1543, %v1545
          %v1547 = vadd.f32 %v1546, 0.0036580483
          %v1548 = vmul.f32 %v1543, %v1547
          %v1549 = vadd.f32 %v1548, 0.05243302
          %v1550 = vmul.f32 %v1543, %v1549
          %v1551 = vadd.f32 %v1550, 0.18741608
          %v1552 = vmul.f32 %v1543, %v1551
          %v1553 = vadd.f32 %v1552, 1.1283791
          %v1554 = vmul.f32 %v691, %v1553
          %v1555 = vmul.f32 %v1543, 3.8918573e-05
          %v1556 = vadd.f32 %v1555, 0.001143296
          %v1557 = vmul.f32 %v1543, %v1556
          %v1558 = vadd.f32 %v1557, 0.014752088
          %v1559 = vmul.f32 %v1543, %v1558
          %v1560 = vadd.f32 %v1559, 0.112945676
          %v1561 = vmul.f32 %v1543, %v1560
          %v1562 = vadd.f32 %v1561, 0.4994258
          %v1563 = vmul.f32 %v1543, %v1562
          %v1564 = vadd.f32 %v1563, 1.0
          %v1565 = vrcp.pop %v1564
          %v1566 = vmul.f32 %v1564, %v1565
          %v1567 = vsub.f32 1.0, %v1566
          %v1568 = vmul.f32 %v1565, %v1567
          %v1569 = vadd.f32 %v1565, %v1568
          %vm1570 = vweird.f32 %v1564
          %vm1571 = vweird.f32 %v1565
          %vm1572 = vmor %vm1570, %vm1571
          %v1573 = vsel %vm1572, %v1565, %v1569
          %v1574 = vand.u32 2147483647, %v1564
          %vm1575 = vcmp.eq.f32.partialorder %v1574, 8.507059e+37
          %v1576 = vand.u32 %v1564, 2147483648
          %v1577 = vor.u32 1.1754944e-38, %v1576
          %v1578 = vsel %vm1575, %v1577, %v1573
          %v1579 = vmul.f32 %v1554, %v1578
          %v1580 = vmin.f32 %v1579, 1.0
          %v1581 = vmax.f32 %v1580, -1.0
          %v1582 = vmul.f32 %v692, %v692
          %v1583 = vmin.f32 16.0, %v1582
          %v1584 = vmul.f32 %v1583, 2.1237322e-06
          %v1585 = vadd.f32 %v1584, 0.00028619796
          %v1586 = vmul.f32 %v1583, %v1585
          %v1587 = vadd.f32 %v1586, 0.0036580483
          %v1588 = vmul.f32 %v1583, %v1587
          %v1589 = vadd.f32 %v1588, 0.05243302
          %v1590 = vmul.f32 %v1583, %v1589
          %v1591 = vadd.f32 %v1590, 0.18741608
          %v1592 = vmul.f32 %v1583, %v1591
          %v1593 = vadd.f32 %v1592, 1.1283791
          %v1594 = vmul.f32 %v692, %v1593
          %v1595 = vmul.f32 %v1583, 3.8918573e-05
          %v1596 = vadd.f32 %v1595, 0.001143296
          %v1597 = vmul.f32 %v1583, %v1596
          %v1598 = vadd.f32 %v1597, 0.014752088
          %v1599 = vmul.f32 %v1583, %v1598
          %v1600 = vadd.f32 %v1599, 0.112945676
          %v1601 = vmul.f32 %v1583, %v1600
          %v1602 = vadd.f32 %v1601, 0.4994258
          %v1603 = vmul.f32 %v1583, %v1602
          %v1604 = vadd.f32 %v1603, 1.0
          %v1605 = vrcp.pop %v1604
          %v1606 = vmul.f32 %v1604, %v1605
          %v1607 = vsub.f32 1.0, %v1606
          %v1608 = vmul.f32 %v1605, %v1607
          %v1609 = vadd.f32 %v1605, %v1608
          %vm1610 = vweird.f32 %v1604
          %vm1611 = vweird.f32 %v1605
          %vm1612 = vmor %vm1610, %vm1611
          %v1613 = vsel %vm1612, %v1605, %v1609
          %v1614 = vand.u32 2147483647, %v1604
          %vm1615 = vcmp.eq.f32.partialorder %v1614, 8.507059e+37
          %v1616 = vand.u32 %v1604, 2147483648
          %v1617 = vor.u32 1.1754944e-38, %v1616
          %v1618 = vsel %vm1615, %v1617, %v1613
          %v1619 = vmul.f32 %v1594, %v1618
          %v1620 = vmin.f32 %v1619, 1.0
          %v1621 = vmax.f32 %v1620, -1.0
          %v1622 = vmul.f32 %v693, %v693
          %v1623 = vmin.f32 16.0, %v1622
          %v1624 = vmul.f32 %v1623, 2.1237322e-06
          %v1625 = vadd.f32 %v1624, 0.00028619796
          %v1626 = vmul.f32 %v1623, %v1625
          %v1627 = vadd.f32 %v1626, 0.0036580483
          %v1628 = vmul.f32 %v1623, %v1627
          %v1629 = vadd.f32 %v1628, 0.05243302
          %v1630 = vmul.f32 %v1623, %v1629
          %v1631 = vadd.f32 %v1630, 0.18741608
          %v1632 = vmul.f32 %v1623, %v1631
          %v1633 = vadd.f32 %v1632, 1.1283791
          %v1634 = vmul.f32 %v693, %v1633
          %v1635 = vmul.f32 %v1623, 3.8918573e-05
          %v1636 = vadd.f32 %v1635, 0.001143296
          %v1637 = vmul.f32 %v1623, %v1636
          %v1638 = vadd.f32 %v1637, 0.014752088
          %v1639 = vmul.f32 %v1623, %v1638
          %v1640 = vadd.f32 %v1639, 0.112945676
          %v1641 = vmul.f32 %v1623, %v1640
          %v1642 = vadd.f32 %v1641, 0.4994258
          %v1643 = vmul.f32 %v1623, %v1642
          %v1644 = vadd.f32 %v1643, 1.0
          %v1645 = vrcp.pop %v1644
          %v1646 = vmul.f32 %v1644, %v1645
          %v1647 = vsub.f32 1.0, %v1646
          %v1648 = vmul.f32 %v1645, %v1647
          %v1649 = vadd.f32 %v1645, %v1648
          %vm1650 = vweird.f32 %v1644
          %vm1651 = vweird.f32 %v1645
          %vm1652 = vmor %vm1650, %vm1651
          %v1653 = vsel %vm1652, %v1645, %v1649
          %v1654 = vand.u32 2147483647, %v1644
          %vm1655 = vcmp.eq.f32.partialorder %v1654, 8.507059e+37
          %v1656 = vand.u32 %v1644, 2147483648
          %v1657 = vor.u32 1.1754944e-38, %v1656
          %v1658 = vsel %vm1655, %v1657, %v1653
          %v1659 = vmul.f32 %v1634, %v1658
          %v1660 = vmin.f32 %v1659, 1.0
          %v1661 = vmax.f32 %v1660, -1.0
          %v1662 = vmul.f32 %v694, %v694
          %v1663 = vmin.f32 16.0, %v1662
          %v1664 = vmul.f32 %v1663, 2.1237322e-06
          %v1665 = vadd.f32 %v1664, 0.00028619796
          %v1666 = vmul.f32 %v1663, %v1665
          %v1667 = vadd.f32 %v1666, 0.0036580483
          %v1668 = vmul.f32 %v1663, %v1667
          %v1669 = vadd.f32 %v1668, 0.05243302
          %v1670 = vmul.f32 %v1663, %v1669
          %v1671 = vadd.f32 %v1670, 0.18741608
          %v1672 = vmul.f32 %v1663, %v1671
          %v1673 = vadd.f32 %v1672, 1.1283791
          %v1674 = vmul.f32 %v694, %v1673
          %v1675 = vmul.f32 %v1663, 3.8918573e-05
          %v1676 = vadd.f32 %v1675, 0.001143296
          %v1677 = vmul.f32 %v1663, %v1676
          %v1678 = vadd.f32 %v1677, 0.014752088
          %v1679 = vmul.f32 %v1663, %v1678
          %v1680 = vadd.f32 %v1679, 0.112945676
          %v1681 = vmul.f32 %v1663, %v1680
          %v1682 = vadd.f32 %v1681, 0.4994258
          %v1683 = vmul.f32 %v1663, %v1682
          %v1684 = vadd.f32 %v1683, 1.0
          %v1685 = vrcp.pop %v1684
          %v1686 = vmul.f32 %v1684, %v1685
          %v1687 = vsub.f32 1.0, %v1686
          %v1688 = vmul.f32 %v1685, %v1687
          %v1689 = vadd.f32 %v1685, %v1688
          %vm1690 = vweird.f32 %v1684
          %vm1691 = vweird.f32 %v1685
          %vm1692 = vmor %vm1690, %vm1691
          %v1693 = vsel %vm1692, %v1685, %v1689
          %v1694 = vand.u32 2147483647, %v1684
          %vm1695 = vcmp.eq.f32.partialorder %v1694, 8.507059e+37
          %v1696 = vand.u32 %v1684, 2147483648
          %v1697 = vor.u32 1.1754944e-38, %v1696
          %v1698 = vsel %vm1695, %v1697, %v1693
          %v1699 = vmul.f32 %v1674, %v1698
          %v1700 = vmin.f32 %v1699, 1.0
          %v1701 = vmax.f32 %v1700, -1.0
          %v1702 = vmul.f32 %v695, %v695
          %v1703 = vmin.f32 16.0, %v1702
          %v1704 = vmul.f32 %v1703, 2.1237322e-06
          %v1705 = vadd.f32 %v1704, 0.00028619796
          %v1706 = vmul.f32 %v1703, %v1705
          %v1707 = vadd.f32 %v1706, 0.0036580483
          %v1708 = vmul.f32 %v1703, %v1707
          %v1709 = vadd.f32 %v1708, 0.05243302
          %v1710 = vmul.f32 %v1703, %v1709
          %v1711 = vadd.f32 %v1710, 0.18741608
          %v1712 = vmul.f32 %v1703, %v1711
          %v1713 = vadd.f32 %v1712, 1.1283791
          %v1714 = vmul.f32 %v695, %v1713
          %v1715 = vmul.f32 %v1703, 3.8918573e-05
          %v1716 = vadd.f32 %v1715, 0.001143296
          %v1717 = vmul.f32 %v1703, %v1716
          %v1718 = vadd.f32 %v1717, 0.014752088
          %v1719 = vmul.f32 %v1703, %v1718
          %v1720 = vadd.f32 %v1719, 0.112945676
          %v1721 = vmul.f32 %v1703, %v1720
          %v1722 = vadd.f32 %v1721, 0.4994258
          %v1723 = vmul.f32 %v1703, %v1722
          %v1724 = vadd.f32 %v1723, 1.0
          %v1725 = vrcp.pop %v1724
          %v1726 = vmul.f32 %v1724, %v1725
          %v1727 = vsub.f32 1.0, %v1726
          %v1728 = vmul.f32 %v1725, %v1727
          %v1729 = vadd.f32 %v1725, %v1728
          %vm1730 = vweird.f32 %v1724
          %vm1731 = vweird.f32 %v1725
          %vm1732 = vmor %vm1730, %vm1731
          %v1733 = vsel %vm1732, %v1725, %v1729
          %v1734 = vand.u32 2147483647, %v1724
          %vm1735 = vcmp.eq.f32.partialorder %v1734, 8.507059e+37
          %v1736 = vand.u32 %v1724, 2147483648
          %v1737 = vor.u32 1.1754944e-38, %v1736
          %v1738 = vsel %vm1735, %v1737, %v1733
          %v1739 = vmul.f32 %v1714, %v1738
          %v1740 = vmin.f32 %v1739, 1.0
          %v1741 = vmax.f32 %v1740, -1.0
          %v1742 = vmul.f32 %v696, %v696
          %v1743 = vmin.f32 16.0, %v1742
          %v1744 = vmul.f32 %v1743, 2.1237322e-06
          %v1745 = vadd.f32 %v1744, 0.00028619796
          %v1746 = vmul.f32 %v1743, %v1745
          %v1747 = vadd.f32 %v1746, 0.0036580483
          %v1748 = vmul.f32 %v1743, %v1747
          %v1749 = vadd.f32 %v1748, 0.05243302
          %v1750 = vmul.f32 %v1743, %v1749
          %v1751 = vadd.f32 %v1750, 0.18741608
          %v1752 = vmul.f32 %v1743, %v1751
          %v1753 = vadd.f32 %v1752, 1.1283791
          %v1754 = vmul.f32 %v696, %v1753
          %v1755 = vmul.f32 %v1743, 3.8918573e-05
          %v1756 = vadd.f32 %v1755, 0.001143296
          %v1757 = vmul.f32 %v1743, %v1756
          %v1758 = vadd.f32 %v1757, 0.014752088
          %v1759 = vmul.f32 %v1743, %v1758
          %v1760 = vadd.f32 %v1759, 0.112945676
          %v1761 = vmul.f32 %v1743, %v1760
          %v1762 = vadd.f32 %v1761, 0.4994258
          %v1763 = vmul.f32 %v1743, %v1762
          %v1764 = vadd.f32 %v1763, 1.0
          %v1765 = vrcp.pop %v1764
          %v1766 = vmul.f32 %v1764, %v1765
          %v1767 = vsub.f32 1.0, %v1766
          %v1768 = vmul.f32 %v1765, %v1767
          %v1769 = vadd.f32 %v1765, %v1768
          %vm1770 = vweird.f32 %v1764
          %vm1771 = vweird.f32 %v1765
          %vm1772 = vmor %vm1770, %vm1771
          %v1773 = vsel %vm1772, %v1765, %v1769
          %v1774 = vand.u32 2147483647, %v1764
          %vm1775 = vcmp.eq.f32.partialorder %v1774, 8.507059e+37
          %v1776 = vand.u32 %v1764, 2147483648
          %v1777 = vor.u32 1.1754944e-38, %v1776
          %v1778 = vsel %vm1775, %v1777, %v1773
          %v1779 = vmul.f32 %v1754, %v1778
          %v1780 = vmin.f32 %v1779, 1.0
          %v1781 = vmax.f32 %v1780, -1.0
          %v1782 = vmul.f32 %v697, %v697
          %v1783 = vmin.f32 16.0, %v1782
          %v1784 = vmul.f32 %v1783, 2.1237322e-06
          %v1785 = vadd.f32 %v1784, 0.00028619796
          %v1786 = vmul.f32 %v1783, %v1785
          %v1787 = vadd.f32 %v1786, 0.0036580483
          %v1788 = vmul.f32 %v1783, %v1787
          %v1789 = vadd.f32 %v1788, 0.05243302
          %v1790 = vmul.f32 %v1783, %v1789
          %v1791 = vadd.f32 %v1790, 0.18741608
          %v1792 = vmul.f32 %v1783, %v1791
          %v1793 = vadd.f32 %v1792, 1.1283791
          %v1794 = vmul.f32 %v697, %v1793
          %v1795 = vmul.f32 %v1783, 3.8918573e-05
          %v1796 = vadd.f32 %v1795, 0.001143296
          %v1797 = vmul.f32 %v1783, %v1796
          %v1798 = vadd.f32 %v1797, 0.014752088
          %v1799 = vmul.f32 %v1783, %v1798
          %v1800 = vadd.f32 %v1799, 0.112945676
          %v1801 = vmul.f32 %v1783, %v1800
          %v1802 = vadd.f32 %v1801, 0.4994258
          %v1803 = vmul.f32 %v1783, %v1802
          %v1804 = vadd.f32 %v1803, 1.0
          %v1805 = vrcp.pop %v1804
          %v1806 = vmul.f32 %v1804, %v1805
          %v1807 = vsub.f32 1.0, %v1806
          %v1808 = vmul.f32 %v1805, %v1807
          %v1809 = vadd.f32 %v1805, %v1808
          %vm1810 = vweird.f32 %v1804
          %vm1811 = vweird.f32 %v1805
          %vm1812 = vmor %vm1810, %vm1811
          %v1813 = vsel %vm1812, %v1805, %v1809
          %v1814 = vand.u32 2147483647, %v1804
          %vm1815 = vcmp.eq.f32.partialorder %v1814, 8.507059e+37
          %v1816 = vand.u32 %v1804, 2147483648
          %v1817 = vor.u32 1.1754944e-38, %v1816
          %v1818 = vsel %vm1815, %v1817, %v1813
          %v1819 = vmul.f32 %v1794, %v1818
          %v1820 = vmin.f32 %v1819, 1.0
          %v1821 = vmax.f32 %v1820, -1.0
          %v1822 = vmul.f32 %v698, %v698
          %v1823 = vmin.f32 16.0, %v1822
          %v1824 = vmul.f32 %v1823, 2.1237322e-06
          %v1825 = vadd.f32 %v1824, 0.00028619796
          %v1826 = vmul.f32 %v1823, %v1825
          %v1827 = vadd.f32 %v1826, 0.0036580483
          %v1828 = vmul.f32 %v1823, %v1827
          %v1829 = vadd.f32 %v1828, 0.05243302
          %v1830 = vmul.f32 %v1823, %v1829
          %v1831 = vadd.f32 %v1830, 0.18741608
          %v1832 = vmul.f32 %v1823, %v1831
          %v1833 = vadd.f32 %v1832, 1.1283791
          %v1834 = vmul.f32 %v698, %v1833
          %v1835 = vmul.f32 %v1823, 3.8918573e-05
          %v1836 = vadd.f32 %v1835, 0.001143296
          %v1837 = vmul.f32 %v1823, %v1836
          %v1838 = vadd.f32 %v1837, 0.014752088
          %v1839 = vmul.f32 %v1823, %v1838
          %v1840 = vadd.f32 %v1839, 0.112945676
          %v1841 = vmul.f32 %v1823, %v1840
          %v1842 = vadd.f32 %v1841, 0.4994258
          %v1843 = vmul.f32 %v1823, %v1842
          %v1844 = vadd.f32 %v1843, 1.0
          %v1845 = vrcp.pop %v1844
          %v1846 = vmul.f32 %v1844, %v1845
          %v1847 = vsub.f32 1.0, %v1846
          %v1848 = vmul.f32 %v1845, %v1847
          %v1849 = vadd.f32 %v1845, %v1848
          %vm1850 = vweird.f32 %v1844
          %vm1851 = vweird.f32 %v1845
          %vm1852 = vmor %vm1850, %vm1851
          %v1853 = vsel %vm1852, %v1845, %v1849
          %v1854 = vand.u32 2147483647, %v1844
          %vm1855 = vcmp.eq.f32.partialorder %v1854, 8.507059e+37
          %v1856 = vand.u32 %v1844, 2147483648
          %v1857 = vor.u32 1.1754944e-38, %v1856
          %v1858 = vsel %vm1855, %v1857, %v1853
          %v1859 = vmul.f32 %v1834, %v1858
          %v1860 = vmin.f32 %v1859, 1.0
          %v1861 = vmax.f32 %v1860, -1.0
          %v1862 = vmul.f32 %v699, %v699
          %v1863 = vmin.f32 16.0, %v1862
          %v1864 = vmul.f32 %v1863, 2.1237322e-06
          %v1865 = vadd.f32 %v1864, 0.00028619796
          %v1866 = vmul.f32 %v1863, %v1865
          %v1867 = vadd.f32 %v1866, 0.0036580483
          %v1868 = vmul.f32 %v1863, %v1867
          %v1869 = vadd.f32 %v1868, 0.05243302
          %v1870 = vmul.f32 %v1863, %v1869
          %v1871 = vadd.f32 %v1870, 0.18741608
          %v1872 = vmul.f32 %v1863, %v1871
          %v1873 = vadd.f32 %v1872, 1.1283791
          %v1874 = vmul.f32 %v699, %v1873
          %v1875 = vmul.f32 %v1863, 3.8918573e-05
          %v1876 = vadd.f32 %v1875, 0.001143296
          %v1877 = vmul.f32 %v1863, %v1876
          %v1878 = vadd.f32 %v1877, 0.014752088
          %v1879 = vmul.f32 %v1863, %v1878
          %v1880 = vadd.f32 %v1879, 0.112945676
          %v1881 = vmul.f32 %v1863, %v1880
          %v1882 = vadd.f32 %v1881, 0.4994258
          %v1883 = vmul.f32 %v1863, %v1882
          %v1884 = vadd.f32 %v1883, 1.0
          %v1885 = vrcp.pop %v1884
          %v1886 = vmul.f32 %v1884, %v1885
          %v1887 = vsub.f32 1.0, %v1886
          %v1888 = vmul.f32 %v1885, %v1887
          %v1889 = vadd.f32 %v1885, %v1888
          %vm1890 = vweird.f32 %v1884
          %vm1891 = vweird.f32 %v1885
          %vm1892 = vmor %vm1890, %vm1891
          %v1893 = vsel %vm1892, %v1885, %v1889
          %v1894 = vand.u32 2147483647, %v1884
          %vm1895 = vcmp.eq.f32.partialorder %v1894, 8.507059e+37
          %v1896 = vand.u32 %v1884, 2147483648
          %v1897 = vor.u32 1.1754944e-38, %v1896
          %v1898 = vsel %vm1895, %v1897, %v1893
          %v1899 = vmul.f32 %v1874, %v1898
          %v1900 = vmin.f32 %v1899, 1.0
          %v1901 = vmax.f32 %v1900, -1.0
          %v1902 = vmul.f32 %v700, %v700
          %v1903 = vmin.f32 16.0, %v1902
          %v1904 = vmul.f32 %v1903, 2.1237322e-06
          %v1905 = vadd.f32 %v1904, 0.00028619796
          %v1906 = vmul.f32 %v1903, %v1905
          %v1907 = vadd.f32 %v1906, 0.0036580483
          %v1908 = vmul.f32 %v1903, %v1907
          %v1909 = vadd.f32 %v1908, 0.05243302
          %v1910 = vmul.f32 %v1903, %v1909
          %v1911 = vadd.f32 %v1910, 0.18741608
          %v1912 = vmul.f32 %v1903, %v1911
          %v1913 = vadd.f32 %v1912, 1.1283791
          %v1914 = vmul.f32 %v700, %v1913
          %v1915 = vmul.f32 %v1903, 3.8918573e-05
          %v1916 = vadd.f32 %v1915, 0.001143296
          %v1917 = vmul.f32 %v1903, %v1916
          %v1918 = vadd.f32 %v1917, 0.014752088
          %v1919 = vmul.f32 %v1903, %v1918
          %v1920 = vadd.f32 %v1919, 0.112945676
          %v1921 = vmul.f32 %v1903, %v1920
          %v1922 = vadd.f32 %v1921, 0.4994258
          %v1923 = vmul.f32 %v1903, %v1922
          %v1924 = vadd.f32 %v1923, 1.0
          %v1925 = vrcp.pop %v1924
          %v1926 = vmul.f32 %v1924, %v1925
          %v1927 = vsub.f32 1.0, %v1926
          %v1928 = vmul.f32 %v1925, %v1927
          %v1929 = vadd.f32 %v1925, %v1928
          %vm1930 = vweird.f32 %v1924
          %vm1931 = vweird.f32 %v1925
          %vm1932 = vmor %vm1930, %vm1931
          %v1933 = vsel %vm1932, %v1925, %v1929
          %v1934 = vand.u32 2147483647, %v1924
          %vm1935 = vcmp.eq.f32.partialorder %v1934, 8.507059e+37
          %v1936 = vand.u32 %v1924, 2147483648
          %v1937 = vor.u32 1.1754944e-38, %v1936
          %v1938 = vsel %vm1935, %v1937, %v1933
          %v1939 = vmul.f32 %v1914, %v1938
          %v1940 = vmin.f32 %v1939, 1.0
          %v1941 = vmax.f32 %v1940, -1.0
          %v1942 = vmul.f32 %v701, %v701
          %v1943 = vmin.f32 16.0, %v1942
          %v1944 = vmul.f32 %v1943, 2.1237322e-06
          %v1945 = vadd.f32 %v1944, 0.00028619796
          %v1946 = vmul.f32 %v1943, %v1945
          %v1947 = vadd.f32 %v1946, 0.0036580483
          %v1948 = vmul.f32 %v1943, %v1947
          %v1949 = vadd.f32 %v1948, 0.05243302
          %v1950 = vmul.f32 %v1943, %v1949
          %v1951 = vadd.f32 %v1950, 0.18741608
          %v1952 = vmul.f32 %v1943, %v1951
          %v1953 = vadd.f32 %v1952, 1.1283791
          %v1954 = vmul.f32 %v701, %v1953
          %v1955 = vmul.f32 %v1943, 3.8918573e-05
          %v1956 = vadd.f32 %v1955, 0.001143296
          %v1957 = vmul.f32 %v1943, %v1956
          %v1958 = vadd.f32 %v1957, 0.014752088
          %v1959 = vmul.f32 %v1943, %v1958
          %v1960 = vadd.f32 %v1959, 0.112945676
          %v1961 = vmul.f32 %v1943, %v1960
          %v1962 = vadd.f32 %v1961, 0.4994258
          %v1963 = vmul.f32 %v1943, %v1962
          %v1964 = vadd.f32 %v1963, 1.0
          %v1965 = vrcp.pop %v1964
          %v1966 = vmul.f32 %v1964, %v1965
          %v1967 = vsub.f32 1.0, %v1966
          %v1968 = vmul.f32 %v1965, %v1967
          %v1969 = vadd.f32 %v1965, %v1968
          %vm1970 = vweird.f32 %v1964
          %vm1971 = vweird.f32 %v1965
          %vm1972 = vmor %vm1970, %vm1971
          %v1973 = vsel %vm1972, %v1965, %v1969
          %v1974 = vand.u32 2147483647, %v1964
          %vm1975 = vcmp.eq.f32.partialorder %v1974, 8.507059e+37
          %v1976 = vand.u32 %v1964, 2147483648
          %v1977 = vor.u32 1.1754944e-38, %v1976
          %v1978 = vsel %vm1975, %v1977, %v1973
          %v1979 = vmul.f32 %v1954, %v1978
          %v1980 = vmin.f32 %v1979, 1.0
          %v1981 = vmax.f32 %v1980, -1.0
          %v1982 = vadd.f32 %v741, 1.0
          %v1983 = vadd.f32 %v781, 1.0
          %v1984 = vadd.f32 %v821, 1.0
          %v1985 = vadd.f32 %v861, 1.0
          %v1986 = vadd.f32 %v901, 1.0
          %v1987 = vadd.f32 %v941, 1.0
          %v1988 = vadd.f32 %v981, 1.0
          %v1989 = vadd.f32 %v1021, 1.0
          %v1990 = vadd.f32 %v1061, 1.0
          %v1991 = vadd.f32 %v1101, 1.0
          %v1992 = vadd.f32 %v1141, 1.0
          %v1993 = vadd.f32 %v1181, 1.0
          %v1994 = vadd.f32 %v1221, 1.0
          %v1995 = vadd.f32 %v1261, 1.0
          %v1996 = vadd.f32 %v1301, 1.0
          %v1997 = vadd.f32 %v1341, 1.0
          %v1998 = vadd.f32 %v1381, 1.0
          %v1999 = vadd.f32 %v1421, 1.0
          %v2000 = vadd.f32 %v1461, 1.0
          %v2001 = vadd.f32 %v1501, 1.0
          %v2002 = vadd.f32 %v1541, 1.0
          %v2003 = vadd.f32 %v1581, 1.0
          %v2004 = vadd.f32 %v1621, 1.0
          %v2005 = vadd.f32 %v1661, 1.0
          %v2006 = vadd.f32 %v1701, 1.0
          %v2007 = vadd.f32 %v1741, 1.0
          %v2008 = vadd.f32 %v1781, 1.0
          %v2009 = vadd.f32 %v1821, 1.0
          %v2010 = vadd.f32 %v1861, 1.0
          %v2011 = vadd.f32 %v1901, 1.0
          %v2012 = vadd.f32 %v1941, 1.0
          %v2013 = vadd.f32 %v1981, 1.0
          %v2014 = vmul.f32 %v638, %v1982
          %v2015 = vmul.f32 %v639, %v1983
          %v2016 = vmul.f32 %v640, %v1984
          %v2017 = vmul.f32 %v641, %v1985
          %v2018 = vmul.f32 %v642, %v1986
          %v2019 = vmul.f32 %v643, %v1987
          %v2020 = vmul.f32 %v644, %v1988
          %v2021 = vmul.f32 %v645, %v1989
          %v2022 = vmul.f32 %v646, %v1990
          %v2023 = vmul.f32 %v647, %v1991
          %v2024 = vmul.f32 %v648, %v1992
          %v2025 = vmul.f32 %v649, %v1993
          %v2026 = vmul.f32 %v650, %v1994
          %v2027 = vmul.f32 %v651, %v1995
          %v2028 = vmul.f32 %v652, %v1996
          %v2029 = vmul.f32 %v653, %v1997
          %v2030 = vmul.f32 %v654, %v1998
          %v2031 = vmul.f32 %v655, %v1999
          %v2032 = vmul.f32 %v656, %v2000
          %v2033 = vmul.f32 %v657, %v2001
          %v2034 = vmul.f32 %v658, %v2002
          %v2035 = vmul.f32 %v659, %v2003
          %v2036 = vmul.f32 %v660, %v2004
          %v2037 = vmul.f32 %v661, %v2005
          %v2038 = vmul.f32 %v662, %v2006
          %v2039 = vmul.f32 %v663, %v2007
          %v2040 = vmul.f32 %v664, %v2008
          %v2041 = vmul.f32 %v665, %v2009
          %v2042 = vmul.f32 %v666, %v2010
          %v2043 = vmul.f32 %v667, %v2011
          %v2044 = vmul.f32 %v668, %v2012
          %v2045 = vmul.f32 %v669, %v2013
          %v2046 = vld [vmem:[#allocation9] sm:$0xff]
          %v2047 = vld [vmem:[#allocation9 + $0x8] sm:$0xff]
          %v2048 = vld [vmem:[#allocation9 + $0x10] sm:$0xff]
          %v2049 = vld [vmem:[#allocation9 + $0x18] sm:$0xff]
          %v2050 = vld [vmem:[#allocation9 + $0x20] sm:$0xff]
          %v2051 = vld [vmem:[#allocation9 + $0x28] sm:$0xff]
          %v2052 = vld [vmem:[#allocation9 + $0x30] sm:$0xff]
          %v2053 = vld [vmem:[#allocation9 + $0x38] sm:$0xff]
          %v2054 = vld [vmem:[#allocation9 + $0x40] sm:$0xff]
          %v2055 = vld [vmem:[#allocation9 + $0x48] sm:$0xff]
          %v2056 = vld [vmem:[#allocation9 + $0x50] sm:$0xff]
          %v2057 = vld [vmem:[#allocation9 + $0x58] sm:$0xff]
          %v2058 = vld [vmem:[#allocation9 + $0x60] sm:$0xff]
          %v2059 = vld [vmem:[#allocation9 + $0x68] sm:$0xff]
          %v2060 = vld [vmem:[#allocation9 + $0x70] sm:$0xff]
          %v2061 = vld [vmem:[#allocation9 + $0x78] sm:$0xff]
          %v2062 = vld [vmem:[#allocation9 + $0x80] sm:$0xff]
          %v2063 = vld [vmem:[#allocation9 + $0x88] sm:$0xff]
          %v2064 = vld [vmem:[#allocation9 + $0x90] sm:$0xff]
          %v2065 = vld [vmem:[#allocation9 + $0x98] sm:$0xff]
          %v2066 = vld [vmem:[#allocation9 + $0xa0] sm:$0xff]
          %v2067 = vld [vmem:[#allocation9 + $0xa8] sm:$0xff]
          %v2068 = vld [vmem:[#allocation9 + $0xb0] sm:$0xff]
          %v2069 = vld [vmem:[#allocation9 + $0xb8] sm:$0xff]
          %v2070 = vld [vmem:[#allocation9 + $0xc0] sm:$0xff]
          %v2071 = vld [vmem:[#allocation9 + $0xc8] sm:$0xff]
          %v2072 = vld [vmem:[#allocation9 + $0xd0] sm:$0xff]
          %v2073 = vld [vmem:[#allocation9 + $0xd8] sm:$0xff]
          %v2074 = vld [vmem:[#allocation9 + $0xe0] sm:$0xff]
          %v2075 = vld [vmem:[#allocation9 + $0xe8] sm:$0xff]
          %v2076 = vld [vmem:[#allocation9 + $0xf0] sm:$0xff]
          %v2077 = vld [vmem:[#allocation9 + $0xf8] sm:$0xff]
          %v2078 = vld [vmem:[#allocation9 + $0x100] sm:$0xff]
          %v2079 = vld [vmem:[#allocation9 + $0x108] sm:$0xff]
          %v2080 = vld [vmem:[#allocation9 + $0x110] sm:$0xff]
          %v2081 = vld [vmem:[#allocation9 + $0x118] sm:$0xff]
          %v2082 = vld [vmem:[#allocation9 + $0x120] sm:$0xff]
          %v2083 = vld [vmem:[#allocation9 + $0x128] sm:$0xff]
          %v2084 = vld [vmem:[#allocation9 + $0x130] sm:$0xff]
          %v2085 = vld [vmem:[#allocation9 + $0x138] sm:$0xff]
          %v2086 = vld [vmem:[#allocation9 + $0x140] sm:$0xff]
          %v2087 = vld [vmem:[#allocation9 + $0x148] sm:$0xff]
          %v2088 = vld [vmem:[#allocation9 + $0x150] sm:$0xff]
          %v2089 = vld [vmem:[#allocation9 + $0x158] sm:$0xff]
          %v2090 = vld [vmem:[#allocation9 + $0x160] sm:$0xff]
          %v2091 = vld [vmem:[#allocation9 + $0x168] sm:$0xff]
          %v2092 = vld [vmem:[#allocation9 + $0x170] sm:$0xff]
          %v2093 = vld [vmem:[#allocation9 + $0x178] sm:$0xff]
          %v2094 = vld [vmem:[#allocation9 + $0x180] sm:$0xff]
          %v2095 = vld [vmem:[#allocation9 + $0x188] sm:$0xff]
          %v2096 = vld [vmem:[#allocation9 + $0x190] sm:$0xff]
          %v2097 = vld [vmem:[#allocation9 + $0x198] sm:$0xff]
          %v2098 = vld [vmem:[#allocation9 + $0x1a0] sm:$0xff]
          %v2099 = vld [vmem:[#allocation9 + $0x1a8] sm:$0xff]
          %v2100 = vld [vmem:[#allocation9 + $0x1b0] sm:$0xff]
          %v2101 = vld [vmem:[#allocation9 + $0x1b8] sm:$0xff]
          %v2102 = vld [vmem:[#allocation9 + $0x1c0] sm:$0xff]
          %v2103 = vld [vmem:[#allocation9 + $0x1c8] sm:$0xff]
          %v2104 = vld [vmem:[#allocation9 + $0x1d0] sm:$0xff]
          %v2105 = vld [vmem:[#allocation9 + $0x1d8] sm:$0xff]
          %v2106 = vld [vmem:[#allocation9 + $0x1e0] sm:$0xff]
          %v2107 = vld [vmem:[#allocation9 + $0x1e8] sm:$0xff]
          %v2108 = vld [vmem:[#allocation9 + $0x1f0] sm:$0xff]
          %v2109 = vld [vmem:[#allocation9 + $0x1f8] sm:$0xff]
          %v2110 = vld [vmem:[%s4] sm:$0x3]
          %v2112 = vperm.slane %v2110, 0
          %v2113 = vperm.slane %v2110, 1
          %2116 = vmatpush.msra.mxu0 %v2076
          %2117 = vmatpush.msra.mxu0 %v2074
          %2118 = vmatpush.msra.mxu0 %v2072
          %2119 = vmatpush.msra.mxu0 %v2070
          %2120 = vmatpush.msra.mxu0 %v2068
          %2121 = vmatpush.msra.mxu0 %v2066
          %2122 = vmatpush.msra.mxu0 %v2064
          %2123 = vmatpush.msra.mxu0 %v2062
          %2124 = vmatpush.msra.mxu0 %v2060
          %2125 = vmatpush.msra.mxu0 %v2058
          %2126 = vmatpush.msra.mxu0 %v2056
          %2127 = vmatpush.msra.mxu0 %v2054
          %2128 = vmatpush.msra.mxu0 %v2052
          %2129 = vmatpush.msra.mxu0 %v2050
          %2130 = vmatpush.msra.mxu0 %v2048
          %2131 = vmatpush.msra.mxu0 %v2046
          %2132 = vmatmul.f32.gmra.mxu0 %v2014
          %v2133 = vpop.f32.mrf.mxu0
          %v2134 = vadd.f32 %v2112, %v2133
          %2135 = vmatmul.f32.gmra.mxu0 %v2016
          %v2136 = vpop.f32.mrf.mxu0
          %v2137 = vadd.f32 %v2112, %v2136
          %2138 = vmatmul.f32.gmra.mxu0 %v2018
          %v2139 = vpop.f32.mrf.mxu0
          %v2140 = vadd.f32 %v2112, %v2139
          %2141 = vmatmul.f32.gmra.mxu0 %v2020
          %v2142 = vpop.f32.mrf.mxu0
          %v2143 = vadd.f32 %v2112, %v2142
          %2144 = vmatmul.f32.gmra.mxu0 %v2022
          %v2145 = vpop.f32.mrf.mxu0
          %v2146 = vadd.f32 %v2112, %v2145
          %2147 = vmatmul.f32.gmra.mxu0 %v2024
          %v2148 = vpop.f32.mrf.mxu0
          %v2149 = vadd.f32 %v2112, %v2148
          %2150 = vmatmul.f32.gmra.mxu0 %v2026
          %v2151 = vpop.f32.mrf.mxu0
          %v2152 = vadd.f32 %v2112, %v2151
          %2153 = vmatmul.f32.gmra.mxu0 %v2028
          %v2154 = vpop.f32.mrf.mxu0
          %v2155 = vadd.f32 %v2112, %v2154
          %2156 = vmatmul.f32.gmra.mxu0 %v2030
          %v2157 = vpop.f32.mrf.mxu0
          %v2158 = vadd.f32 %v2112, %v2157
          %2159 = vmatmul.f32.gmra.mxu0 %v2032
          %v2160 = vpop.f32.mrf.mxu0
          %v2161 = vadd.f32 %v2112, %v2160
          %2162 = vmatmul.f32.gmra.mxu0 %v2034
          %v2163 = vpop.f32.mrf.mxu0
          %v2164 = vadd.f32 %v2112, %v2163
          %2165 = vmatmul.f32.gmra.mxu0 %v2036
          %v2166 = vpop.f32.mrf.mxu0
          %v2167 = vadd.f32 %v2112, %v2166
          %2168 = vmatmul.f32.gmra.mxu0 %v2038
          %v2169 = vpop.f32.mrf.mxu0
          %v2170 = vadd.f32 %v2112, %v2169
          %2171 = vmatmul.f32.gmra.mxu0 %v2040
          %v2172 = vpop.f32.mrf.mxu0
          %v2173 = vadd.f32 %v2112, %v2172
          %2174 = vmatmul.f32.gmra.mxu0 %v2042
          %v2175 = vpop.f32.mrf.mxu0
          %v2176 = vadd.f32 %v2112, %v2175
          %2177 = vmatmul.f32.gmra.mxu0 %v2044
          %v2178 = vpop.f32.mrf.mxu0
          %v2179 = vadd.f32 %v2112, %v2178
          %2180 = vdwg.mxu0
          %2181 = vmatpush.msra.mxu0 %v2108
          %2182 = vmatpush.msra.mxu0 %v2106
          %2183 = vmatpush.msra.mxu0 %v2104
          %2184 = vmatpush.msra.mxu0 %v2102
          %2185 = vmatpush.msra.mxu0 %v2100
          %2186 = vmatpush.msra.mxu0 %v2098
          %2187 = vmatpush.msra.mxu0 %v2096
          %2188 = vmatpush.msra.mxu0 %v2094
          %2189 = vmatpush.msra.mxu0 %v2092
          %2190 = vmatpush.msra.mxu0 %v2090
          %2191 = vmatpush.msra.mxu0 %v2088
          %2192 = vmatpush.msra.mxu0 %v2086
          %2193 = vmatpush.msra.mxu0 %v2084
          %2194 = vmatpush.msra.mxu0 %v2082
          %2195 = vmatpush.msra.mxu0 %v2080
          %2196 = vmatpush.msra.mxu0 %v2078
          %2197 = vmatmul.f32.gmra.mxu0 %v2015
          %v2198 = vpop.f32.mrf.mxu0
          %v2199 = vadd.f32 %v2134, %v2198
          %2200 = vmatmul.f32.gmra.mxu0 %v2017
          %v2201 = vpop.f32.mrf.mxu0
          %v2202 = vadd.f32 %v2137, %v2201
          %2203 = vmatmul.f32.gmra.mxu0 %v2019
          %v2204 = vpop.f32.mrf.mxu0
          %v2205 = vadd.f32 %v2140, %v2204
          %2206 = vmatmul.f32.gmra.mxu0 %v2021
          %v2207 = vpop.f32.mrf.mxu0
          %v2208 = vadd.f32 %v2143, %v2207
          %2209 = vmatmul.f32.gmra.mxu0 %v2023
          %v2210 = vpop.f32.mrf.mxu0
          %v2211 = vadd.f32 %v2146, %v2210
          %2212 = vmatmul.f32.gmra.mxu0 %v2025
          %v2213 = vpop.f32.mrf.mxu0
          %v2214 = vadd.f32 %v2149, %v2213
          %2215 = vmatmul.f32.gmra.mxu0 %v2027
          %v2216 = vpop.f32.mrf.mxu0
          %v2217 = vadd.f32 %v2152, %v2216
          %2218 = vmatmul.f32.gmra.mxu0 %v2029
          %v2219 = vpop.f32.mrf.mxu0
          %v2220 = vadd.f32 %v2155, %v2219
          %2221 = vmatmul.f32.gmra.mxu0 %v2031
          %v2222 = vpop.f32.mrf.mxu0
          %v2223 = vadd.f32 %v2158, %v2222
          %2224 = vmatmul.f32.gmra.mxu0 %v2033
          %v2225 = vpop.f32.mrf.mxu0
          %v2226 = vadd.f32 %v2161, %v2225
          %2227 = vmatmul.f32.gmra.mxu0 %v2035
          %v2228 = vpop.f32.mrf.mxu0
          %v2229 = vadd.f32 %v2164, %v2228
          %2230 = vmatmul.f32.gmra.mxu0 %v2037
          %v2231 = vpop.f32.mrf.mxu0
          %v2232 = vadd.f32 %v2167, %v2231
          %2233 = vmatmul.f32.gmra.mxu0 %v2039
          %v2234 = vpop.f32.mrf.mxu0
          %v2235 = vadd.f32 %v2170, %v2234
          %2236 = vmatmul.f32.gmra.mxu0 %v2041
          %v2237 = vpop.f32.mrf.mxu0
          %v2238 = vadd.f32 %v2173, %v2237
          %2239 = vmatmul.f32.gmra.mxu0 %v2043
          %v2240 = vpop.f32.mrf.mxu0
          %v2241 = vadd.f32 %v2176, %v2240
          %2242 = vmatmul.f32.gmra.mxu0 %v2045
          %v2243 = vpop.f32.mrf.mxu0
          %v2244 = vadd.f32 %v2179, %v2243
          %2245 = vdwg.mxu0
          %2246 = vmatpush.msra.mxu0 %v2077
          %2247 = vmatpush.msra.mxu0 %v2075
          %2248 = vmatpush.msra.mxu0 %v2073
          %2249 = vmatpush.msra.mxu0 %v2071
          %2250 = vmatpush.msra.mxu0 %v2069
          %2251 = vmatpush.msra.mxu0 %v2067
          %2252 = vmatpush.msra.mxu0 %v2065
          %2253 = vmatpush.msra.mxu0 %v2063
          %2254 = vmatpush.msra.mxu0 %v2061
          %2255 = vmatpush.msra.mxu0 %v2059
          %2256 = vmatpush.msra.mxu0 %v2057
          %2257 = vmatpush.msra.mxu0 %v2055
          %2258 = vmatpush.msra.mxu0 %v2053
          %2259 = vmatpush.msra.mxu0 %v2051
          %2260 = vmatpush.msra.mxu0 %v2049
          %2261 = vmatpush.msra.mxu0 %v2047
          %2262 = vmatmul.f32.gmra.mxu0 %v2014
          %v2263 = vpop.f32.mrf.mxu0
          %v2264 = vadd.f32 %v2113, %v2263
          %2265 = vmatmul.f32.gmra.mxu0 %v2016
          %v2266 = vpop.f32.mrf.mxu0
          %v2267 = vadd.f32 %v2113, %v2266
          %2268 = vmatmul.f32.gmra.mxu0 %v2018
          %v2269 = vpop.f32.mrf.mxu0
          %v2270 = vadd.f32 %v2113, %v2269
          %2271 = vmatmul.f32.gmra.mxu0 %v2020
          %v2272 = vpop.f32.mrf.mxu0
          %v2273 = vadd.f32 %v2113, %v2272
          %2274 = vmatmul.f32.gmra.mxu0 %v2022
          %v2275 = vpop.f32.mrf.mxu0
          %v2276 = vadd.f32 %v2113, %v2275
          %2277 = vmatmul.f32.gmra.mxu0 %v2024
          %v2278 = vpop.f32.mrf.mxu0
          %v2279 = vadd.f32 %v2113, %v2278
          %2280 = vmatmul.f32.gmra.mxu0 %v2026
          %v2281 = vpop.f32.mrf.mxu0
          %v2282 = vadd.f32 %v2113, %v2281
          %2283 = vmatmul.f32.gmra.mxu0 %v2028
          %v2284 = vpop.f32.mrf.mxu0
          %v2285 = vadd.f32 %v2113, %v2284
          %2286 = vmatmul.f32.gmra.mxu0 %v2030
          %v2287 = vpop.f32.mrf.mxu0
          %v2288 = vadd.f32 %v2113, %v2287
          %2289 = vmatmul.f32.gmra.mxu0 %v2032
          %v2290 = vpop.f32.mrf.mxu0
          %v2291 = vadd.f32 %v2113, %v2290
          %2292 = vmatmul.f32.gmra.mxu0 %v2034
          %v2293 = vpop.f32.mrf.mxu0
          %v2294 = vadd.f32 %v2113, %v2293
          %2295 = vmatmul.f32.gmra.mxu0 %v2036
          %v2296 = vpop.f32.mrf.mxu0
          %v2297 = vadd.f32 %v2113, %v2296
          %2298 = vmatmul.f32.gmra.mxu0 %v2038
          %v2299 = vpop.f32.mrf.mxu0
          %v2300 = vadd.f32 %v2113, %v2299
          %2301 = vmatmul.f32.gmra.mxu0 %v2040
          %v2302 = vpop.f32.mrf.mxu0
          %v2303 = vadd.f32 %v2113, %v2302
          %2304 = vmatmul.f32.gmra.mxu0 %v2042
          %v2305 = vpop.f32.mrf.mxu0
          %v2306 = vadd.f32 %v2113, %v2305
          %2307 = vmatmul.f32.gmra.mxu0 %v2044
          %v2308 = vpop.f32.mrf.mxu0
          %v2309 = vadd.f32 %v2113, %v2308
          %2310 = vdwg.mxu0
          %2311 = vmatpush.msra.mxu0 %v2109
          %2312 = vmatpush.msra.mxu0 %v2107
          %2313 = vmatpush.msra.mxu0 %v2105
          %2314 = vmatpush.msra.mxu0 %v2103
          %2315 = vmatpush.msra.mxu0 %v2101
          %2316 = vmatpush.msra.mxu0 %v2099
          %2317 = vmatpush.msra.mxu0 %v2097
          %2318 = vmatpush.msra.mxu0 %v2095
          %2319 = vmatpush.msra.mxu0 %v2093
          %2320 = vmatpush.msra.mxu0 %v2091
          %2321 = vmatpush.msra.mxu0 %v2089
          %2322 = vmatpush.msra.mxu0 %v2087
          %2323 = vmatpush.msra.mxu0 %v2085
          %2324 = vmatpush.msra.mxu0 %v2083
          %2325 = vmatpush.msra.mxu0 %v2081
          %2326 = vmatpush.msra.mxu0 %v2079
          %2327 = vmatmul.f32.gmra.mxu0 %v2015
          %v2328 = vpop.f32.mrf.mxu0
          %v2329 = vadd.f32 %v2264, %v2328
          %2330 = vmatmul.f32.gmra.mxu0 %v2017
          %v2331 = vpop.f32.mrf.mxu0
          %v2332 = vadd.f32 %v2267, %v2331
          %2333 = vmatmul.f32.gmra.mxu0 %v2019
          %v2334 = vpop.f32.mrf.mxu0
          %v2335 = vadd.f32 %v2270, %v2334
          %2336 = vmatmul.f32.gmra.mxu0 %v2021
          %v2337 = vpop.f32.mrf.mxu0
          %v2338 = vadd.f32 %v2273, %v2337
          %2339 = vmatmul.f32.gmra.mxu0 %v2023
          %v2340 = vpop.f32.mrf.mxu0
          %v2341 = vadd.f32 %v2276, %v2340
          %2342 = vmatmul.f32.gmra.mxu0 %v2025
          %v2343 = vpop.f32.mrf.mxu0
          %v2344 = vadd.f32 %v2279, %v2343
          %2345 = vmatmul.f32.gmra.mxu0 %v2027
          %v2346 = vpop.f32.mrf.mxu0
          %v2347 = vadd.f32 %v2282, %v2346
          %2348 = vmatmul.f32.gmra.mxu0 %v2029
          %v2349 = vpop.f32.mrf.mxu0
          %v2350 = vadd.f32 %v2285, %v2349
          %2351 = vmatmul.f32.gmra.mxu0 %v2031
          %v2352 = vpop.f32.mrf.mxu0
          %v2353 = vadd.f32 %v2288, %v2352
          %2354 = vmatmul.f32.gmra.mxu0 %v2033
          %v2355 = vpop.f32.mrf.mxu0
          %v2356 = vadd.f32 %v2291, %v2355
          %2357 = vmatmul.f32.gmra.mxu0 %v2035
          %v2358 = vpop.f32.mrf.mxu0
          %v2359 = vadd.f32 %v2294, %v2358
          %2360 = vmatmul.f32.gmra.mxu0 %v2037
          %v2361 = vpop.f32.mrf.mxu0
          %v2362 = vadd.f32 %v2297, %v2361
          %2363 = vmatmul.f32.gmra.mxu0 %v2039
          %v2364 = vpop.f32.mrf.mxu0
          %v2365 = vadd.f32 %v2300, %v2364
          %2366 = vmatmul.f32.gmra.mxu0 %v2041
          %v2367 = vpop.f32.mrf.mxu0
          %v2368 = vadd.f32 %v2303, %v2367
          %2369 = vmatmul.f32.gmra.mxu0 %v2043
          %v2370 = vpop.f32.mrf.mxu0
          %v2371 = vadd.f32 %v2306, %v2370
          %2372 = vmatmul.f32.gmra.mxu0 %v2045
          %v2373 = vpop.f32.mrf.mxu0
          %v2374 = vadd.f32 %v2309, %v2373
          %2375 = vdwg.mxu0
          %v2376 = vmul.f32 %v2199, 0.5
          %v2377 = vmul.f32 %v2329, 0.5
          %v2378 = vmul.f32 %v2202, 0.5
          %v2379 = vmul.f32 %v2332, 0.5
          %v2380 = vmul.f32 %v2205, 0.5
          %v2381 = vmul.f32 %v2335, 0.5
          %v2382 = vmul.f32 %v2208, 0.5
          %v2383 = vmul.f32 %v2338, 0.5
          %v2384 = vmul.f32 %v2211, 0.5
          %v2385 = vmul.f32 %v2341, 0.5
          %v2386 = vmul.f32 %v2214, 0.5
          %v2387 = vmul.f32 %v2344, 0.5
          %v2388 = vmul.f32 %v2217, 0.5
          %v2389 = vmul.f32 %v2347, 0.5
          %v2390 = vmul.f32 %v2220, 0.5
          %v2391 = vmul.f32 %v2350, 0.5
          %v2392 = vmul.f32 %v2223, 0.5
          %v2393 = vmul.f32 %v2353, 0.5
          %v2394 = vmul.f32 %v2226, 0.5
          %v2395 = vmul.f32 %v2356, 0.5
          %v2396 = vmul.f32 %v2229, 0.5
          %v2397 = vmul.f32 %v2359, 0.5
          %v2398 = vmul.f32 %v2232, 0.5
          %v2399 = vmul.f32 %v2362, 0.5
          %v2400 = vmul.f32 %v2235, 0.5
          %v2401 = vmul.f32 %v2365, 0.5
          %v2402 = vmul.f32 %v2238, 0.5
          %v2403 = vmul.f32 %v2368, 0.5
          %v2404 = vmul.f32 %v2241, 0.5
          %v2405 = vmul.f32 %v2371, 0.5
          %v2406 = vmul.f32 %v2244, 0.5
          %v2407 = vmul.f32 %v2374, 0.5
          %v2408 = vmul.f32 %v2199, 0.70710677
          %v2409 = vmul.f32 %v2329, 0.70710677
          %v2410 = vmul.f32 %v2202, 0.70710677
          %v2411 = vmul.f32 %v2332, 0.70710677
          %v2412 = vmul.f32 %v2205, 0.70710677
          %v2413 = vmul.f32 %v2335, 0.70710677
          %v2414 = vmul.f32 %v2208, 0.70710677
          %v2415 = vmul.f32 %v2338, 0.70710677
          %v2416 = vmul.f32 %v2211, 0.70710677
          %v2417 = vmul.f32 %v2341, 0.70710677
          %v2418 = vmul.f32 %v2214, 0.70710677
          %v2419 = vmul.f32 %v2344, 0.70710677
          %v2420 = vmul.f32 %v2217, 0.70710677
          %v2421 = vmul.f32 %v2347, 0.70710677
          %v2422 = vmul.f32 %v2220, 0.70710677
          %v2423 = vmul.f32 %v2350, 0.70710677
          %v2424 = vmul.f32 %v2223, 0.70710677
          %v2425 = vmul.f32 %v2353, 0.70710677
          %v2426 = vmul.f32 %v2226, 0.70710677
          %v2427 = vmul.f32 %v2356, 0.70710677
          %v2428 = vmul.f32 %v2229, 0.70710677
          %v2429 = vmul.f32 %v2359, 0.70710677
          %v2430 = vmul.f32 %v2232, 0.70710677
          %v2431 = vmul.f32 %v2362, 0.70710677
          %v2432 = vmul.f32 %v2235, 0.70710677
          %v2433 = vmul.f32 %v2365, 0.70710677
          %v2434 = vmul.f32 %v2238, 0.70710677
          %v2435 = vmul.f32 %v2368, 0.70710677
          %v2436 = vmul.f32 %v2241, 0.70710677
          %v2437 = vmul.f32 %v2371, 0.70710677
          %v2438 = vmul.f32 %v2244, 0.70710677
          %v2439 = vmul.f32 %v2374, 0.70710677
          %v2440 = vmul.f32 %v2408, %v2408
          %v2441 = vmin.f32 16.0, %v2440
          %v2442 = vmul.f32 %v2441, 2.1237322e-06
          %v2443 = vadd.f32 %v2442, 0.00028619796
          %v2444 = vmul.f32 %v2441, %v2443
          %v2445 = vadd.f32 %v2444, 0.0036580483
          %v2446 = vmul.f32 %v2441, %v2445
          %v2447 = vadd.f32 %v2446, 0.05243302
          %v2448 = vmul.f32 %v2441, %v2447
          %v2449 = vadd.f32 %v2448, 0.18741608
          %v2450 = vmul.f32 %v2441, %v2449
          %v2451 = vadd.f32 %v2450, 1.1283791
          %v2452 = vmul.f32 %v2408, %v2451
          %v2453 = vmul.f32 %v2441, 3.8918573e-05
          %v2454 = vadd.f32 %v2453, 0.001143296
          %v2455 = vmul.f32 %v2441, %v2454
          %v2456 = vadd.f32 %v2455, 0.014752088
          %v2457 = vmul.f32 %v2441, %v2456
          %v2458 = vadd.f32 %v2457, 0.112945676
          %v2459 = vmul.f32 %v2441, %v2458
          %v2460 = vadd.f32 %v2459, 0.4994258
          %v2461 = vmul.f32 %v2441, %v2460
          %v2462 = vadd.f32 %v2461, 1.0
          %v2463 = vrcp.pop %v2462
          %v2464 = vmul.f32 %v2462, %v2463
          %v2465 = vsub.f32 1.0, %v2464
          %v2466 = vmul.f32 %v2463, %v2465
          %v2467 = vadd.f32 %v2463, %v2466
          %vm2468 = vweird.f32 %v2462
          %vm2469 = vweird.f32 %v2463
          %vm2470 = vmor %vm2468, %vm2469
          %v2471 = vsel %vm2470, %v2463, %v2467
          %v2472 = vand.u32 2147483647, %v2462
          %vm2473 = vcmp.eq.f32.partialorder %v2472, 8.507059e+37
          %v2474 = vand.u32 %v2462, 2147483648
          %v2475 = vor.u32 1.1754944e-38, %v2474
          %v2476 = vsel %vm2473, %v2475, %v2471
          %v2477 = vmul.f32 %v2452, %v2476
          %v2478 = vmin.f32 %v2477, 1.0
          %v2479 = vmax.f32 %v2478, -1.0
          %v2480 = vmul.f32 %v2409, %v2409
          %v2481 = vmin.f32 16.0, %v2480
          %v2482 = vmul.f32 %v2481, 2.1237322e-06
          %v2483 = vadd.f32 %v2482, 0.00028619796
          %v2484 = vmul.f32 %v2481, %v2483
          %v2485 = vadd.f32 %v2484, 0.0036580483
          %v2486 = vmul.f32 %v2481, %v2485
          %v2487 = vadd.f32 %v2486, 0.05243302
          %v2488 = vmul.f32 %v2481, %v2487
          %v2489 = vadd.f32 %v2488, 0.18741608
          %v2490 = vmul.f32 %v2481, %v2489
          %v2491 = vadd.f32 %v2490, 1.1283791
          %v2492 = vmul.f32 %v2409, %v2491
          %v2493 = vmul.f32 %v2481, 3.8918573e-05
          %v2494 = vadd.f32 %v2493, 0.001143296
          %v2495 = vmul.f32 %v2481, %v2494
          %v2496 = vadd.f32 %v2495, 0.014752088
          %v2497 = vmul.f32 %v2481, %v2496
          %v2498 = vadd.f32 %v2497, 0.112945676
          %v2499 = vmul.f32 %v2481, %v2498
          %v2500 = vadd.f32 %v2499, 0.4994258
          %v2501 = vmul.f32 %v2481, %v2500
          %v2502 = vadd.f32 %v2501, 1.0
          %v2503 = vrcp.pop %v2502
          %v2504 = vmul.f32 %v2502, %v2503
          %v2505 = vsub.f32 1.0, %v2504
          %v2506 = vmul.f32 %v2503, %v2505
          %v2507 = vadd.f32 %v2503, %v2506
          %vm2508 = vweird.f32 %v2502
          %vm2509 = vweird.f32 %v2503
          %vm2510 = vmor %vm2508, %vm2509
          %v2511 = vsel %vm2510, %v2503, %v2507
          %v2512 = vand.u32 2147483647, %v2502
          %vm2513 = vcmp.eq.f32.partialorder %v2512, 8.507059e+37
          %v2514 = vand.u32 %v2502, 2147483648
          %v2515 = vor.u32 1.1754944e-38, %v2514
          %v2516 = vsel %vm2513, %v2515, %v2511
          %v2517 = vmul.f32 %v2492, %v2516
          %v2518 = vmin.f32 %v2517, 1.0
          %v2519 = vmax.f32 %v2518, -1.0
          %v2520 = vmul.f32 %v2410, %v2410
          %v2521 = vmin.f32 16.0, %v2520
          %v2522 = vmul.f32 %v2521, 2.1237322e-06
          %v2523 = vadd.f32 %v2522, 0.00028619796
          %v2524 = vmul.f32 %v2521, %v2523
          %v2525 = vadd.f32 %v2524, 0.0036580483
          %v2526 = vmul.f32 %v2521, %v2525
          %v2527 = vadd.f32 %v2526, 0.05243302
          %v2528 = vmul.f32 %v2521, %v2527
          %v2529 = vadd.f32 %v2528, 0.18741608
          %v2530 = vmul.f32 %v2521, %v2529
          %v2531 = vadd.f32 %v2530, 1.1283791
          %v2532 = vmul.f32 %v2410, %v2531
          %v2533 = vmul.f32 %v2521, 3.8918573e-05
          %v2534 = vadd.f32 %v2533, 0.001143296
          %v2535 = vmul.f32 %v2521, %v2534
          %v2536 = vadd.f32 %v2535, 0.014752088
          %v2537 = vmul.f32 %v2521, %v2536
          %v2538 = vadd.f32 %v2537, 0.112945676
          %v2539 = vmul.f32 %v2521, %v2538
          %v2540 = vadd.f32 %v2539, 0.4994258
          %v2541 = vmul.f32 %v2521, %v2540
          %v2542 = vadd.f32 %v2541, 1.0
          %v2543 = vrcp.pop %v2542
          %v2544 = vmul.f32 %v2542, %v2543
          %v2545 = vsub.f32 1.0, %v2544
          %v2546 = vmul.f32 %v2543, %v2545
          %v2547 = vadd.f32 %v2543, %v2546
          %vm2548 = vweird.f32 %v2542
          %vm2549 = vweird.f32 %v2543
          %vm2550 = vmor %vm2548, %vm2549
          %v2551 = vsel %vm2550, %v2543, %v2547
          %v2552 = vand.u32 2147483647, %v2542
          %vm2553 = vcmp.eq.f32.partialorder %v2552, 8.507059e+37
          %v2554 = vand.u32 %v2542, 2147483648
          %v2555 = vor.u32 1.1754944e-38, %v2554
          %v2556 = vsel %vm2553, %v2555, %v2551
          %v2557 = vmul.f32 %v2532, %v2556
          %v2558 = vmin.f32 %v2557, 1.0
          %v2559 = vmax.f32 %v2558, -1.0
          %v2560 = vmul.f32 %v2411, %v2411
          %v2561 = vmin.f32 16.0, %v2560
          %v2562 = vmul.f32 %v2561, 2.1237322e-06
          %v2563 = vadd.f32 %v2562, 0.00028619796
          %v2564 = vmul.f32 %v2561, %v2563
          %v2565 = vadd.f32 %v2564, 0.0036580483
          %v2566 = vmul.f32 %v2561, %v2565
          %v2567 = vadd.f32 %v2566, 0.05243302
          %v2568 = vmul.f32 %v2561, %v2567
          %v2569 = vadd.f32 %v2568, 0.18741608
          %v2570 = vmul.f32 %v2561, %v2569
          %v2571 = vadd.f32 %v2570, 1.1283791
          %v2572 = vmul.f32 %v2411, %v2571
          %v2573 = vmul.f32 %v2561, 3.8918573e-05
          %v2574 = vadd.f32 %v2573, 0.001143296
          %v2575 = vmul.f32 %v2561, %v2574
          %v2576 = vadd.f32 %v2575, 0.014752088
          %v2577 = vmul.f32 %v2561, %v2576
          %v2578 = vadd.f32 %v2577, 0.112945676
          %v2579 = vmul.f32 %v2561, %v2578
          %v2580 = vadd.f32 %v2579, 0.4994258
          %v2581 = vmul.f32 %v2561, %v2580
          %v2582 = vadd.f32 %v2581, 1.0
          %v2583 = vrcp.pop %v2582
          %v2584 = vmul.f32 %v2582, %v2583
          %v2585 = vsub.f32 1.0, %v2584
          %v2586 = vmul.f32 %v2583, %v2585
          %v2587 = vadd.f32 %v2583, %v2586
          %vm2588 = vweird.f32 %v2582
          %vm2589 = vweird.f32 %v2583
          %vm2590 = vmor %vm2588, %vm2589
          %v2591 = vsel %vm2590, %v2583, %v2587
          %v2592 = vand.u32 2147483647, %v2582
          %vm2593 = vcmp.eq.f32.partialorder %v2592, 8.507059e+37
          %v2594 = vand.u32 %v2582, 2147483648
          %v2595 = vor.u32 1.1754944e-38, %v2594
          %v2596 = vsel %vm2593, %v2595, %v2591
          %v2597 = vmul.f32 %v2572, %v2596
          %v2598 = vmin.f32 %v2597, 1.0
          %v2599 = vmax.f32 %v2598, -1.0
          %v2600 = vmul.f32 %v2412, %v2412
          %v2601 = vmin.f32 16.0, %v2600
          %v2602 = vmul.f32 %v2601, 2.1237322e-06
          %v2603 = vadd.f32 %v2602, 0.00028619796
          %v2604 = vmul.f32 %v2601, %v2603
          %v2605 = vadd.f32 %v2604, 0.0036580483
          %v2606 = vmul.f32 %v2601, %v2605
          %v2607 = vadd.f32 %v2606, 0.05243302
          %v2608 = vmul.f32 %v2601, %v2607
          %v2609 = vadd.f32 %v2608, 0.18741608
          %v2610 = vmul.f32 %v2601, %v2609
          %v2611 = vadd.f32 %v2610, 1.1283791
          %v2612 = vmul.f32 %v2412, %v2611
          %v2613 = vmul.f32 %v2601, 3.8918573e-05
          %v2614 = vadd.f32 %v2613, 0.001143296
          %v2615 = vmul.f32 %v2601, %v2614
          %v2616 = vadd.f32 %v2615, 0.014752088
          %v2617 = vmul.f32 %v2601, %v2616
          %v2618 = vadd.f32 %v2617, 0.112945676
          %v2619 = vmul.f32 %v2601, %v2618
          %v2620 = vadd.f32 %v2619, 0.4994258
          %v2621 = vmul.f32 %v2601, %v2620
          %v2622 = vadd.f32 %v2621, 1.0
          %v2623 = vrcp.pop %v2622
          %v2624 = vmul.f32 %v2622, %v2623
          %v2625 = vsub.f32 1.0, %v2624
          %v2626 = vmul.f32 %v2623, %v2625
          %v2627 = vadd.f32 %v2623, %v2626
          %vm2628 = vweird.f32 %v2622
          %vm2629 = vweird.f32 %v2623
          %vm2630 = vmor %vm2628, %vm2629
          %v2631 = vsel %vm2630, %v2623, %v2627
          %v2632 = vand.u32 2147483647, %v2622
          %vm2633 = vcmp.eq.f32.partialorder %v2632, 8.507059e+37
          %v2634 = vand.u32 %v2622, 2147483648
          %v2635 = vor.u32 1.1754944e-38, %v2634
          %v2636 = vsel %vm2633, %v2635, %v2631
          %v2637 = vmul.f32 %v2612, %v2636
          %v2638 = vmin.f32 %v2637, 1.0
          %v2639 = vmax.f32 %v2638, -1.0
          %v2640 = vmul.f32 %v2413, %v2413
          %v2641 = vmin.f32 16.0, %v2640
          %v2642 = vmul.f32 %v2641, 2.1237322e-06
          %v2643 = vadd.f32 %v2642, 0.00028619796
          %v2644 = vmul.f32 %v2641, %v2643
          %v2645 = vadd.f32 %v2644, 0.0036580483
          %v2646 = vmul.f32 %v2641, %v2645
          %v2647 = vadd.f32 %v2646, 0.05243302
          %v2648 = vmul.f32 %v2641, %v2647
          %v2649 = vadd.f32 %v2648, 0.18741608
          %v2650 = vmul.f32 %v2641, %v2649
          %v2651 = vadd.f32 %v2650, 1.1283791
          %v2652 = vmul.f32 %v2413, %v2651
          %v2653 = vmul.f32 %v2641, 3.8918573e-05
          %v2654 = vadd.f32 %v2653, 0.001143296
          %v2655 = vmul.f32 %v2641, %v2654
          %v2656 = vadd.f32 %v2655, 0.014752088
          %v2657 = vmul.f32 %v2641, %v2656
          %v2658 = vadd.f32 %v2657, 0.112945676
          %v2659 = vmul.f32 %v2641, %v2658
          %v2660 = vadd.f32 %v2659, 0.4994258
          %v2661 = vmul.f32 %v2641, %v2660
          %v2662 = vadd.f32 %v2661, 1.0
          %v2663 = vrcp.pop %v2662
          %v2664 = vmul.f32 %v2662, %v2663
          %v2665 = vsub.f32 1.0, %v2664
          %v2666 = vmul.f32 %v2663, %v2665
          %v2667 = vadd.f32 %v2663, %v2666
          %vm2668 = vweird.f32 %v2662
          %vm2669 = vweird.f32 %v2663
          %vm2670 = vmor %vm2668, %vm2669
          %v2671 = vsel %vm2670, %v2663, %v2667
          %v2672 = vand.u32 2147483647, %v2662
          %vm2673 = vcmp.eq.f32.partialorder %v2672, 8.507059e+37
          %v2674 = vand.u32 %v2662, 2147483648
          %v2675 = vor.u32 1.1754944e-38, %v2674
          %v2676 = vsel %vm2673, %v2675, %v2671
          %v2677 = vmul.f32 %v2652, %v2676
          %v2678 = vmin.f32 %v2677, 1.0
          %v2679 = vmax.f32 %v2678, -1.0
          %v2680 = vmul.f32 %v2414, %v2414
          %v2681 = vmin.f32 16.0, %v2680
          %v2682 = vmul.f32 %v2681, 2.1237322e-06
          %v2683 = vadd.f32 %v2682, 0.00028619796
          %v2684 = vmul.f32 %v2681, %v2683
          %v2685 = vadd.f32 %v2684, 0.0036580483
          %v2686 = vmul.f32 %v2681, %v2685
          %v2687 = vadd.f32 %v2686, 0.05243302
          %v2688 = vmul.f32 %v2681, %v2687
          %v2689 = vadd.f32 %v2688, 0.18741608
          %v2690 = vmul.f32 %v2681, %v2689
          %v2691 = vadd.f32 %v2690, 1.1283791
          %v2692 = vmul.f32 %v2414, %v2691
          %v2693 = vmul.f32 %v2681, 3.8918573e-05
          %v2694 = vadd.f32 %v2693, 0.001143296
          %v2695 = vmul.f32 %v2681, %v2694
          %v2696 = vadd.f32 %v2695, 0.014752088
          %v2697 = vmul.f32 %v2681, %v2696
          %v2698 = vadd.f32 %v2697, 0.112945676
          %v2699 = vmul.f32 %v2681, %v2698
          %v2700 = vadd.f32 %v2699, 0.4994258
          %v2701 = vmul.f32 %v2681, %v2700
          %v2702 = vadd.f32 %v2701, 1.0
          %v2703 = vrcp.pop %v2702
          %v2704 = vmul.f32 %v2702, %v2703
          %v2705 = vsub.f32 1.0, %v2704
          %v2706 = vmul.f32 %v2703, %v2705
          %v2707 = vadd.f32 %v2703, %v2706
          %vm2708 = vweird.f32 %v2702
          %vm2709 = vweird.f32 %v2703
          %vm2710 = vmor %vm2708, %vm2709
          %v2711 = vsel %vm2710, %v2703, %v2707
          %v2712 = vand.u32 2147483647, %v2702
          %vm2713 = vcmp.eq.f32.partialorder %v2712, 8.507059e+37
          %v2714 = vand.u32 %v2702, 2147483648
          %v2715 = vor.u32 1.1754944e-38, %v2714
          %v2716 = vsel %vm2713, %v2715, %v2711
          %v2717 = vmul.f32 %v2692, %v2716
          %v2718 = vmin.f32 %v2717, 1.0
          %v2719 = vmax.f32 %v2718, -1.0
          %v2720 = vmul.f32 %v2415, %v2415
          %v2721 = vmin.f32 16.0, %v2720
          %v2722 = vmul.f32 %v2721, 2.1237322e-06
          %v2723 = vadd.f32 %v2722, 0.00028619796
          %v2724 = vmul.f32 %v2721, %v2723
          %v2725 = vadd.f32 %v2724, 0.0036580483
          %v2726 = vmul.f32 %v2721, %v2725
          %v2727 = vadd.f32 %v2726, 0.05243302
          %v2728 = vmul.f32 %v2721, %v2727
          %v2729 = vadd.f32 %v2728, 0.18741608
          %v2730 = vmul.f32 %v2721, %v2729
          %v2731 = vadd.f32 %v2730, 1.1283791
          %v2732 = vmul.f32 %v2415, %v2731
          %v2733 = vmul.f32 %v2721, 3.8918573e-05
          %v2734 = vadd.f32 %v2733, 0.001143296
          %v2735 = vmul.f32 %v2721, %v2734
          %v2736 = vadd.f32 %v2735, 0.014752088
          %v2737 = vmul.f32 %v2721, %v2736
          %v2738 = vadd.f32 %v2737, 0.112945676
          %v2739 = vmul.f32 %v2721, %v2738
          %v2740 = vadd.f32 %v2739, 0.4994258
          %v2741 = vmul.f32 %v2721, %v2740
          %v2742 = vadd.f32 %v2741, 1.0
          %v2743 = vrcp.pop %v2742
          %v2744 = vmul.f32 %v2742, %v2743
          %v2745 = vsub.f32 1.0, %v2744
          %v2746 = vmul.f32 %v2743, %v2745
          %v2747 = vadd.f32 %v2743, %v2746
          %vm2748 = vweird.f32 %v2742
          %vm2749 = vweird.f32 %v2743
          %vm2750 = vmor %vm2748, %vm2749
          %v2751 = vsel %vm2750, %v2743, %v2747
          %v2752 = vand.u32 2147483647, %v2742
          %vm2753 = vcmp.eq.f32.partialorder %v2752, 8.507059e+37
          %v2754 = vand.u32 %v2742, 2147483648
          %v2755 = vor.u32 1.1754944e-38, %v2754
          %v2756 = vsel %vm2753, %v2755, %v2751
          %v2757 = vmul.f32 %v2732, %v2756
          %v2758 = vmin.f32 %v2757, 1.0
          %v2759 = vmax.f32 %v2758, -1.0
          %v2760 = vmul.f32 %v2416, %v2416
          %v2761 = vmin.f32 16.0, %v2760
          %v2762 = vmul.f32 %v2761, 2.1237322e-06
          %v2763 = vadd.f32 %v2762, 0.00028619796
          %v2764 = vmul.f32 %v2761, %v2763
          %v2765 = vadd.f32 %v2764, 0.0036580483
          %v2766 = vmul.f32 %v2761, %v2765
          %v2767 = vadd.f32 %v2766, 0.05243302
          %v2768 = vmul.f32 %v2761, %v2767
          %v2769 = vadd.f32 %v2768, 0.18741608
          %v2770 = vmul.f32 %v2761, %v2769
          %v2771 = vadd.f32 %v2770, 1.1283791
          %v2772 = vmul.f32 %v2416, %v2771
          %v2773 = vmul.f32 %v2761, 3.8918573e-05
          %v2774 = vadd.f32 %v2773, 0.001143296
          %v2775 = vmul.f32 %v2761, %v2774
          %v2776 = vadd.f32 %v2775, 0.014752088
          %v2777 = vmul.f32 %v2761, %v2776
          %v2778 = vadd.f32 %v2777, 0.112945676
          %v2779 = vmul.f32 %v2761, %v2778
          %v2780 = vadd.f32 %v2779, 0.4994258
          %v2781 = vmul.f32 %v2761, %v2780
          %v2782 = vadd.f32 %v2781, 1.0
          %v2783 = vrcp.pop %v2782
          %v2784 = vmul.f32 %v2782, %v2783
          %v2785 = vsub.f32 1.0, %v2784
          %v2786 = vmul.f32 %v2783, %v2785
          %v2787 = vadd.f32 %v2783, %v2786
          %vm2788 = vweird.f32 %v2782
          %vm2789 = vweird.f32 %v2783
          %vm2790 = vmor %vm2788, %vm2789
          %v2791 = vsel %vm2790, %v2783, %v2787
          %v2792 = vand.u32 2147483647, %v2782
          %vm2793 = vcmp.eq.f32.partialorder %v2792, 8.507059e+37
          %v2794 = vand.u32 %v2782, 2147483648
          %v2795 = vor.u32 1.1754944e-38, %v2794
          %v2796 = vsel %vm2793, %v2795, %v2791
          %v2797 = vmul.f32 %v2772, %v2796
          %v2798 = vmin.f32 %v2797, 1.0
          %v2799 = vmax.f32 %v2798, -1.0
          %v2800 = vmul.f32 %v2417, %v2417
          %v2801 = vmin.f32 16.0, %v2800
          %v2802 = vmul.f32 %v2801, 2.1237322e-06
          %v2803 = vadd.f32 %v2802, 0.00028619796
          %v2804 = vmul.f32 %v2801, %v2803
          %v2805 = vadd.f32 %v2804, 0.0036580483
          %v2806 = vmul.f32 %v2801, %v2805
          %v2807 = vadd.f32 %v2806, 0.05243302
          %v2808 = vmul.f32 %v2801, %v2807
          %v2809 = vadd.f32 %v2808, 0.18741608
          %v2810 = vmul.f32 %v2801, %v2809
          %v2811 = vadd.f32 %v2810, 1.1283791
          %v2812 = vmul.f32 %v2417, %v2811
          %v2813 = vmul.f32 %v2801, 3.8918573e-05
          %v2814 = vadd.f32 %v2813, 0.001143296
          %v2815 = vmul.f32 %v2801, %v2814
          %v2816 = vadd.f32 %v2815, 0.014752088
          %v2817 = vmul.f32 %v2801, %v2816
          %v2818 = vadd.f32 %v2817, 0.112945676
          %v2819 = vmul.f32 %v2801, %v2818
          %v2820 = vadd.f32 %v2819, 0.4994258
          %v2821 = vmul.f32 %v2801, %v2820
          %v2822 = vadd.f32 %v2821, 1.0
          %v2823 = vrcp.pop %v2822
          %v2824 = vmul.f32 %v2822, %v2823
          %v2825 = vsub.f32 1.0, %v2824
          %v2826 = vmul.f32 %v2823, %v2825
          %v2827 = vadd.f32 %v2823, %v2826
          %vm2828 = vweird.f32 %v2822
          %vm2829 = vweird.f32 %v2823
          %vm2830 = vmor %vm2828, %vm2829
          %v2831 = vsel %vm2830, %v2823, %v2827
          %v2832 = vand.u32 2147483647, %v2822
          %vm2833 = vcmp.eq.f32.partialorder %v2832, 8.507059e+37
          %v2834 = vand.u32 %v2822, 2147483648
          %v2835 = vor.u32 1.1754944e-38, %v2834
          %v2836 = vsel %vm2833, %v2835, %v2831
          %v2837 = vmul.f32 %v2812, %v2836
          %v2838 = vmin.f32 %v2837, 1.0
          %v2839 = vmax.f32 %v2838, -1.0
          %v2840 = vmul.f32 %v2418, %v2418
          %v2841 = vmin.f32 16.0, %v2840
          %v2842 = vmul.f32 %v2841, 2.1237322e-06
          %v2843 = vadd.f32 %v2842, 0.00028619796
          %v2844 = vmul.f32 %v2841, %v2843
          %v2845 = vadd.f32 %v2844, 0.0036580483
          %v2846 = vmul.f32 %v2841, %v2845
          %v2847 = vadd.f32 %v2846, 0.05243302
          %v2848 = vmul.f32 %v2841, %v2847
          %v2849 = vadd.f32 %v2848, 0.18741608
          %v2850 = vmul.f32 %v2841, %v2849
          %v2851 = vadd.f32 %v2850, 1.1283791
          %v2852 = vmul.f32 %v2418, %v2851
          %v2853 = vmul.f32 %v2841, 3.8918573e-05
          %v2854 = vadd.f32 %v2853, 0.001143296
          %v2855 = vmul.f32 %v2841, %v2854
          %v2856 = vadd.f32 %v2855, 0.014752088
          %v2857 = vmul.f32 %v2841, %v2856
          %v2858 = vadd.f32 %v2857, 0.112945676
          %v2859 = vmul.f32 %v2841, %v2858
          %v2860 = vadd.f32 %v2859, 0.4994258
          %v2861 = vmul.f32 %v2841, %v2860
          %v2862 = vadd.f32 %v2861, 1.0
          %v2863 = vrcp.pop %v2862
          %v2864 = vmul.f32 %v2862, %v2863
          %v2865 = vsub.f32 1.0, %v2864
          %v2866 = vmul.f32 %v2863, %v2865
          %v2867 = vadd.f32 %v2863, %v2866
          %vm2868 = vweird.f32 %v2862
          %vm2869 = vweird.f32 %v2863
          %vm2870 = vmor %vm2868, %vm2869
          %v2871 = vsel %vm2870, %v2863, %v2867
          %v2872 = vand.u32 2147483647, %v2862
          %vm2873 = vcmp.eq.f32.partialorder %v2872, 8.507059e+37
          %v2874 = vand.u32 %v2862, 2147483648
          %v2875 = vor.u32 1.1754944e-38, %v2874
          %v2876 = vsel %vm2873, %v2875, %v2871
          %v2877 = vmul.f32 %v2852, %v2876
          %v2878 = vmin.f32 %v2877, 1.0
          %v2879 = vmax.f32 %v2878, -1.0
          %v2880 = vmul.f32 %v2419, %v2419
          %v2881 = vmin.f32 16.0, %v2880
          %v2882 = vmul.f32 %v2881, 2.1237322e-06
          %v2883 = vadd.f32 %v2882, 0.00028619796
          %v2884 = vmul.f32 %v2881, %v2883
          %v2885 = vadd.f32 %v2884, 0.0036580483
          %v2886 = vmul.f32 %v2881, %v2885
          %v2887 = vadd.f32 %v2886, 0.05243302
          %v2888 = vmul.f32 %v2881, %v2887
          %v2889 = vadd.f32 %v2888, 0.18741608
          %v2890 = vmul.f32 %v2881, %v2889
          %v2891 = vadd.f32 %v2890, 1.1283791
          %v2892 = vmul.f32 %v2419, %v2891
          %v2893 = vmul.f32 %v2881, 3.8918573e-05
          %v2894 = vadd.f32 %v2893, 0.001143296
          %v2895 = vmul.f32 %v2881, %v2894
          %v2896 = vadd.f32 %v2895, 0.014752088
          %v2897 = vmul.f32 %v2881, %v2896
          %v2898 = vadd.f32 %v2897, 0.112945676
          %v2899 = vmul.f32 %v2881, %v2898
          %v2900 = vadd.f32 %v2899, 0.4994258
          %v2901 = vmul.f32 %v2881, %v2900
          %v2902 = vadd.f32 %v2901, 1.0
          %v2903 = vrcp.pop %v2902
          %v2904 = vmul.f32 %v2902, %v2903
          %v2905 = vsub.f32 1.0, %v2904
          %v2906 = vmul.f32 %v2903, %v2905
          %v2907 = vadd.f32 %v2903, %v2906
          %vm2908 = vweird.f32 %v2902
          %vm2909 = vweird.f32 %v2903
          %vm2910 = vmor %vm2908, %vm2909
          %v2911 = vsel %vm2910, %v2903, %v2907
          %v2912 = vand.u32 2147483647, %v2902
          %vm2913 = vcmp.eq.f32.partialorder %v2912, 8.507059e+37
          %v2914 = vand.u32 %v2902, 2147483648
          %v2915 = vor.u32 1.1754944e-38, %v2914
          %v2916 = vsel %vm2913, %v2915, %v2911
          %v2917 = vmul.f32 %v2892, %v2916
          %v2918 = vmin.f32 %v2917, 1.0
          %v2919 = vmax.f32 %v2918, -1.0
          %v2920 = vmul.f32 %v2420, %v2420
          %v2921 = vmin.f32 16.0, %v2920
          %v2922 = vmul.f32 %v2921, 2.1237322e-06
          %v2923 = vadd.f32 %v2922, 0.00028619796
          %v2924 = vmul.f32 %v2921, %v2923
          %v2925 = vadd.f32 %v2924, 0.0036580483
          %v2926 = vmul.f32 %v2921, %v2925
          %v2927 = vadd.f32 %v2926, 0.05243302
          %v2928 = vmul.f32 %v2921, %v2927
          %v2929 = vadd.f32 %v2928, 0.18741608
          %v2930 = vmul.f32 %v2921, %v2929
          %v2931 = vadd.f32 %v2930, 1.1283791
          %v2932 = vmul.f32 %v2420, %v2931
          %v2933 = vmul.f32 %v2921, 3.8918573e-05
          %v2934 = vadd.f32 %v2933, 0.001143296
          %v2935 = vmul.f32 %v2921, %v2934
          %v2936 = vadd.f32 %v2935, 0.014752088
          %v2937 = vmul.f32 %v2921, %v2936
          %v2938 = vadd.f32 %v2937, 0.112945676
          %v2939 = vmul.f32 %v2921, %v2938
          %v2940 = vadd.f32 %v2939, 0.4994258
          %v2941 = vmul.f32 %v2921, %v2940
          %v2942 = vadd.f32 %v2941, 1.0
          %v2943 = vrcp.pop %v2942
          %v2944 = vmul.f32 %v2942, %v2943
          %v2945 = vsub.f32 1.0, %v2944
          %v2946 = vmul.f32 %v2943, %v2945
          %v2947 = vadd.f32 %v2943, %v2946
          %vm2948 = vweird.f32 %v2942
          %vm2949 = vweird.f32 %v2943
          %vm2950 = vmor %vm2948, %vm2949
          %v2951 = vsel %vm2950, %v2943, %v2947
          %v2952 = vand.u32 2147483647, %v2942
          %vm2953 = vcmp.eq.f32.partialorder %v2952, 8.507059e+37
          %v2954 = vand.u32 %v2942, 2147483648
          %v2955 = vor.u32 1.1754944e-38, %v2954
          %v2956 = vsel %vm2953, %v2955, %v2951
          %v2957 = vmul.f32 %v2932, %v2956
          %v2958 = vmin.f32 %v2957, 1.0
          %v2959 = vmax.f32 %v2958, -1.0
          %v2960 = vmul.f32 %v2421, %v2421
          %v2961 = vmin.f32 16.0, %v2960
          %v2962 = vmul.f32 %v2961, 2.1237322e-06
          %v2963 = vadd.f32 %v2962, 0.00028619796
          %v2964 = vmul.f32 %v2961, %v2963
          %v2965 = vadd.f32 %v2964, 0.0036580483
          %v2966 = vmul.f32 %v2961, %v2965
          %v2967 = vadd.f32 %v2966, 0.05243302
          %v2968 = vmul.f32 %v2961, %v2967
          %v2969 = vadd.f32 %v2968, 0.18741608
          %v2970 = vmul.f32 %v2961, %v2969
          %v2971 = vadd.f32 %v2970, 1.1283791
          %v2972 = vmul.f32 %v2421, %v2971
          %v2973 = vmul.f32 %v2961, 3.8918573e-05
          %v2974 = vadd.f32 %v2973, 0.001143296
          %v2975 = vmul.f32 %v2961, %v2974
          %v2976 = vadd.f32 %v2975, 0.014752088
          %v2977 = vmul.f32 %v2961, %v2976
          %v2978 = vadd.f32 %v2977, 0.112945676
          %v2979 = vmul.f32 %v2961, %v2978
          %v2980 = vadd.f32 %v2979, 0.4994258
          %v2981 = vmul.f32 %v2961, %v2980
          %v2982 = vadd.f32 %v2981, 1.0
          %v2983 = vrcp.pop %v2982
          %v2984 = vmul.f32 %v2982, %v2983
          %v2985 = vsub.f32 1.0, %v2984
          %v2986 = vmul.f32 %v2983, %v2985
          %v2987 = vadd.f32 %v2983, %v2986
          %vm2988 = vweird.f32 %v2982
          %vm2989 = vweird.f32 %v2983
          %vm2990 = vmor %vm2988, %vm2989
          %v2991 = vsel %vm2990, %v2983, %v2987
          %v2992 = vand.u32 2147483647, %v2982
          %vm2993 = vcmp.eq.f32.partialorder %v2992, 8.507059e+37
          %v2994 = vand.u32 %v2982, 2147483648
          %v2995 = vor.u32 1.1754944e-38, %v2994
          %v2996 = vsel %vm2993, %v2995, %v2991
          %v2997 = vmul.f32 %v2972, %v2996
          %v2998 = vmin.f32 %v2997, 1.0
          %v2999 = vmax.f32 %v2998, -1.0
          %v3000 = vmul.f32 %v2422, %v2422
          %v3001 = vmin.f32 16.0, %v3000
          %v3002 = vmul.f32 %v3001, 2.1237322e-06
          %v3003 = vadd.f32 %v3002, 0.00028619796
          %v3004 = vmul.f32 %v3001, %v3003
          %v3005 = vadd.f32 %v3004, 0.0036580483
          %v3006 = vmul.f32 %v3001, %v3005
          %v3007 = vadd.f32 %v3006, 0.05243302
          %v3008 = vmul.f32 %v3001, %v3007
          %v3009 = vadd.f32 %v3008, 0.18741608
          %v3010 = vmul.f32 %v3001, %v3009
          %v3011 = vadd.f32 %v3010, 1.1283791
          %v3012 = vmul.f32 %v2422, %v3011
          %v3013 = vmul.f32 %v3001, 3.8918573e-05
          %v3014 = vadd.f32 %v3013, 0.001143296
          %v3015 = vmul.f32 %v3001, %v3014
          %v3016 = vadd.f32 %v3015, 0.014752088
          %v3017 = vmul.f32 %v3001, %v3016
          %v3018 = vadd.f32 %v3017, 0.112945676
          %v3019 = vmul.f32 %v3001, %v3018
          %v3020 = vadd.f32 %v3019, 0.4994258
          %v3021 = vmul.f32 %v3001, %v3020
          %v3022 = vadd.f32 %v3021, 1.0
          %v3023 = vrcp.pop %v3022
          %v3024 = vmul.f32 %v3022, %v3023
          %v3025 = vsub.f32 1.0, %v3024
          %v3026 = vmul.f32 %v3023, %v3025
          %v3027 = vadd.f32 %v3023, %v3026
          %vm3028 = vweird.f32 %v3022
          %vm3029 = vweird.f32 %v3023
          %vm3030 = vmor %vm3028, %vm3029
          %v3031 = vsel %vm3030, %v3023, %v3027
          %v3032 = vand.u32 2147483647, %v3022
          %vm3033 = vcmp.eq.f32.partialorder %v3032, 8.507059e+37
          %v3034 = vand.u32 %v3022, 2147483648
          %v3035 = vor.u32 1.1754944e-38, %v3034
          %v3036 = vsel %vm3033, %v3035, %v3031
          %v3037 = vmul.f32 %v3012, %v3036
          %v3038 = vmin.f32 %v3037, 1.0
          %v3039 = vmax.f32 %v3038, -1.0
          %v3040 = vmul.f32 %v2423, %v2423
          %v3041 = vmin.f32 16.0, %v3040
          %v3042 = vmul.f32 %v3041, 2.1237322e-06
          %v3043 = vadd.f32 %v3042, 0.00028619796
          %v3044 = vmul.f32 %v3041, %v3043
          %v3045 = vadd.f32 %v3044, 0.0036580483
          %v3046 = vmul.f32 %v3041, %v3045
          %v3047 = vadd.f32 %v3046, 0.05243302
          %v3048 = vmul.f32 %v3041, %v3047
          %v3049 = vadd.f32 %v3048, 0.18741608
          %v3050 = vmul.f32 %v3041, %v3049
          %v3051 = vadd.f32 %v3050, 1.1283791
          %v3052 = vmul.f32 %v2423, %v3051
          %v3053 = vmul.f32 %v3041, 3.8918573e-05
          %v3054 = vadd.f32 %v3053, 0.001143296
          %v3055 = vmul.f32 %v3041, %v3054
          %v3056 = vadd.f32 %v3055, 0.014752088
          %v3057 = vmul.f32 %v3041, %v3056
          %v3058 = vadd.f32 %v3057, 0.112945676
          %v3059 = vmul.f32 %v3041, %v3058
          %v3060 = vadd.f32 %v3059, 0.4994258
          %v3061 = vmul.f32 %v3041, %v3060
          %v3062 = vadd.f32 %v3061, 1.0
          %v3063 = vrcp.pop %v3062
          %v3064 = vmul.f32 %v3062, %v3063
          %v3065 = vsub.f32 1.0, %v3064
          %v3066 = vmul.f32 %v3063, %v3065
          %v3067 = vadd.f32 %v3063, %v3066
          %vm3068 = vweird.f32 %v3062
          %vm3069 = vweird.f32 %v3063
          %vm3070 = vmor %vm3068, %vm3069
          %v3071 = vsel %vm3070, %v3063, %v3067
          %v3072 = vand.u32 2147483647, %v3062
          %vm3073 = vcmp.eq.f32.partialorder %v3072, 8.507059e+37
          %v3074 = vand.u32 %v3062, 2147483648
          %v3075 = vor.u32 1.1754944e-38, %v3074
          %v3076 = vsel %vm3073, %v3075, %v3071
          %v3077 = vmul.f32 %v3052, %v3076
          %v3078 = vmin.f32 %v3077, 1.0
          %v3079 = vmax.f32 %v3078, -1.0
          %v3080 = vmul.f32 %v2424, %v2424
          %v3081 = vmin.f32 16.0, %v3080
          %v3082 = vmul.f32 %v3081, 2.1237322e-06
          %v3083 = vadd.f32 %v3082, 0.00028619796
          %v3084 = vmul.f32 %v3081, %v3083
          %v3085 = vadd.f32 %v3084, 0.0036580483
          %v3086 = vmul.f32 %v3081, %v3085
          %v3087 = vadd.f32 %v3086, 0.05243302
          %v3088 = vmul.f32 %v3081, %v3087
          %v3089 = vadd.f32 %v3088, 0.18741608
          %v3090 = vmul.f32 %v3081, %v3089
          %v3091 = vadd.f32 %v3090, 1.1283791
          %v3092 = vmul.f32 %v2424, %v3091
          %v3093 = vmul.f32 %v3081, 3.8918573e-05
          %v3094 = vadd.f32 %v3093, 0.001143296
          %v3095 = vmul.f32 %v3081, %v3094
          %v3096 = vadd.f32 %v3095, 0.014752088
          %v3097 = vmul.f32 %v3081, %v3096
          %v3098 = vadd.f32 %v3097, 0.112945676
          %v3099 = vmul.f32 %v3081, %v3098
          %v3100 = vadd.f32 %v3099, 0.4994258
          %v3101 = vmul.f32 %v3081, %v3100
          %v3102 = vadd.f32 %v3101, 1.0
          %v3103 = vrcp.pop %v3102
          %v3104 = vmul.f32 %v3102, %v3103
          %v3105 = vsub.f32 1.0, %v3104
          %v3106 = vmul.f32 %v3103, %v3105
          %v3107 = vadd.f32 %v3103, %v3106
          %vm3108 = vweird.f32 %v3102
          %vm3109 = vweird.f32 %v3103
          %vm3110 = vmor %vm3108, %vm3109
          %v3111 = vsel %vm3110, %v3103, %v3107
          %v3112 = vand.u32 2147483647, %v3102
          %vm3113 = vcmp.eq.f32.partialorder %v3112, 8.507059e+37
          %v3114 = vand.u32 %v3102, 2147483648
          %v3115 = vor.u32 1.1754944e-38, %v3114
          %v3116 = vsel %vm3113, %v3115, %v3111
          %v3117 = vmul.f32 %v3092, %v3116
          %v3118 = vmin.f32 %v3117, 1.0
          %v3119 = vmax.f32 %v3118, -1.0
          %v3120 = vmul.f32 %v2425, %v2425
          %v3121 = vmin.f32 16.0, %v3120
          %v3122 = vmul.f32 %v3121, 2.1237322e-06
          %v3123 = vadd.f32 %v3122, 0.00028619796
          %v3124 = vmul.f32 %v3121, %v3123
          %v3125 = vadd.f32 %v3124, 0.0036580483
          %v3126 = vmul.f32 %v3121, %v3125
          %v3127 = vadd.f32 %v3126, 0.05243302
          %v3128 = vmul.f32 %v3121, %v3127
          %v3129 = vadd.f32 %v3128, 0.18741608
          %v3130 = vmul.f32 %v3121, %v3129
          %v3131 = vadd.f32 %v3130, 1.1283791
          %v3132 = vmul.f32 %v2425, %v3131
          %v3133 = vmul.f32 %v3121, 3.8918573e-05
          %v3134 = vadd.f32 %v3133, 0.001143296
          %v3135 = vmul.f32 %v3121, %v3134
          %v3136 = vadd.f32 %v3135, 0.014752088
          %v3137 = vmul.f32 %v3121, %v3136
          %v3138 = vadd.f32 %v3137, 0.112945676
          %v3139 = vmul.f32 %v3121, %v3138
          %v3140 = vadd.f32 %v3139, 0.4994258
          %v3141 = vmul.f32 %v3121, %v3140
          %v3142 = vadd.f32 %v3141, 1.0
          %v3143 = vrcp.pop %v3142
          %v3144 = vmul.f32 %v3142, %v3143
          %v3145 = vsub.f32 1.0, %v3144
          %v3146 = vmul.f32 %v3143, %v3145
          %v3147 = vadd.f32 %v3143, %v3146
          %vm3148 = vweird.f32 %v3142
          %vm3149 = vweird.f32 %v3143
          %vm3150 = vmor %vm3148, %vm3149
          %v3151 = vsel %vm3150, %v3143, %v3147
          %v3152 = vand.u32 2147483647, %v3142
          %vm3153 = vcmp.eq.f32.partialorder %v3152, 8.507059e+37
          %v3154 = vand.u32 %v3142, 2147483648
          %v3155 = vor.u32 1.1754944e-38, %v3154
          %v3156 = vsel %vm3153, %v3155, %v3151
          %v3157 = vmul.f32 %v3132, %v3156
          %v3158 = vmin.f32 %v3157, 1.0
          %v3159 = vmax.f32 %v3158, -1.0
          %v3160 = vmul.f32 %v2426, %v2426
          %v3161 = vmin.f32 16.0, %v3160
          %v3162 = vmul.f32 %v3161, 2.1237322e-06
          %v3163 = vadd.f32 %v3162, 0.00028619796
          %v3164 = vmul.f32 %v3161, %v3163
          %v3165 = vadd.f32 %v3164, 0.0036580483
          %v3166 = vmul.f32 %v3161, %v3165
          %v3167 = vadd.f32 %v3166, 0.05243302
          %v3168 = vmul.f32 %v3161, %v3167
          %v3169 = vadd.f32 %v3168, 0.18741608
          %v3170 = vmul.f32 %v3161, %v3169
          %v3171 = vadd.f32 %v3170, 1.1283791
          %v3172 = vmul.f32 %v2426, %v3171
          %v3173 = vmul.f32 %v3161, 3.8918573e-05
          %v3174 = vadd.f32 %v3173, 0.001143296
          %v3175 = vmul.f32 %v3161, %v3174
          %v3176 = vadd.f32 %v3175, 0.014752088
          %v3177 = vmul.f32 %v3161, %v3176
          %v3178 = vadd.f32 %v3177, 0.112945676
          %v3179 = vmul.f32 %v3161, %v3178
          %v3180 = vadd.f32 %v3179, 0.4994258
          %v3181 = vmul.f32 %v3161, %v3180
          %v3182 = vadd.f32 %v3181, 1.0
          %v3183 = vrcp.pop %v3182
          %v3184 = vmul.f32 %v3182, %v3183
          %v3185 = vsub.f32 1.0, %v3184
          %v3186 = vmul.f32 %v3183, %v3185
          %v3187 = vadd.f32 %v3183, %v3186
          %vm3188 = vweird.f32 %v3182
          %vm3189 = vweird.f32 %v3183
          %vm3190 = vmor %vm3188, %vm3189
          %v3191 = vsel %vm3190, %v3183, %v3187
          %v3192 = vand.u32 2147483647, %v3182
          %vm3193 = vcmp.eq.f32.partialorder %v3192, 8.507059e+37
          %v3194 = vand.u32 %v3182, 2147483648
          %v3195 = vor.u32 1.1754944e-38, %v3194
          %v3196 = vsel %vm3193, %v3195, %v3191
          %v3197 = vmul.f32 %v3172, %v3196
          %v3198 = vmin.f32 %v3197, 1.0
          %v3199 = vmax.f32 %v3198, -1.0
          %v3200 = vmul.f32 %v2427, %v2427
          %v3201 = vmin.f32 16.0, %v3200
          %v3202 = vmul.f32 %v3201, 2.1237322e-06
          %v3203 = vadd.f32 %v3202, 0.00028619796
          %v3204 = vmul.f32 %v3201, %v3203
          %v3205 = vadd.f32 %v3204, 0.0036580483
          %v3206 = vmul.f32 %v3201, %v3205
          %v3207 = vadd.f32 %v3206, 0.05243302
          %v3208 = vmul.f32 %v3201, %v3207
          %v3209 = vadd.f32 %v3208, 0.18741608
          %v3210 = vmul.f32 %v3201, %v3209
          %v3211 = vadd.f32 %v3210, 1.1283791
          %v3212 = vmul.f32 %v2427, %v3211
          %v3213 = vmul.f32 %v3201, 3.8918573e-05
          %v3214 = vadd.f32 %v3213, 0.001143296
          %v3215 = vmul.f32 %v3201, %v3214
          %v3216 = vadd.f32 %v3215, 0.014752088
          %v3217 = vmul.f32 %v3201, %v3216
          %v3218 = vadd.f32 %v3217, 0.112945676
          %v3219 = vmul.f32 %v3201, %v3218
          %v3220 = vadd.f32 %v3219, 0.4994258
          %v3221 = vmul.f32 %v3201, %v3220
          %v3222 = vadd.f32 %v3221, 1.0
          %v3223 = vrcp.pop %v3222
          %v3224 = vmul.f32 %v3222, %v3223
          %v3225 = vsub.f32 1.0, %v3224
          %v3226 = vmul.f32 %v3223, %v3225
          %v3227 = vadd.f32 %v3223, %v3226
          %vm3228 = vweird.f32 %v3222
          %vm3229 = vweird.f32 %v3223
          %vm3230 = vmor %vm3228, %vm3229
          %v3231 = vsel %vm3230, %v3223, %v3227
          %v3232 = vand.u32 2147483647, %v3222
          %vm3233 = vcmp.eq.f32.partialorder %v3232, 8.507059e+37
          %v3234 = vand.u32 %v3222, 2147483648
          %v3235 = vor.u32 1.1754944e-38, %v3234
          %v3236 = vsel %vm3233, %v3235, %v3231
          %v3237 = vmul.f32 %v3212, %v3236
          %v3238 = vmin.f32 %v3237, 1.0
          %v3239 = vmax.f32 %v3238, -1.0
          %v3240 = vmul.f32 %v2428, %v2428
          %v3241 = vmin.f32 16.0, %v3240
          %v3242 = vmul.f32 %v3241, 2.1237322e-06
          %v3243 = vadd.f32 %v3242, 0.00028619796
          %v3244 = vmul.f32 %v3241, %v3243
          %v3245 = vadd.f32 %v3244, 0.0036580483
          %v3246 = vmul.f32 %v3241, %v3245
          %v3247 = vadd.f32 %v3246, 0.05243302
          %v3248 = vmul.f32 %v3241, %v3247
          %v3249 = vadd.f32 %v3248, 0.18741608
          %v3250 = vmul.f32 %v3241, %v3249
          %v3251 = vadd.f32 %v3250, 1.1283791
          %v3252 = vmul.f32 %v2428, %v3251
          %v3253 = vmul.f32 %v3241, 3.8918573e-05
          %v3254 = vadd.f32 %v3253, 0.001143296
          %v3255 = vmul.f32 %v3241, %v3254
          %v3256 = vadd.f32 %v3255, 0.014752088
          %v3257 = vmul.f32 %v3241, %v3256
          %v3258 = vadd.f32 %v3257, 0.112945676
          %v3259 = vmul.f32 %v3241, %v3258
          %v3260 = vadd.f32 %v3259, 0.4994258
          %v3261 = vmul.f32 %v3241, %v3260
          %v3262 = vadd.f32 %v3261, 1.0
          %v3263 = vrcp.pop %v3262
          %v3264 = vmul.f32 %v3262, %v3263
          %v3265 = vsub.f32 1.0, %v3264
          %v3266 = vmul.f32 %v3263, %v3265
          %v3267 = vadd.f32 %v3263, %v3266
          %vm3268 = vweird.f32 %v3262
          %vm3269 = vweird.f32 %v3263
          %vm3270 = vmor %vm3268, %vm3269
          %v3271 = vsel %vm3270, %v3263, %v3267
          %v3272 = vand.u32 2147483647, %v3262
          %vm3273 = vcmp.eq.f32.partialorder %v3272, 8.507059e+37
          %v3274 = vand.u32 %v3262, 2147483648
          %v3275 = vor.u32 1.1754944e-38, %v3274
          %v3276 = vsel %vm3273, %v3275, %v3271
          %v3277 = vmul.f32 %v3252, %v3276
          %v3278 = vmin.f32 %v3277, 1.0
          %v3279 = vmax.f32 %v3278, -1.0
          %v3280 = vmul.f32 %v2429, %v2429
          %v3281 = vmin.f32 16.0, %v3280
          %v3282 = vmul.f32 %v3281, 2.1237322e-06
          %v3283 = vadd.f32 %v3282, 0.00028619796
          %v3284 = vmul.f32 %v3281, %v3283
          %v3285 = vadd.f32 %v3284, 0.0036580483
          %v3286 = vmul.f32 %v3281, %v3285
          %v3287 = vadd.f32 %v3286, 0.05243302
          %v3288 = vmul.f32 %v3281, %v3287
          %v3289 = vadd.f32 %v3288, 0.18741608
          %v3290 = vmul.f32 %v3281, %v3289
          %v3291 = vadd.f32 %v3290, 1.1283791
          %v3292 = vmul.f32 %v2429, %v3291
          %v3293 = vmul.f32 %v3281, 3.8918573e-05
          %v3294 = vadd.f32 %v3293, 0.001143296
          %v3295 = vmul.f32 %v3281, %v3294
          %v3296 = vadd.f32 %v3295, 0.014752088
          %v3297 = vmul.f32 %v3281, %v3296
          %v3298 = vadd.f32 %v3297, 0.112945676
          %v3299 = vmul.f32 %v3281, %v3298
          %v3300 = vadd.f32 %v3299, 0.4994258
          %v3301 = vmul.f32 %v3281, %v3300
          %v3302 = vadd.f32 %v3301, 1.0
          %v3303 = vrcp.pop %v3302
          %v3304 = vmul.f32 %v3302, %v3303
          %v3305 = vsub.f32 1.0, %v3304
          %v3306 = vmul.f32 %v3303, %v3305
          %v3307 = vadd.f32 %v3303, %v3306
          %vm3308 = vweird.f32 %v3302
          %vm3309 = vweird.f32 %v3303
          %vm3310 = vmor %vm3308, %vm3309
          %v3311 = vsel %vm3310, %v3303, %v3307
          %v3312 = vand.u32 2147483647, %v3302
          %vm3313 = vcmp.eq.f32.partialorder %v3312, 8.507059e+37
          %v3314 = vand.u32 %v3302, 2147483648
          %v3315 = vor.u32 1.1754944e-38, %v3314
          %v3316 = vsel %vm3313, %v3315, %v3311
          %v3317 = vmul.f32 %v3292, %v3316
          %v3318 = vmin.f32 %v3317, 1.0
          %v3319 = vmax.f32 %v3318, -1.0
          %v3320 = vmul.f32 %v2430, %v2430
          %v3321 = vmin.f32 16.0, %v3320
          %v3322 = vmul.f32 %v3321, 2.1237322e-06
          %v3323 = vadd.f32 %v3322, 0.00028619796
          %v3324 = vmul.f32 %v3321, %v3323
          %v3325 = vadd.f32 %v3324, 0.0036580483
          %v3326 = vmul.f32 %v3321, %v3325
          %v3327 = vadd.f32 %v3326, 0.05243302
          %v3328 = vmul.f32 %v3321, %v3327
          %v3329 = vadd.f32 %v3328, 0.18741608
          %v3330 = vmul.f32 %v3321, %v3329
          %v3331 = vadd.f32 %v3330, 1.1283791
          %v3332 = vmul.f32 %v2430, %v3331
          %v3333 = vmul.f32 %v3321, 3.8918573e-05
          %v3334 = vadd.f32 %v3333, 0.001143296
          %v3335 = vmul.f32 %v3321, %v3334
          %v3336 = vadd.f32 %v3335, 0.014752088
          %v3337 = vmul.f32 %v3321, %v3336
          %v3338 = vadd.f32 %v3337, 0.112945676
          %v3339 = vmul.f32 %v3321, %v3338
          %v3340 = vadd.f32 %v3339, 0.4994258
          %v3341 = vmul.f32 %v3321, %v3340
          %v3342 = vadd.f32 %v3341, 1.0
          %v3343 = vrcp.pop %v3342
          %v3344 = vmul.f32 %v3342, %v3343
          %v3345 = vsub.f32 1.0, %v3344
          %v3346 = vmul.f32 %v3343, %v3345
          %v3347 = vadd.f32 %v3343, %v3346
          %vm3348 = vweird.f32 %v3342
          %vm3349 = vweird.f32 %v3343
          %vm3350 = vmor %vm3348, %vm3349
          %v3351 = vsel %vm3350, %v3343, %v3347
          %v3352 = vand.u32 2147483647, %v3342
          %vm3353 = vcmp.eq.f32.partialorder %v3352, 8.507059e+37
          %v3354 = vand.u32 %v3342, 2147483648
          %v3355 = vor.u32 1.1754944e-38, %v3354
          %v3356 = vsel %vm3353, %v3355, %v3351
          %v3357 = vmul.f32 %v3332, %v3356
          %v3358 = vmin.f32 %v3357, 1.0
          %v3359 = vmax.f32 %v3358, -1.0
          %v3360 = vmul.f32 %v2431, %v2431
          %v3361 = vmin.f32 16.0, %v3360
          %v3362 = vmul.f32 %v3361, 2.1237322e-06
          %v3363 = vadd.f32 %v3362, 0.00028619796
          %v3364 = vmul.f32 %v3361, %v3363
          %v3365 = vadd.f32 %v3364, 0.0036580483
          %v3366 = vmul.f32 %v3361, %v3365
          %v3367 = vadd.f32 %v3366, 0.05243302
          %v3368 = vmul.f32 %v3361, %v3367
          %v3369 = vadd.f32 %v3368, 0.18741608
          %v3370 = vmul.f32 %v3361, %v3369
          %v3371 = vadd.f32 %v3370, 1.1283791
          %v3372 = vmul.f32 %v2431, %v3371
          %v3373 = vmul.f32 %v3361, 3.8918573e-05
          %v3374 = vadd.f32 %v3373, 0.001143296
          %v3375 = vmul.f32 %v3361, %v3374
          %v3376 = vadd.f32 %v3375, 0.014752088
          %v3377 = vmul.f32 %v3361, %v3376
          %v3378 = vadd.f32 %v3377, 0.112945676
          %v3379 = vmul.f32 %v3361, %v3378
          %v3380 = vadd.f32 %v3379, 0.4994258
          %v3381 = vmul.f32 %v3361, %v3380
          %v3382 = vadd.f32 %v3381, 1.0
          %v3383 = vrcp.pop %v3382
          %v3384 = vmul.f32 %v3382, %v3383
          %v3385 = vsub.f32 1.0, %v3384
          %v3386 = vmul.f32 %v3383, %v3385
          %v3387 = vadd.f32 %v3383, %v3386
          %vm3388 = vweird.f32 %v3382
          %vm3389 = vweird.f32 %v3383
          %vm3390 = vmor %vm3388, %vm3389
          %v3391 = vsel %vm3390, %v3383, %v3387
          %v3392 = vand.u32 2147483647, %v3382
          %vm3393 = vcmp.eq.f32.partialorder %v3392, 8.507059e+37
          %v3394 = vand.u32 %v3382, 2147483648
          %v3395 = vor.u32 1.1754944e-38, %v3394
          %v3396 = vsel %vm3393, %v3395, %v3391
          %v3397 = vmul.f32 %v3372, %v3396
          %v3398 = vmin.f32 %v3397, 1.0
          %v3399 = vmax.f32 %v3398, -1.0
          %v3400 = vmul.f32 %v2432, %v2432
          %v3401 = vmin.f32 16.0, %v3400
          %v3402 = vmul.f32 %v3401, 2.1237322e-06
          %v3403 = vadd.f32 %v3402, 0.00028619796
          %v3404 = vmul.f32 %v3401, %v3403
          %v3405 = vadd.f32 %v3404, 0.0036580483
          %v3406 = vmul.f32 %v3401, %v3405
          %v3407 = vadd.f32 %v3406, 0.05243302
          %v3408 = vmul.f32 %v3401, %v3407
          %v3409 = vadd.f32 %v3408, 0.18741608
          %v3410 = vmul.f32 %v3401, %v3409
          %v3411 = vadd.f32 %v3410, 1.1283791
          %v3412 = vmul.f32 %v2432, %v3411
          %v3413 = vmul.f32 %v3401, 3.8918573e-05
          %v3414 = vadd.f32 %v3413, 0.001143296
          %v3415 = vmul.f32 %v3401, %v3414
          %v3416 = vadd.f32 %v3415, 0.014752088
          %v3417 = vmul.f32 %v3401, %v3416
          %v3418 = vadd.f32 %v3417, 0.112945676
          %v3419 = vmul.f32 %v3401, %v3418
          %v3420 = vadd.f32 %v3419, 0.4994258
          %v3421 = vmul.f32 %v3401, %v3420
          %v3422 = vadd.f32 %v3421, 1.0
          %v3423 = vrcp.pop %v3422
          %v3424 = vmul.f32 %v3422, %v3423
          %v3425 = vsub.f32 1.0, %v3424
          %v3426 = vmul.f32 %v3423, %v3425
          %v3427 = vadd.f32 %v3423, %v3426
          %vm3428 = vweird.f32 %v3422
          %vm3429 = vweird.f32 %v3423
          %vm3430 = vmor %vm3428, %vm3429
          %v3431 = vsel %vm3430, %v3423, %v3427
          %v3432 = vand.u32 2147483647, %v3422
          %vm3433 = vcmp.eq.f32.partialorder %v3432, 8.507059e+37
          %v3434 = vand.u32 %v3422, 2147483648
          %v3435 = vor.u32 1.1754944e-38, %v3434
          %v3436 = vsel %vm3433, %v3435, %v3431
          %v3437 = vmul.f32 %v3412, %v3436
          %v3438 = vmin.f32 %v3437, 1.0
          %v3439 = vmax.f32 %v3438, -1.0
          %v3440 = vmul.f32 %v2433, %v2433
          %v3441 = vmin.f32 16.0, %v3440
          %v3442 = vmul.f32 %v3441, 2.1237322e-06
          %v3443 = vadd.f32 %v3442, 0.00028619796
          %v3444 = vmul.f32 %v3441, %v3443
          %v3445 = vadd.f32 %v3444, 0.0036580483
          %v3446 = vmul.f32 %v3441, %v3445
          %v3447 = vadd.f32 %v3446, 0.05243302
          %v3448 = vmul.f32 %v3441, %v3447
          %v3449 = vadd.f32 %v3448, 0.18741608
          %v3450 = vmul.f32 %v3441, %v3449
          %v3451 = vadd.f32 %v3450, 1.1283791
          %v3452 = vmul.f32 %v2433, %v3451
          %v3453 = vmul.f32 %v3441, 3.8918573e-05
          %v3454 = vadd.f32 %v3453, 0.001143296
          %v3455 = vmul.f32 %v3441, %v3454
          %v3456 = vadd.f32 %v3455, 0.014752088
          %v3457 = vmul.f32 %v3441, %v3456
          %v3458 = vadd.f32 %v3457, 0.112945676
          %v3459 = vmul.f32 %v3441, %v3458
          %v3460 = vadd.f32 %v3459, 0.4994258
          %v3461 = vmul.f32 %v3441, %v3460
          %v3462 = vadd.f32 %v3461, 1.0
          %v3463 = vrcp.pop %v3462
          %v3464 = vmul.f32 %v3462, %v3463
          %v3465 = vsub.f32 1.0, %v3464
          %v3466 = vmul.f32 %v3463, %v3465
          %v3467 = vadd.f32 %v3463, %v3466
          %vm3468 = vweird.f32 %v3462
          %vm3469 = vweird.f32 %v3463
          %vm3470 = vmor %vm3468, %vm3469
          %v3471 = vsel %vm3470, %v3463, %v3467
          %v3472 = vand.u32 2147483647, %v3462
          %vm3473 = vcmp.eq.f32.partialorder %v3472, 8.507059e+37
          %v3474 = vand.u32 %v3462, 2147483648
          %v3475 = vor.u32 1.1754944e-38, %v3474
          %v3476 = vsel %vm3473, %v3475, %v3471
          %v3477 = vmul.f32 %v3452, %v3476
          %v3478 = vmin.f32 %v3477, 1.0
          %v3479 = vmax.f32 %v3478, -1.0
          %v3480 = vmul.f32 %v2434, %v2434
          %v3481 = vmin.f32 16.0, %v3480
          %v3482 = vmul.f32 %v3481, 2.1237322e-06
          %v3483 = vadd.f32 %v3482, 0.00028619796
          %v3484 = vmul.f32 %v3481, %v3483
          %v3485 = vadd.f32 %v3484, 0.0036580483
          %v3486 = vmul.f32 %v3481, %v3485
          %v3487 = vadd.f32 %v3486, 0.05243302
          %v3488 = vmul.f32 %v3481, %v3487
          %v3489 = vadd.f32 %v3488, 0.18741608
          %v3490 = vmul.f32 %v3481, %v3489
          %v3491 = vadd.f32 %v3490, 1.1283791
          %v3492 = vmul.f32 %v2434, %v3491
          %v3493 = vmul.f32 %v3481, 3.8918573e-05
          %v3494 = vadd.f32 %v3493, 0.001143296
          %v3495 = vmul.f32 %v3481, %v3494
          %v3496 = vadd.f32 %v3495, 0.014752088
          %v3497 = vmul.f32 %v3481, %v3496
          %v3498 = vadd.f32 %v3497, 0.112945676
          %v3499 = vmul.f32 %v3481, %v3498
          %v3500 = vadd.f32 %v3499, 0.4994258
          %v3501 = vmul.f32 %v3481, %v3500
          %v3502 = vadd.f32 %v3501, 1.0
          %v3503 = vrcp.pop %v3502
          %v3504 = vmul.f32 %v3502, %v3503
          %v3505 = vsub.f32 1.0, %v3504
          %v3506 = vmul.f32 %v3503, %v3505
          %v3507 = vadd.f32 %v3503, %v3506
          %vm3508 = vweird.f32 %v3502
          %vm3509 = vweird.f32 %v3503
          %vm3510 = vmor %vm3508, %vm3509
          %v3511 = vsel %vm3510, %v3503, %v3507
          %v3512 = vand.u32 2147483647, %v3502
          %vm3513 = vcmp.eq.f32.partialorder %v3512, 8.507059e+37
          %v3514 = vand.u32 %v3502, 2147483648
          %v3515 = vor.u32 1.1754944e-38, %v3514
          %v3516 = vsel %vm3513, %v3515, %v3511
          %v3517 = vmul.f32 %v3492, %v3516
          %v3518 = vmin.f32 %v3517, 1.0
          %v3519 = vmax.f32 %v3518, -1.0
          %v3520 = vmul.f32 %v2435, %v2435
          %v3521 = vmin.f32 16.0, %v3520
          %v3522 = vmul.f32 %v3521, 2.1237322e-06
          %v3523 = vadd.f32 %v3522, 0.00028619796
          %v3524 = vmul.f32 %v3521, %v3523
          %v3525 = vadd.f32 %v3524, 0.0036580483
          %v3526 = vmul.f32 %v3521, %v3525
          %v3527 = vadd.f32 %v3526, 0.05243302
          %v3528 = vmul.f32 %v3521, %v3527
          %v3529 = vadd.f32 %v3528, 0.18741608
          %v3530 = vmul.f32 %v3521, %v3529
          %v3531 = vadd.f32 %v3530, 1.1283791
          %v3532 = vmul.f32 %v2435, %v3531
          %v3533 = vmul.f32 %v3521, 3.8918573e-05
          %v3534 = vadd.f32 %v3533, 0.001143296
          %v3535 = vmul.f32 %v3521, %v3534
          %v3536 = vadd.f32 %v3535, 0.014752088
          %v3537 = vmul.f32 %v3521, %v3536
          %v3538 = vadd.f32 %v3537, 0.112945676
          %v3539 = vmul.f32 %v3521, %v3538
          %v3540 = vadd.f32 %v3539, 0.4994258
          %v3541 = vmul.f32 %v3521, %v3540
          %v3542 = vadd.f32 %v3541, 1.0
          %v3543 = vrcp.pop %v3542
          %v3544 = vmul.f32 %v3542, %v3543
          %v3545 = vsub.f32 1.0, %v3544
          %v3546 = vmul.f32 %v3543, %v3545
          %v3547 = vadd.f32 %v3543, %v3546
          %vm3548 = vweird.f32 %v3542
          %vm3549 = vweird.f32 %v3543
          %vm3550 = vmor %vm3548, %vm3549
          %v3551 = vsel %vm3550, %v3543, %v3547
          %v3552 = vand.u32 2147483647, %v3542
          %vm3553 = vcmp.eq.f32.partialorder %v3552, 8.507059e+37
          %v3554 = vand.u32 %v3542, 2147483648
          %v3555 = vor.u32 1.1754944e-38, %v3554
          %v3556 = vsel %vm3553, %v3555, %v3551
          %v3557 = vmul.f32 %v3532, %v3556
          %v3558 = vmin.f32 %v3557, 1.0
          %v3559 = vmax.f32 %v3558, -1.0
          %v3560 = vmul.f32 %v2436, %v2436
          %v3561 = vmin.f32 16.0, %v3560
          %v3562 = vmul.f32 %v3561, 2.1237322e-06
          %v3563 = vadd.f32 %v3562, 0.00028619796
          %v3564 = vmul.f32 %v3561, %v3563
          %v3565 = vadd.f32 %v3564, 0.0036580483
          %v3566 = vmul.f32 %v3561, %v3565
          %v3567 = vadd.f32 %v3566, 0.05243302
          %v3568 = vmul.f32 %v3561, %v3567
          %v3569 = vadd.f32 %v3568, 0.18741608
          %v3570 = vmul.f32 %v3561, %v3569
          %v3571 = vadd.f32 %v3570, 1.1283791
          %v3572 = vmul.f32 %v2436, %v3571
          %v3573 = vmul.f32 %v3561, 3.8918573e-05
          %v3574 = vadd.f32 %v3573, 0.001143296
          %v3575 = vmul.f32 %v3561, %v3574
          %v3576 = vadd.f32 %v3575, 0.014752088
          %v3577 = vmul.f32 %v3561, %v3576
          %v3578 = vadd.f32 %v3577, 0.112945676
          %v3579 = vmul.f32 %v3561, %v3578
          %v3580 = vadd.f32 %v3579, 0.4994258
          %v3581 = vmul.f32 %v3561, %v3580
          %v3582 = vadd.f32 %v3581, 1.0
          %v3583 = vrcp.pop %v3582
          %v3584 = vmul.f32 %v3582, %v3583
          %v3585 = vsub.f32 1.0, %v3584
          %v3586 = vmul.f32 %v3583, %v3585
          %v3587 = vadd.f32 %v3583, %v3586
          %vm3588 = vweird.f32 %v3582
          %vm3589 = vweird.f32 %v3583
          %vm3590 = vmor %vm3588, %vm3589
          %v3591 = vsel %vm3590, %v3583, %v3587
          %v3592 = vand.u32 2147483647, %v3582
          %vm3593 = vcmp.eq.f32.partialorder %v3592, 8.507059e+37
          %v3594 = vand.u32 %v3582, 2147483648
          %v3595 = vor.u32 1.1754944e-38, %v3594
          %v3596 = vsel %vm3593, %v3595, %v3591
          %v3597 = vmul.f32 %v3572, %v3596
          %v3598 = vmin.f32 %v3597, 1.0
          %v3599 = vmax.f32 %v3598, -1.0
          %v3600 = vmul.f32 %v2437, %v2437
          %v3601 = vmin.f32 16.0, %v3600
          %v3602 = vmul.f32 %v3601, 2.1237322e-06
          %v3603 = vadd.f32 %v3602, 0.00028619796
          %v3604 = vmul.f32 %v3601, %v3603
          %v3605 = vadd.f32 %v3604, 0.0036580483
          %v3606 = vmul.f32 %v3601, %v3605
          %v3607 = vadd.f32 %v3606, 0.05243302
          %v3608 = vmul.f32 %v3601, %v3607
          %v3609 = vadd.f32 %v3608, 0.18741608
          %v3610 = vmul.f32 %v3601, %v3609
          %v3611 = vadd.f32 %v3610, 1.1283791
          %v3612 = vmul.f32 %v2437, %v3611
          %v3613 = vmul.f32 %v3601, 3.8918573e-05
          %v3614 = vadd.f32 %v3613, 0.001143296
          %v3615 = vmul.f32 %v3601, %v3614
          %v3616 = vadd.f32 %v3615, 0.014752088
          %v3617 = vmul.f32 %v3601, %v3616
          %v3618 = vadd.f32 %v3617, 0.112945676
          %v3619 = vmul.f32 %v3601, %v3618
          %v3620 = vadd.f32 %v3619, 0.4994258
          %v3621 = vmul.f32 %v3601, %v3620
          %v3622 = vadd.f32 %v3621, 1.0
          %v3623 = vrcp.pop %v3622
          %v3624 = vmul.f32 %v3622, %v3623
          %v3625 = vsub.f32 1.0, %v3624
          %v3626 = vmul.f32 %v3623, %v3625
          %v3627 = vadd.f32 %v3623, %v3626
          %vm3628 = vweird.f32 %v3622
          %vm3629 = vweird.f32 %v3623
          %vm3630 = vmor %vm3628, %vm3629
          %v3631 = vsel %vm3630, %v3623, %v3627
          %v3632 = vand.u32 2147483647, %v3622
          %vm3633 = vcmp.eq.f32.partialorder %v3632, 8.507059e+37
          %v3634 = vand.u32 %v3622, 2147483648
          %v3635 = vor.u32 1.1754944e-38, %v3634
          %v3636 = vsel %vm3633, %v3635, %v3631
          %v3637 = vmul.f32 %v3612, %v3636
          %v3638 = vmin.f32 %v3637, 1.0
          %v3639 = vmax.f32 %v3638, -1.0
          %v3640 = vmul.f32 %v2438, %v2438
          %v3641 = vmin.f32 16.0, %v3640
          %v3642 = vmul.f32 %v3641, 2.1237322e-06
          %v3643 = vadd.f32 %v3642, 0.00028619796
          %v3644 = vmul.f32 %v3641, %v3643
          %v3645 = vadd.f32 %v3644, 0.0036580483
          %v3646 = vmul.f32 %v3641, %v3645
          %v3647 = vadd.f32 %v3646, 0.05243302
          %v3648 = vmul.f32 %v3641, %v3647
          %v3649 = vadd.f32 %v3648, 0.18741608
          %v3650 = vmul.f32 %v3641, %v3649
          %v3651 = vadd.f32 %v3650, 1.1283791
          %v3652 = vmul.f32 %v2438, %v3651
          %v3653 = vmul.f32 %v3641, 3.8918573e-05
          %v3654 = vadd.f32 %v3653, 0.001143296
          %v3655 = vmul.f32 %v3641, %v3654
          %v3656 = vadd.f32 %v3655, 0.014752088
          %v3657 = vmul.f32 %v3641, %v3656
          %v3658 = vadd.f32 %v3657, 0.112945676
          %v3659 = vmul.f32 %v3641, %v3658
          %v3660 = vadd.f32 %v3659, 0.4994258
          %v3661 = vmul.f32 %v3641, %v3660
          %v3662 = vadd.f32 %v3661, 1.0
          %v3663 = vrcp.pop %v3662
          %v3664 = vmul.f32 %v3662, %v3663
          %v3665 = vsub.f32 1.0, %v3664
          %v3666 = vmul.f32 %v3663, %v3665
          %v3667 = vadd.f32 %v3663, %v3666
          %vm3668 = vweird.f32 %v3662
          %vm3669 = vweird.f32 %v3663
          %vm3670 = vmor %vm3668, %vm3669
          %v3671 = vsel %vm3670, %v3663, %v3667
          %v3672 = vand.u32 2147483647, %v3662
          %vm3673 = vcmp.eq.f32.partialorder %v3672, 8.507059e+37
          %v3674 = vand.u32 %v3662, 2147483648
          %v3675 = vor.u32 1.1754944e-38, %v3674
          %v3676 = vsel %vm3673, %v3675, %v3671
          %v3677 = vmul.f32 %v3652, %v3676
          %v3678 = vmin.f32 %v3677, 1.0
          %v3679 = vmax.f32 %v3678, -1.0
          %v3680 = vmul.f32 %v2439, %v2439
          %v3681 = vmin.f32 16.0, %v3680
          %v3682 = vmul.f32 %v3681, 2.1237322e-06
          %v3683 = vadd.f32 %v3682, 0.00028619796
          %v3684 = vmul.f32 %v3681, %v3683
          %v3685 = vadd.f32 %v3684, 0.0036580483
          %v3686 = vmul.f32 %v3681, %v3685
          %v3687 = vadd.f32 %v3686, 0.05243302
          %v3688 = vmul.f32 %v3681, %v3687
          %v3689 = vadd.f32 %v3688, 0.18741608
          %v3690 = vmul.f32 %v3681, %v3689
          %v3691 = vadd.f32 %v3690, 1.1283791
          %v3692 = vmul.f32 %v2439, %v3691
          %v3693 = vmul.f32 %v3681, 3.8918573e-05
          %v3694 = vadd.f32 %v3693, 0.001143296
          %v3695 = vmul.f32 %v3681, %v3694
          %v3696 = vadd.f32 %v3695, 0.014752088
          %v3697 = vmul.f32 %v3681, %v3696
          %v3698 = vadd.f32 %v3697, 0.112945676
          %v3699 = vmul.f32 %v3681, %v3698
          %v3700 = vadd.f32 %v3699, 0.4994258
          %v3701 = vmul.f32 %v3681, %v3700
          %v3702 = vadd.f32 %v3701, 1.0
          %v3703 = vrcp.pop %v3702
          %v3704 = vmul.f32 %v3702, %v3703
          %v3705 = vsub.f32 1.0, %v3704
          %v3706 = vmul.f32 %v3703, %v3705
          %v3707 = vadd.f32 %v3703, %v3706
          %vm3708 = vweird.f32 %v3702
          %vm3709 = vweird.f32 %v3703
          %vm3710 = vmor %vm3708, %vm3709
          %v3711 = vsel %vm3710, %v3703, %v3707
          %v3712 = vand.u32 2147483647, %v3702
          %vm3713 = vcmp.eq.f32.partialorder %v3712, 8.507059e+37
          %v3714 = vand.u32 %v3702, 2147483648
          %v3715 = vor.u32 1.1754944e-38, %v3714
          %v3716 = vsel %vm3713, %v3715, %v3711
          %v3717 = vmul.f32 %v3692, %v3716
          %v3718 = vmin.f32 %v3717, 1.0
          %v3719 = vmax.f32 %v3718, -1.0
          %v3720 = vadd.f32 %v2479, 1.0
          %v3721 = vadd.f32 %v2519, 1.0
          %v3722 = vadd.f32 %v2559, 1.0
          %v3723 = vadd.f32 %v2599, 1.0
          %v3724 = vadd.f32 %v2639, 1.0
          %v3725 = vadd.f32 %v2679, 1.0
          %v3726 = vadd.f32 %v2719, 1.0
          %v3727 = vadd.f32 %v2759, 1.0
          %v3728 = vadd.f32 %v2799, 1.0
          %v3729 = vadd.f32 %v2839, 1.0
          %v3730 = vadd.f32 %v2879, 1.0
          %v3731 = vadd.f32 %v2919, 1.0
          %v3732 = vadd.f32 %v2959, 1.0
          %v3733 = vadd.f32 %v2999, 1.0
          %v3734 = vadd.f32 %v3039, 1.0
          %v3735 = vadd.f32 %v3079, 1.0
          %v3736 = vadd.f32 %v3119, 1.0
          %v3737 = vadd.f32 %v3159, 1.0
          %v3738 = vadd.f32 %v3199, 1.0
          %v3739 = vadd.f32 %v3239, 1.0
          %v3740 = vadd.f32 %v3279, 1.0
          %v3741 = vadd.f32 %v3319, 1.0
          %v3742 = vadd.f32 %v3359, 1.0
          %v3743 = vadd.f32 %v3399, 1.0
          %v3744 = vadd.f32 %v3439, 1.0
          %v3745 = vadd.f32 %v3479, 1.0
          %v3746 = vadd.f32 %v3519, 1.0
          %v3747 = vadd.f32 %v3559, 1.0
          %v3748 = vadd.f32 %v3599, 1.0
          %v3749 = vadd.f32 %v3639, 1.0
          %v3750 = vadd.f32 %v3679, 1.0
          %v3751 = vadd.f32 %v3719, 1.0
          %v3752 = vmul.f32 %v2376, %v3720
          %v3753 = vmul.f32 %v2377, %v3721
          %v3754 = vmul.f32 %v2378, %v3722
          %v3755 = vmul.f32 %v2379, %v3723
          %v3756 = vmul.f32 %v2380, %v3724
          %v3757 = vmul.f32 %v2381, %v3725
          %v3758 = vmul.f32 %v2382, %v3726
          %v3759 = vmul.f32 %v2383, %v3727
          %v3760 = vmul.f32 %v2384, %v3728
          %v3761 = vmul.f32 %v2385, %v3729
          %v3762 = vmul.f32 %v2386, %v3730
          %v3763 = vmul.f32 %v2387, %v3731
          %v3764 = vmul.f32 %v2388, %v3732
          %v3765 = vmul.f32 %v2389, %v3733
          %v3766 = vmul.f32 %v2390, %v3734
          %v3767 = vmul.f32 %v2391, %v3735
          %v3768 = vmul.f32 %v2392, %v3736
          %v3769 = vmul.f32 %v2393, %v3737
          %v3770 = vmul.f32 %v2394, %v3738
          %v3771 = vmul.f32 %v2395, %v3739
          %v3772 = vmul.f32 %v2396, %v3740
          %v3773 = vmul.f32 %v2397, %v3741
          %v3774 = vmul.f32 %v2398, %v3742
          %v3775 = vmul.f32 %v2399, %v3743
          %v3776 = vmul.f32 %v2400, %v3744
          %v3777 = vmul.f32 %v2401, %v3745
          %v3778 = vmul.f32 %v2402, %v3746
          %v3779 = vmul.f32 %v2403, %v3747
          %v3780 = vmul.f32 %v2404, %v3748
          %v3781 = vmul.f32 %v2405, %v3749
          %v3782 = vmul.f32 %v2406, %v3750
          %v3783 = vmul.f32 %v2407, %v3751
          %v3784 = vld [vmem:[#allocation11] sm:$0xff]
          %v3785 = vld [vmem:[#allocation11 + $0x8] sm:$0xff]
          %v3786 = vld [vmem:[#allocation11 + $0x10] sm:$0xff]
          %v3787 = vld [vmem:[#allocation11 + $0x18] sm:$0xff]
          %v3788 = vld [vmem:[#allocation11 + $0x20] sm:$0xff]
          %v3789 = vld [vmem:[#allocation11 + $0x28] sm:$0xff]
          %v3790 = vld [vmem:[#allocation11 + $0x30] sm:$0xff]
          %v3791 = vld [vmem:[#allocation11 + $0x38] sm:$0xff]
          %v3792 = vld [vmem:[#allocation11 + $0x40] sm:$0xff]
          %v3793 = vld [vmem:[#allocation11 + $0x48] sm:$0xff]
          %v3794 = vld [vmem:[#allocation11 + $0x50] sm:$0xff]
          %v3795 = vld [vmem:[#allocation11 + $0x58] sm:$0xff]
          %v3796 = vld [vmem:[#allocation11 + $0x60] sm:$0xff]
          %v3797 = vld [vmem:[#allocation11 + $0x68] sm:$0xff]
          %v3798 = vld [vmem:[#allocation11 + $0x70] sm:$0xff]
          %v3799 = vld [vmem:[#allocation11 + $0x78] sm:$0xff]
          %v3800 = vld [vmem:[#allocation11 + $0x80] sm:$0xff]
          %v3801 = vld [vmem:[#allocation11 + $0x88] sm:$0xff]
          %v3802 = vld [vmem:[#allocation11 + $0x90] sm:$0xff]
          %v3803 = vld [vmem:[#allocation11 + $0x98] sm:$0xff]
          %v3804 = vld [vmem:[#allocation11 + $0xa0] sm:$0xff]
          %v3805 = vld [vmem:[#allocation11 + $0xa8] sm:$0xff]
          %v3806 = vld [vmem:[#allocation11 + $0xb0] sm:$0xff]
          %v3807 = vld [vmem:[#allocation11 + $0xb8] sm:$0xff]
          %v3808 = vld [vmem:[#allocation11 + $0xc0] sm:$0xff]
          %v3809 = vld [vmem:[#allocation11 + $0xc8] sm:$0xff]
          %v3810 = vld [vmem:[#allocation11 + $0xd0] sm:$0xff]
          %v3811 = vld [vmem:[#allocation11 + $0xd8] sm:$0xff]
          %v3812 = vld [vmem:[#allocation11 + $0xe0] sm:$0xff]
          %v3813 = vld [vmem:[#allocation11 + $0xe8] sm:$0xff]
          %v3814 = vld [vmem:[#allocation11 + $0xf0] sm:$0xff]
          %v3815 = vld [vmem:[#allocation11 + $0xf8] sm:$0xff]
          %v3816 = vld [vmem:[%s6] sm:$0x1]
          %v3818 = vperm.slane %v3816, 0
          %3820 = vmatpush.msra.mxu0 %v3799
          %3821 = vmatpush.msra.mxu0 %v3798
          %3822 = vmatpush.msra.mxu0 %v3797
          %3823 = vmatpush.msra.mxu0 %v3796
          %3824 = vmatpush.msra.mxu0 %v3795
          %3825 = vmatpush.msra.mxu0 %v3794
          %3826 = vmatpush.msra.mxu0 %v3793
          %3827 = vmatpush.msra.mxu0 %v3792
          %3828 = vmatpush.msra.mxu0 %v3791
          %3829 = vmatpush.msra.mxu0 %v3790
          %3830 = vmatpush.msra.mxu0 %v3789
          %3831 = vmatpush.msra.mxu0 %v3788
          %3832 = vmatpush.msra.mxu0 %v3787
          %3833 = vmatpush.msra.mxu0 %v3786
          %3834 = vmatpush.msra.mxu0 %v3785
          %3835 = vmatpush.msra.mxu0 %v3784
          %3836 = vmatmul.f32.gmra.mxu0 %v3752
          %v3837 = vpop.f32.mrf.mxu0
          %v3838 = vadd.f32 %v3818, %v3837
          %3839 = vmatmul.f32.gmra.mxu0 %v3754
          %v3840 = vpop.f32.mrf.mxu0
          %v3841 = vadd.f32 %v3818, %v3840
          %3842 = vmatmul.f32.gmra.mxu0 %v3756
          %v3843 = vpop.f32.mrf.mxu0
          %v3844 = vadd.f32 %v3818, %v3843
          %3845 = vmatmul.f32.gmra.mxu0 %v3758
          %v3846 = vpop.f32.mrf.mxu0
          %v3847 = vadd.f32 %v3818, %v3846
          %3848 = vmatmul.f32.gmra.mxu0 %v3760
          %v3849 = vpop.f32.mrf.mxu0
          %v3850 = vadd.f32 %v3818, %v3849
          %3851 = vmatmul.f32.gmra.mxu0 %v3762
          %v3852 = vpop.f32.mrf.mxu0
          %v3853 = vadd.f32 %v3818, %v3852
          %3854 = vmatmul.f32.gmra.mxu0 %v3764
          %v3855 = vpop.f32.mrf.mxu0
          %v3856 = vadd.f32 %v3818, %v3855
          %3857 = vmatmul.f32.gmra.mxu0 %v3766
          %v3858 = vpop.f32.mrf.mxu0
          %v3859 = vadd.f32 %v3818, %v3858
          %3860 = vmatmul.f32.gmra.mxu0 %v3768
          %v3861 = vpop.f32.mrf.mxu0
          %v3862 = vadd.f32 %v3818, %v3861
          %3863 = vmatmul.f32.gmra.mxu0 %v3770
          %v3864 = vpop.f32.mrf.mxu0
          %v3865 = vadd.f32 %v3818, %v3864
          %3866 = vmatmul.f32.gmra.mxu0 %v3772
          %v3867 = vpop.f32.mrf.mxu0
          %v3868 = vadd.f32 %v3818, %v3867
          %3869 = vmatmul.f32.gmra.mxu0 %v3774
          %v3870 = vpop.f32.mrf.mxu0
          %v3871 = vadd.f32 %v3818, %v3870
          %3872 = vmatmul.f32.gmra.mxu0 %v3776
          %v3873 = vpop.f32.mrf.mxu0
          %v3874 = vadd.f32 %v3818, %v3873
          %3875 = vmatmul.f32.gmra.mxu0 %v3778
          %v3876 = vpop.f32.mrf.mxu0
          %v3877 = vadd.f32 %v3818, %v3876
          %3878 = vmatmul.f32.gmra.mxu0 %v3780
          %v3879 = vpop.f32.mrf.mxu0
          %v3880 = vadd.f32 %v3818, %v3879
          %3881 = vmatmul.f32.gmra.mxu0 %v3782
          %v3882 = vpop.f32.mrf.mxu0
          %v3883 = vadd.f32 %v3818, %v3882
          %3884 = vdwg.mxu0
          %3885 = vmatpush.msra.mxu0 %v3815
          %3886 = vmatpush.msra.mxu0 %v3814
          %3887 = vmatpush.msra.mxu0 %v3813
          %3888 = vmatpush.msra.mxu0 %v3812
          %3889 = vmatpush.msra.mxu0 %v3811
          %3890 = vmatpush.msra.mxu0 %v3810
          %3891 = vmatpush.msra.mxu0 %v3809
          %3892 = vmatpush.msra.mxu0 %v3808
          %3893 = vmatpush.msra.mxu0 %v3807
          %3894 = vmatpush.msra.mxu0 %v3806
          %3895 = vmatpush.msra.mxu0 %v3805
          %3896 = vmatpush.msra.mxu0 %v3804
          %3897 = vmatpush.msra.mxu0 %v3803
          %3898 = vmatpush.msra.mxu0 %v3802
          %3899 = vmatpush.msra.mxu0 %v3801
          %3900 = vmatpush.msra.mxu0 %v3800
          %3901 = vmatmul.f32.gmra.mxu0 %v3753
          %v3902 = vpop.f32.mrf.mxu0
          %v3903 = vadd.f32 %v3838, %v3902
          %3904 = vmatmul.f32.gmra.mxu0 %v3755
          %v3905 = vpop.f32.mrf.mxu0
          %v3906 = vadd.f32 %v3841, %v3905
          %3907 = vmatmul.f32.gmra.mxu0 %v3757
          %v3908 = vpop.f32.mrf.mxu0
          %v3909 = vadd.f32 %v3844, %v3908
          %3910 = vmatmul.f32.gmra.mxu0 %v3759
          %v3911 = vpop.f32.mrf.mxu0
          %v3912 = vadd.f32 %v3847, %v3911
          %3913 = vmatmul.f32.gmra.mxu0 %v3761
          %v3914 = vpop.f32.mrf.mxu0
          %v3915 = vadd.f32 %v3850, %v3914
          %3916 = vmatmul.f32.gmra.mxu0 %v3763
          %v3917 = vpop.f32.mrf.mxu0
          %v3918 = vadd.f32 %v3853, %v3917
          %3919 = vmatmul.f32.gmra.mxu0 %v3765
          %v3920 = vpop.f32.mrf.mxu0
          %v3921 = vadd.f32 %v3856, %v3920
          %3922 = vmatmul.f32.gmra.mxu0 %v3767
          %v3923 = vpop.f32.mrf.mxu0
          %v3924 = vadd.f32 %v3859, %v3923
          %3925 = vmatmul.f32.gmra.mxu0 %v3769
          %v3926 = vpop.f32.mrf.mxu0
          %v3927 = vadd.f32 %v3862, %v3926
          %3928 = vmatmul.f32.gmra.mxu0 %v3771
          %v3929 = vpop.f32.mrf.mxu0
          %v3930 = vadd.f32 %v3865, %v3929
          %3931 = vmatmul.f32.gmra.mxu0 %v3773
          %v3932 = vpop.f32.mrf.mxu0
          %v3933 = vadd.f32 %v3868, %v3932
          %3934 = vmatmul.f32.gmra.mxu0 %v3775
          %v3935 = vpop.f32.mrf.mxu0
          %v3936 = vadd.f32 %v3871, %v3935
          %3937 = vmatmul.f32.gmra.mxu0 %v3777
          %v3938 = vpop.f32.mrf.mxu0
          %v3939 = vadd.f32 %v3874, %v3938
          %3940 = vmatmul.f32.gmra.mxu0 %v3779
          %v3941 = vpop.f32.mrf.mxu0
          %v3942 = vadd.f32 %v3877, %v3941
          %3943 = vmatmul.f32.gmra.mxu0 %v3781
          %v3944 = vpop.f32.mrf.mxu0
          %v3945 = vadd.f32 %v3880, %v3944
          %3946 = vmatmul.f32.gmra.mxu0 %v3783
          %v3947 = vpop.f32.mrf.mxu0
          %v3948 = vadd.f32 %v3883, %v3947
          %3949 = vdwg.mxu0
          %v3950 = vmul.f32 %v3903, %v3903
          %v3951 = vmul.f32 %v3906, %v3906
          %v3952 = vmul.f32 %v3909, %v3909
          %v3953 = vmul.f32 %v3912, %v3912
          %v3954 = vmul.f32 %v3915, %v3915
          %v3955 = vmul.f32 %v3918, %v3918
          %v3956 = vmul.f32 %v3921, %v3921
          %v3957 = vmul.f32 %v3924, %v3924
          %v3958 = vmul.f32 %v3927, %v3927
          %v3959 = vmul.f32 %v3930, %v3930
          %v3960 = vmul.f32 %v3933, %v3933
          %v3961 = vmul.f32 %v3936, %v3936
          %v3962 = vmul.f32 %v3939, %v3939
          %v3963 = vmul.f32 %v3942, %v3942
          %v3964 = vmul.f32 %v3945, %v3945
          %v3965 = vmul.f32 %v3948, %v3948
          %3966 = vadd.xlane.f32.xlu0 %v3950
          %v3967 = vpop.xlane.xlu0 %3966
          %3968 = vadd.xlane.f32.xlu0 %v3951
          %v3969 = vpop.xlane.xlu0 %3968
          %3970 = vadd.xlane.f32.xlu0 %v3952
          %v3971 = vpop.xlane.xlu0 %3970
          %3972 = vadd.xlane.f32.xlu0 %v3953
          %v3973 = vpop.xlane.xlu0 %3972
          %3974 = vadd.xlane.f32.xlu0 %v3954
          %v3975 = vpop.xlane.xlu0 %3974
          %3976 = vadd.xlane.f32.xlu0 %v3955
          %v3977 = vpop.xlane.xlu0 %3976
          %3978 = vadd.xlane.f32.xlu0 %v3956
          %v3979 = vpop.xlane.xlu0 %3978
          %3980 = vadd.xlane.f32.xlu0 %v3957
          %v3981 = vpop.xlane.xlu0 %3980
          %3982 = vadd.xlane.f32.xlu0 %v3958
          %v3983 = vpop.xlane.xlu0 %3982
          %3984 = vadd.xlane.f32.xlu0 %v3959
          %v3985 = vpop.xlane.xlu0 %3984
          %3986 = vadd.xlane.f32.xlu0 %v3960
          %v3987 = vpop.xlane.xlu0 %3986
          %3988 = vadd.xlane.f32.xlu0 %v3961
          %v3989 = vpop.xlane.xlu0 %3988
          %3990 = vadd.xlane.f32.xlu0 %v3962
          %v3991 = vpop.xlane.xlu0 %3990
          %3992 = vadd.xlane.f32.xlu0 %v3963
          %v3993 = vpop.xlane.xlu0 %3992
          %3994 = vadd.xlane.f32.xlu0 %v3964
          %v3995 = vpop.xlane.xlu0 %3994
          %3996 = vadd.xlane.f32.xlu0 %v3965
          %v3997 = vpop.xlane.xlu0 %3996
          %v3998 = vmax.f32 %v3967, 1e-24
          %v3999 = vmax.f32 %v3969, 1e-24
          %v4000 = vmax.f32 %v3971, 1e-24
          %v4001 = vmax.f32 %v3973, 1e-24
          %v4002 = vmax.f32 %v3975, 1e-24
          %v4003 = vmax.f32 %v3977, 1e-24
          %v4004 = vmax.f32 %v3979, 1e-24
          %v4005 = vmax.f32 %v3981, 1e-24
          %v4006 = vmax.f32 %v3983, 1e-24
          %v4007 = vmax.f32 %v3985, 1e-24
          %v4008 = vmax.f32 %v3987, 1e-24
          %v4009 = vmax.f32 %v3989, 1e-24
          %v4010 = vmax.f32 %v3991, 1e-24
          %v4011 = vmax.f32 %v3993, 1e-24
          %v4012 = vmax.f32 %v3995, 1e-24
          %v4013 = vmax.f32 %v3997, 1e-24
          %v4014 = vrsqrt.pop %v3998
          %v4015 = vmul.f32 %v4014, %v3998
          %v4016 = vmul.f32 %v4015, %v4014
          %v4017 = vmul.f32 0.5, %v4016
          %v4018 = vsub.f32 1.5, %v4017
          %v4019 = vmul.f32 %v4014, %v4018
          %vm4020 = vweird.f32 %v3998
          %vm4021 = vweird.f32 %v4014
          %vm4022 = vmor %vm4020, %vm4021
          %v4023 = vsel %vm4022, %v4014, %v4019
          %v4024 = vrsqrt.pop %v3999
          %v4025 = vmul.f32 %v4024, %v3999
          %v4026 = vmul.f32 %v4025, %v4024
          %v4027 = vmul.f32 0.5, %v4026
          %v4028 = vsub.f32 1.5, %v4027
          %v4029 = vmul.f32 %v4024, %v4028
          %vm4030 = vweird.f32 %v3999
          %vm4031 = vweird.f32 %v4024
          %vm4032 = vmor %vm4030, %vm4031
          %v4033 = vsel %vm4032, %v4024, %v4029
          %v4034 = vrsqrt.pop %v4000
          %v4035 = vmul.f32 %v4034, %v4000
          %v4036 = vmul.f32 %v4035, %v4034
          %v4037 = vmul.f32 0.5, %v4036
          %v4038 = vsub.f32 1.5, %v4037
          %v4039 = vmul.f32 %v4034, %v4038
          %vm4040 = vweird.f32 %v4000
          %vm4041 = vweird.f32 %v4034
          %vm4042 = vmor %vm4040, %vm4041
          %v4043 = vsel %vm4042, %v4034, %v4039
          %v4044 = vrsqrt.pop %v4001
          %v4045 = vmul.f32 %v4044, %v4001
          %v4046 = vmul.f32 %v4045, %v4044
          %v4047 = vmul.f32 0.5, %v4046
          %v4048 = vsub.f32 1.5, %v4047
          %v4049 = vmul.f32 %v4044, %v4048
          %vm4050 = vweird.f32 %v4001
          %vm4051 = vweird.f32 %v4044
          %vm4052 = vmor %vm4050, %vm4051
          %v4053 = vsel %vm4052, %v4044, %v4049
          %v4054 = vrsqrt.pop %v4002
          %v4055 = vmul.f32 %v4054, %v4002
          %v4056 = vmul.f32 %v4055, %v4054
          %v4057 = vmul.f32 0.5, %v4056
          %v4058 = vsub.f32 1.5, %v4057
          %v4059 = vmul.f32 %v4054, %v4058
          %vm4060 = vweird.f32 %v4002
          %vm4061 = vweird.f32 %v4054
          %vm4062 = vmor %vm4060, %vm4061
          %v4063 = vsel %vm4062, %v4054, %v4059
          %v4064 = vrsqrt.pop %v4003
          %v4065 = vmul.f32 %v4064, %v4003
          %v4066 = vmul.f32 %v4065, %v4064
          %v4067 = vmul.f32 0.5, %v4066
          %v4068 = vsub.f32 1.5, %v4067
          %v4069 = vmul.f32 %v4064, %v4068
          %vm4070 = vweird.f32 %v4003
          %vm4071 = vweird.f32 %v4064
          %vm4072 = vmor %vm4070, %vm4071
          %v4073 = vsel %vm4072, %v4064, %v4069
          %v4074 = vrsqrt.pop %v4004
          %v4075 = vmul.f32 %v4074, %v4004
          %v4076 = vmul.f32 %v4075, %v4074
          %v4077 = vmul.f32 0.5, %v4076
          %v4078 = vsub.f32 1.5, %v4077
          %v4079 = vmul.f32 %v4074, %v4078
          %vm4080 = vweird.f32 %v4004
          %vm4081 = vweird.f32 %v4074
          %vm4082 = vmor %vm4080, %vm4081
          %v4083 = vsel %vm4082, %v4074, %v4079
          %v4084 = vrsqrt.pop %v4005
          %v4085 = vmul.f32 %v4084, %v4005
          %v4086 = vmul.f32 %v4085, %v4084
          %v4087 = vmul.f32 0.5, %v4086
          %v4088 = vsub.f32 1.5, %v4087
          %v4089 = vmul.f32 %v4084, %v4088
          %vm4090 = vweird.f32 %v4005
          %vm4091 = vweird.f32 %v4084
          %vm4092 = vmor %vm4090, %vm4091
          %v4093 = vsel %vm4092, %v4084, %v4089
          %v4094 = vrsqrt.pop %v4006
          %v4095 = vmul.f32 %v4094, %v4006
          %v4096 = vmul.f32 %v4095, %v4094
          %v4097 = vmul.f32 0.5, %v4096
          %v4098 = vsub.f32 1.5, %v4097
          %v4099 = vmul.f32 %v4094, %v4098
          %vm4100 = vweird.f32 %v4006
          %vm4101 = vweird.f32 %v4094
          %vm4102 = vmor %vm4100, %vm4101
          %v4103 = vsel %vm4102, %v4094, %v4099
          %v4104 = vrsqrt.pop %v4007
          %v4105 = vmul.f32 %v4104, %v4007
          %v4106 = vmul.f32 %v4105, %v4104
          %v4107 = vmul.f32 0.5, %v4106
          %v4108 = vsub.f32 1.5, %v4107
          %v4109 = vmul.f32 %v4104, %v4108
          %vm4110 = vweird.f32 %v4007
          %vm4111 = vweird.f32 %v4104
          %vm4112 = vmor %vm4110, %vm4111
          %v4113 = vsel %vm4112, %v4104, %v4109
          %v4114 = vrsqrt.pop %v4008
          %v4115 = vmul.f32 %v4114, %v4008
          %v4116 = vmul.f32 %v4115, %v4114
          %v4117 = vmul.f32 0.5, %v4116
          %v4118 = vsub.f32 1.5, %v4117
          %v4119 = vmul.f32 %v4114, %v4118
          %vm4120 = vweird.f32 %v4008
          %vm4121 = vweird.f32 %v4114
          %vm4122 = vmor %vm4120, %vm4121
          %v4123 = vsel %vm4122, %v4114, %v4119
          %v4124 = vrsqrt.pop %v4009
          %v4125 = vmul.f32 %v4124, %v4009
          %v4126 = vmul.f32 %v4125, %v4124
          %v4127 = vmul.f32 0.5, %v4126
          %v4128 = vsub.f32 1.5, %v4127
          %v4129 = vmul.f32 %v4124, %v4128
          %vm4130 = vweird.f32 %v4009
          %vm4131 = vweird.f32 %v4124
          %vm4132 = vmor %vm4130, %vm4131
          %v4133 = vsel %vm4132, %v4124, %v4129
          %v4134 = vrsqrt.pop %v4010
          %v4135 = vmul.f32 %v4134, %v4010
          %v4136 = vmul.f32 %v4135, %v4134
          %v4137 = vmul.f32 0.5, %v4136
          %v4138 = vsub.f32 1.5, %v4137
          %v4139 = vmul.f32 %v4134, %v4138
          %vm4140 = vweird.f32 %v4010
          %vm4141 = vweird.f32 %v4134
          %vm4142 = vmor %vm4140, %vm4141
          %v4143 = vsel %vm4142, %v4134, %v4139
          %v4144 = vrsqrt.pop %v4011
          %v4145 = vmul.f32 %v4144, %v4011
          %v4146 = vmul.f32 %v4145, %v4144
          %v4147 = vmul.f32 0.5, %v4146
          %v4148 = vsub.f32 1.5, %v4147
          %v4149 = vmul.f32 %v4144, %v4148
          %vm4150 = vweird.f32 %v4011
          %vm4151 = vweird.f32 %v4144
          %vm4152 = vmor %vm4150, %vm4151
          %v4153 = vsel %vm4152, %v4144, %v4149
          %v4154 = vrsqrt.pop %v4012
          %v4155 = vmul.f32 %v4154, %v4012
          %v4156 = vmul.f32 %v4155, %v4154
          %v4157 = vmul.f32 0.5, %v4156
          %v4158 = vsub.f32 1.5, %v4157
          %v4159 = vmul.f32 %v4154, %v4158
          %vm4160 = vweird.f32 %v4012
          %vm4161 = vweird.f32 %v4154
          %vm4162 = vmor %vm4160, %vm4161
          %v4163 = vsel %vm4162, %v4154, %v4159
          %v4164 = vrsqrt.pop %v4013
          %v4165 = vmul.f32 %v4164, %v4013
          %v4166 = vmul.f32 %v4165, %v4164
          %v4167 = vmul.f32 0.5, %v4166
          %v4168 = vsub.f32 1.5, %v4167
          %v4169 = vmul.f32 %v4164, %v4168
          %vm4170 = vweird.f32 %v4013
          %vm4171 = vweird.f32 %v4164
          %vm4172 = vmor %vm4170, %vm4171
          %v4173 = vsel %vm4172, %v4164, %v4169
          %v4174 = vmul.f32 %v3903, %v4023
          %v4175 = vmul.f32 %v3906, %v4033
          %v4176 = vmul.f32 %v3909, %v4043
          %v4177 = vmul.f32 %v3912, %v4053
          %v4178 = vmul.f32 %v3915, %v4063
          %v4179 = vmul.f32 %v3918, %v4073
          %v4180 = vmul.f32 %v3921, %v4083
          %v4181 = vmul.f32 %v3924, %v4093
          %v4182 = vmul.f32 %v3927, %v4103
          %v4183 = vmul.f32 %v3930, %v4113
          %v4184 = vmul.f32 %v3933, %v4123
          %v4185 = vmul.f32 %v3936, %v4133
          %v4186 = vmul.f32 %v3939, %v4143
          %v4187 = vmul.f32 %v3942, %v4153
          %v4188 = vmul.f32 %v3945, %v4163
          %v4189 = vmul.f32 %v3948, %v4173
          %4190 = vst [vmem:[#allocation2] sm:$0xff] %v4174
          %4191 = vst [vmem:[#allocation2 + $0x8] sm:$0xff] %v4175
          %4192 = vst [vmem:[#allocation2 + $0x10] sm:$0xff] %v4176
          %4193 = vst [vmem:[#allocation2 + $0x18] sm:$0xff] %v4177
          %4194 = vst [vmem:[#allocation2 + $0x20] sm:$0xff] %v4178
          %4195 = vst [vmem:[#allocation2 + $0x28] sm:$0xff] %v4179
          %4196 = vst [vmem:[#allocation2 + $0x30] sm:$0xff] %v4180
          %4197 = vst [vmem:[#allocation2 + $0x38] sm:$0xff] %v4181
          %4198 = vst [vmem:[#allocation2 + $0x40] sm:$0xff] %v4182
          %4199 = vst [vmem:[#allocation2 + $0x48] sm:$0xff] %v4183
          %4200 = vst [vmem:[#allocation2 + $0x50] sm:$0xff] %v4184
          %4201 = vst [vmem:[#allocation2 + $0x58] sm:$0xff] %v4185
          %4202 = vst [vmem:[#allocation2 + $0x60] sm:$0xff] %v4186
          %4203 = vst [vmem:[#allocation2 + $0x68] sm:$0xff] %v4187
          %4204 = vst [vmem:[#allocation2 + $0x70] sm:$0xff] %v4188
          %4205 = vst [vmem:[#allocation2 + $0x78] sm:$0xff] %v4189
        $region80: #{tpu_custom_call.1} parent=51 // pred_fallthru
          _
        %v4206 = vld [vmem:[#allocation2] sm:$0xff]
        %v4207 = vld [vmem:[#allocation2 + $0x8] sm:$0xff]
        %v4208 = vld [vmem:[#allocation2 + $0x10] sm:$0xff]
        %v4209 = vld [vmem:[#allocation2 + $0x18] sm:$0xff]
        %v4210 = vld [vmem:[#allocation2 + $0x20] sm:$0xff]
        %v4211 = vld [vmem:[#allocation2 + $0x28] sm:$0xff]
        %v4212 = vld [vmem:[#allocation2 + $0x30] sm:$0xff]
        %v4213 = vld [vmem:[#allocation2 + $0x38] sm:$0xff]
        %v4214 = vld [vmem:[#allocation2 + $0x40] sm:$0xff]
        %v4215 = vld [vmem:[#allocation2 + $0x48] sm:$0xff]
        %v4216 = vld [vmem:[#allocation2 + $0x50] sm:$0xff]
        %v4217 = vld [vmem:[#allocation2 + $0x58] sm:$0xff]
        %v4218 = vld [vmem:[#allocation2 + $0x60] sm:$0xff]
        %v4219 = vld [vmem:[#allocation2 + $0x68] sm:$0xff]
        %v4220 = vld [vmem:[#allocation2 + $0x70] sm:$0xff]
        %v4221 = vld [vmem:[#allocation2 + $0x78] sm:$0xff]
        %v4222 = vld [vmem:[%s407] sm:$0xff]
        %v4223 = vld [vmem:[%s407 + $0x8] sm:$0xff]
        %v4224 = vld [vmem:[%s407 + $0x10] sm:$0xff]
        %v4225 = vld [vmem:[%s407 + $0x18] sm:$0xff]
        %v4226 = vld [vmem:[%s407 + $0x20] sm:$0xff]
        %v4227 = vld [vmem:[%s407 + $0x28] sm:$0xff]
        %v4228 = vld [vmem:[%s407 + $0x30] sm:$0xff]
        %v4229 = vld [vmem:[%s407 + $0x38] sm:$0xff]
        %v4230 = vld [vmem:[%s407 + $0x40] sm:$0xff]
        %v4231 = vld [vmem:[%s407 + $0x48] sm:$0xff]
        %v4232 = vld [vmem:[%s407 + $0x50] sm:$0xff]
        %v4233 = vld [vmem:[%s407 + $0x58] sm:$0xff]
        %v4234 = vld [vmem:[%s407 + $0x60] sm:$0xff]
        %v4235 = vld [vmem:[%s407 + $0x68] sm:$0xff]
        %v4236 = vld [vmem:[%s407 + $0x70] sm:$0xff]
        %v4237 = vld [vmem:[%s407 + $0x78] sm:$0xff]
        %v4238 = vld [vmem:[%s407 + $0x80] sm:$0xff]
        %v4239 = vld [vmem:[%s407 + $0x88] sm:$0xff]
        %v4240 = vld [vmem:[%s407 + $0x90] sm:$0xff]
        %v4241 = vld [vmem:[%s407 + $0x98] sm:$0xff]
        %v4242 = vld [vmem:[%s407 + $0xa0] sm:$0xff]
        %v4243 = vld [vmem:[%s407 + $0xa8] sm:$0xff]
        %v4244 = vld [vmem:[%s407 + $0xb0] sm:$0xff]
        %v4245 = vld [vmem:[%s407 + $0xb8] sm:$0xff]
        %v4246 = vld [vmem:[%s407 + $0xc0] sm:$0xff]
        %v4247 = vld [vmem:[%s407 + $0xc8] sm:$0xff]
        %v4248 = vld [vmem:[%s407 + $0xd0] sm:$0xff]
        %v4249 = vld [vmem:[%s407 + $0xd8] sm:$0xff]
        %v4250 = vld [vmem:[%s407 + $0xe0] sm:$0xff]
        %v4251 = vld [vmem:[%s407 + $0xe8] sm:$0xff]
        %v4252 = vld [vmem:[%s407 + $0xf0] sm:$0xff]
        %v4253 = vld [vmem:[%s407 + $0xf8] sm:$0xff]
        %4254 = vmatpush.msra.mxu0 %v4252
        %4255 = vmatpush.msra.mxu0 %v4250
        %4256 = vmatpush.msra.mxu0 %v4248
        %4257 = vmatpush.msra.mxu0 %v4246
        %4258 = vmatpush.msra.mxu0 %v4244
        %4259 = vmatpush.msra.mxu0 %v4242
        %4260 = vmatpush.msra.mxu0 %v4240
        %4261 = vmatpush.msra.mxu0 %v4238
        %4262 = vmatpush.msra.mxu0 %v4236
        %4263 = vmatpush.msra.mxu0 %v4234
        %4264 = vmatpush.msra.mxu0 %v4232
        %4265 = vmatpush.msra.mxu0 %v4230
        %4266 = vmatpush.msra.mxu0 %v4228
        %4267 = vmatpush.msra.mxu0 %v4226
        %4268 = vmatpush.msra.mxu0 %v4224
        %4269 = vmatpush.msra.mxu0 %v4222
        %4270 = vmatmul.f32.gmra.mxu0 %v4206
        %v4271 = vpop.f32.mrf.mxu0
        %v4272 = vadd.f32 0.0, %v4271
        %4273 = vmatmul.f32.gmra.mxu0 %v4207
        %v4274 = vpop.f32.mrf.mxu0
        %v4275 = vadd.f32 0.0, %v4274
        %4276 = vmatmul.f32.gmra.mxu0 %v4208
        %v4277 = vpop.f32.mrf.mxu0
        %v4278 = vadd.f32 0.0, %v4277
        %4279 = vmatmul.f32.gmra.mxu0 %v4209
        %v4280 = vpop.f32.mrf.mxu0
        %v4281 = vadd.f32 0.0, %v4280
        %4282 = vmatmul.f32.gmra.mxu0 %v4210
        %v4283 = vpop.f32.mrf.mxu0
        %v4284 = vadd.f32 0.0, %v4283
        %4285 = vmatmul.f32.gmra.mxu0 %v4211
        %v4286 = vpop.f32.mrf.mxu0
        %v4287 = vadd.f32 0.0, %v4286
        %4288 = vmatmul.f32.gmra.mxu0 %v4212
        %v4289 = vpop.f32.mrf.mxu0
        %v4290 = vadd.f32 0.0, %v4289
        %4291 = vmatmul.f32.gmra.mxu0 %v4213
        %v4292 = vpop.f32.mrf.mxu0
        %v4293 = vadd.f32 0.0, %v4292
        %4294 = vmatmul.f32.gmra.mxu0 %v4214
        %v4295 = vpop.f32.mrf.mxu0
        %v4296 = vadd.f32 0.0, %v4295
        %4297 = vmatmul.f32.gmra.mxu0 %v4215
        %v4298 = vpop.f32.mrf.mxu0
        %v4299 = vadd.f32 0.0, %v4298
        %4300 = vmatmul.f32.gmra.mxu0 %v4216
        %v4301 = vpop.f32.mrf.mxu0
        %v4302 = vadd.f32 0.0, %v4301
        %4303 = vmatmul.f32.gmra.mxu0 %v4217
        %v4304 = vpop.f32.mrf.mxu0
        %v4305 = vadd.f32 0.0, %v4304
        %4306 = vmatmul.f32.gmra.mxu0 %v4218
        %v4307 = vpop.f32.mrf.mxu0
        %v4308 = vadd.f32 0.0, %v4307
        %4309 = vmatmul.f32.gmra.mxu0 %v4219
        %v4310 = vpop.f32.mrf.mxu0
        %v4311 = vadd.f32 0.0, %v4310
        %4312 = vmatmul.f32.gmra.mxu0 %v4220
        %v4313 = vpop.f32.mrf.mxu0
        %v4314 = vadd.f32 0.0, %v4313
        %4315 = vmatmul.f32.gmra.mxu0 %v4221
        %v4316 = vpop.f32.mrf.mxu0
        %v4317 = vadd.f32 0.0, %v4316
        %4318 = vdwg.mxu0
        %4319 = vmatpush.msra.mxu0 %v4253
        %4320 = vmatpush.msra.mxu0 %v4251
        %4321 = vmatpush.msra.mxu0 %v4249
        %4322 = vmatpush.msra.mxu0 %v4247
        %4323 = vmatpush.msra.mxu0 %v4245
        %4324 = vmatpush.msra.mxu0 %v4243
        %4325 = vmatpush.msra.mxu0 %v4241
        %4326 = vmatpush.msra.mxu0 %v4239
        %4327 = vmatpush.msra.mxu0 %v4237
        %4328 = vmatpush.msra.mxu0 %v4235
        %4329 = vmatpush.msra.mxu0 %v4233
        %4330 = vmatpush.msra.mxu0 %v4231
        %4331 = vmatpush.msra.mxu0 %v4229
        %4332 = vmatpush.msra.mxu0 %v4227
        %4333 = vmatpush.msra.mxu0 %v4225
        %4334 = vmatpush.msra.mxu0 %v4223
        %4335 = vmatmul.f32.gmra.mxu0 %v4206
        %v4336 = vpop.f32.mrf.mxu0
        %v4337 = vadd.f32 0.0, %v4336
        %4338 = vmatmul.f32.gmra.mxu0 %v4207
        %v4339 = vpop.f32.mrf.mxu0
        %v4340 = vadd.f32 0.0, %v4339
        %4341 = vmatmul.f32.gmra.mxu0 %v4208
        %v4342 = vpop.f32.mrf.mxu0
        %v4343 = vadd.f32 0.0, %v4342
        %4344 = vmatmul.f32.gmra.mxu0 %v4209
        %v4345 = vpop.f32.mrf.mxu0
        %v4346 = vadd.f32 0.0, %v4345
        %4347 = vmatmul.f32.gmra.mxu0 %v4210
        %v4348 = vpop.f32.mrf.mxu0
        %v4349 = vadd.f32 0.0, %v4348
        %4350 = vmatmul.f32.gmra.mxu0 %v4211
        %v4351 = vpop.f32.mrf.mxu0
        %v4352 = vadd.f32 0.0, %v4351
        %4353 = vmatmul.f32.gmra.mxu0 %v4212
        %v4354 = vpop.f32.mrf.mxu0
        %v4355 = vadd.f32 0.0, %v4354
        %4356 = vmatmul.f32.gmra.mxu0 %v4213
        %v4357 = vpop.f32.mrf.mxu0
        %v4358 = vadd.f32 0.0, %v4357
        %4359 = vmatmul.f32.gmra.mxu0 %v4214
        %v4360 = vpop.f32.mrf.mxu0
        %v4361 = vadd.f32 0.0, %v4360
        %4362 = vmatmul.f32.gmra.mxu0 %v4215
        %v4363 = vpop.f32.mrf.mxu0
        %v4364 = vadd.f32 0.0, %v4363
        %4365 = vmatmul.f32.gmra.mxu0 %v4216
        %v4366 = vpop.f32.mrf.mxu0
        %v4367 = vadd.f32 0.0, %v4366
        %4368 = vmatmul.f32.gmra.mxu0 %v4217
        %v4369 = vpop.f32.mrf.mxu0
        %v4370 = vadd.f32 0.0, %v4369
        %4371 = vmatmul.f32.gmra.mxu0 %v4218
        %v4372 = vpop.f32.mrf.mxu0
        %v4373 = vadd.f32 0.0, %v4372
        %4374 = vmatmul.f32.gmra.mxu0 %v4219
        %v4375 = vpop.f32.mrf.mxu0
        %v4376 = vadd.f32 0.0, %v4375
        %4377 = vmatmul.f32.gmra.mxu0 %v4220
        %v4378 = vpop.f32.mrf.mxu0
        %v4379 = vadd.f32 0.0, %v4378
        %4380 = vmatmul.f32.gmra.mxu0 %v4221
        %v4381 = vpop.f32.mrf.mxu0
        %v4382 = vadd.f32 0.0, %v4381
        %4383 = vdwg.mxu0
        %4384 = vst [vmem:[%s445] sm:$0xff] %v4272
        %4385 = vst [vmem:[%s445 + $0x8] sm:$0xff] %v4337
        %4386 = vst [vmem:[%s445 + $0x10] sm:$0xff] %v4275
        %4387 = vst [vmem:[%s445 + $0x18] sm:$0xff] %v4340
        %4388 = vst [vmem:[%s445 + $0x20] sm:$0xff] %v4278
        %4389 = vst [vmem:[%s445 + $0x28] sm:$0xff] %v4343
        %4390 = vst [vmem:[%s445 + $0x30] sm:$0xff] %v4281
        %4391 = vst [vmem:[%s445 + $0x38] sm:$0xff] %v4346
        %4392 = vst [vmem:[%s445 + $0x40] sm:$0xff] %v4284
        %4393 = vst [vmem:[%s445 + $0x48] sm:$0xff] %v4349
        %4394 = vst [vmem:[%s445 + $0x50] sm:$0xff] %v4287
        %4395 = vst [vmem:[%s445 + $0x58] sm:$0xff] %v4352
        %4396 = vst [vmem:[%s445 + $0x60] sm:$0xff] %v4290
        %4397 = vst [vmem:[%s445 + $0x68] sm:$0xff] %v4355
        %4398 = vst [vmem:[%s445 + $0x70] sm:$0xff] %v4293
        %4399 = vst [vmem:[%s445 + $0x78] sm:$0xff] %v4358
        %4400 = vst [vmem:[%s445 + $0x80] sm:$0xff] %v4296
        %4401 = vst [vmem:[%s445 + $0x88] sm:$0xff] %v4361
        %4402 = vst [vmem:[%s445 + $0x90] sm:$0xff] %v4299
        %4403 = vst [vmem:[%s445 + $0x98] sm:$0xff] %v4364
        %4404 = vst [vmem:[%s445 + $0xa0] sm:$0xff] %v4302
        %4405 = vst [vmem:[%s445 + $0xa8] sm:$0xff] %v4367
        %4406 = vst [vmem:[%s445 + $0xb0] sm:$0xff] %v4305
        %4407 = vst [vmem:[%s445 + $0xb8] sm:$0xff] %v4370
        %4408 = vst [vmem:[%s445 + $0xc0] sm:$0xff] %v4308
        %4409 = vst [vmem:[%s445 + $0xc8] sm:$0xff] %v4373
        %4410 = vst [vmem:[%s445 + $0xd0] sm:$0xff] %v4311
        %4411 = vst [vmem:[%s445 + $0xd8] sm:$0xff] %v4376
        %4412 = vst [vmem:[%s445 + $0xe0] sm:$0xff] %v4314
        %4413 = vst [vmem:[%s445 + $0xe8] sm:$0xff] %v4379
        %4414 = vst [vmem:[%s445 + $0xf0] sm:$0xff] %v4317
        %4415 = vst [vmem:[%s445 + $0xf8] sm:$0xff] %v4382
        %s4416 = sand.u32 %s230, 1
        %s4417 = scalar_lea.sflag [#allocation5], %s4416
        %s4418 = sand.u32 %s230, 1
        %s4419 = smul.addr %s4418, 256
        %s4420 = scalar_lea.vmem [#allocation14], %s4419
        // Predicated region
        $region81: #{tpu_custom_call.1} parent=51 // pred_check
          %p4421 = pneg %p240
        $region82: #{tpu_custom_call.1} parent=51 // pred_check_branch
          %4423 = sbr.rel (%p4421) target = $region84
        $region83: #{tpu_custom_call.1} parent=51 // pred_region
          %s4424 = smul.u32 16, %s34
          %s4425 = smul.u32 2, %s35
          %4427 = vsyncadd %s4417, 0
          %s4428 = smul.addr %s4424, 4
          %s4429 = sadd.s32 %s4425, %s4428
          %s4430 = smul.addr %s4429, 8
          %s4431 = scalar_lea.hbm %s8, %s4430
          %s4432 = sshll.u32 %s4420, 4
          %s4433 = int_to_ptr.vmem [resolvable:$true] %s4432
          %s4434 = sshll.u32 %s4431, 4
          %s4435 = int_to_ptr.hbm [resolvable:$true] %s4434
          %4440 = dma.vmem_to_hbm [thread:$0]  %s4433, 4096, %s4435, %s4417, 256, 512, 16
        $region84: #{tpu_custom_call.1} parent=51 // pred_fallthru
          _
      $region52: #{tpu_custom_call.1} parent=5 // pred_fallthru
        _
      %p4441 = scmp.le.s32.totalorder 2, %s25
      // Predicated region
      $region85: #{tpu_custom_call.1} parent=5 // pred_check
        %p4442 = pneg %p4441
      $region86: #{tpu_custom_call.1} parent=5 // pred_check_branch
        %4444 = sbr.rel (%p4442) target = $region88
      $region87: #{tpu_custom_call.1} parent=5 // pred_region
        %s4445 = ssub.s32 %s25, 2
        // Predicated region
        $region89: #{tpu_custom_call.1} parent=87 // pred_check
          %p4446 = pneg %p246
        $region90: #{tpu_custom_call.1} parent=87 // pred_check_branch
          %4448 = sbr.rel (%p4446) target = $region92
        $region91: #{tpu_custom_call.1} parent=87 // pred_region
          %s4449 = sand.u32 %s231, 1
          %s4450 = scalar_lea.sflag [#allocation5], %s4449
          %s4451 = sand.u32 %s231, 1
          %s4452 = smul.addr %s4451, 256
          %s4453 = scalar_lea.vmem [#allocation14], %s4452
          %4455 = dma.done %s4450, 4096
        $region92: #{tpu_custom_call.1} parent=87 // pred_fallthru
          _
      $region88: #{tpu_custom_call.1} parent=5 // pred_fallthru
        _
    $region6: #{tpu_custom_call.1} parent=1 // loop_footer
      %s29 = sadd.s32 1, %s25
    $region7: #{tpu_custom_call.1} parent=1 // loop_footer_branch
      %24 = sbr.rel target = $region3
    $region8: #{tpu_custom_call.1} parent=1 // loop_exit
      _
    %4456 = vsyncpa [#allocation4], 1
    %s4457 = scalar_lea.sflag [#allocation4], 1
    %4458 = vsyncpa %s4457, 1
    %4459 = vsyncpa [#allocation7], 1
    %4460 = vsyncpa [#allocation10], 1
    %4461 = vsyncpa [#allocation13], 1
    %s4462 = scalar_lea.sflag [#allocation13], 1
    %4463 = vsyncpa %s4462, 1
    %4464 = vsyncpa [#allocation5], 1
    %s4465 = scalar_lea.sflag [#allocation5], 1
    %4466 = vsyncpa %s4465, 1

</llo_original>
